<compile_context>
chip_gen: v7x
topology: tpu7x:2x2x1
jax: 0.10.0
libtpu: 0.0.40
codegen_flags: <defaults>
</compile_context>

<pallas_src>
import numpy as np
import jax
import jax.numpy as jnp
from jax.experimental import pallas as pl
from jax.experimental.pallas import tpu as pltpu

BN_EPS = 1e-5


def _upsample_matrix(n):
    """(2n, n) matrix for 1-D bilinear x2 upsampling, align_corners=False."""
    u = np.zeros((2 * n, n), np.float32)
    for i in range(n):
        u[2 * i, max(i - 1, 0)] += 0.25      # src = i - 0.25
        u[2 * i, i] += 0.75
        u[2 * i + 1, i] += 0.75              # src = i + 0.25
        u[2 * i + 1, min(i + 1, n - 1)] += 0.25
    return u


def _conv3x3_call(x_ext, mask_l, mask_r, w_taps, b2, N, H, W, Cin, Cout, P_ext):
    """3x3 conv + bias on flat-spatial layout + per-image BN partial sums."""
    HW = H * W

    def kernel(x_ref, ml_ref, mr_ref, w_ref, b_ref, y_ref, s_ref, ss_ref):
        x = x_ref[0]                                    # (P_ext, Cin) bf16
        # kx=0 taps read image column w-1 -> never col W-1 (mask_l zeros it),
        # kx=2 taps read image column w+1 -> never col 0   (mask_r zeros it);
        # this makes the flat-row wrap-around contributions exactly zero.
        srcs = (x * ml_ref[...], x, x * mr_ref[...])    # indexed by kx
        for k in range(9):                              # unrolled 3x3 taps
            ky, kx = divmod(k, 3)
            s0 = ky * W + kx                            # constant flat-row offset
            tap = jnp.dot(srcs[kx][s0:s0 + HW, :], w_ref[k],
                          preferred_element_type=jnp.float32)
            if k == 0:
                y_ref[0] = tap + b_ref[...]             # accumulate in VMEM block
            else:
                y_ref[0] += tap
        yv = y_ref[0]
        s_ref[0] = jnp.sum(yv, axis=0, keepdims=True)   # per-image BN partials
        ss_ref[0] = jnp.sum(yv * yv, axis=0, keepdims=True)

    grid_spec = pltpu.PrefetchScalarGridSpec(
        num_scalar_prefetch=0,
        grid=(N,),
        in_specs=[
            pl.BlockSpec((1, P_ext, Cin), lambda n: (n, 0, 0)),
            pl.BlockSpec((P_ext, 1), lambda n: (0, 0)),
            pl.BlockSpec((P_ext, 1), lambda n: (0, 0)),
            pl.BlockSpec((9, Cin, Cout), lambda n: (0, 0, 0)),
            pl.BlockSpec((1, Cout), lambda n: (0, 0)),
        ],
        out_specs=[
            pl.BlockSpec((1, HW, Cout), lambda n: (n, 0, 0)),
            pl.BlockSpec((1, 1, Cout), lambda n: (n, 0, 0)),
            pl.BlockSpec((1, 1, Cout), lambda n: (n, 0, 0)),
        ],
    )
    return pl.pallas_call(
        kernel,
        out_shape=(
            jax.ShapeDtypeStruct((N, HW, Cout), jnp.float32),
            jax.ShapeDtypeStruct((N, 1, Cout), jnp.float32),
            jax.ShapeDtypeStruct((N, 1, Cout), jnp.float32),
        ),
        grid_spec=grid_spec,
        compiler_params=pltpu.CompilerParams(
            dimension_semantics=("parallel",),          # per-image outputs only
            vmem_limit_bytes=32 * 1024 * 1024),
    )(x_ext, mask_l, mask_r, w_taps, b2)


def _bn_up_relu_call(y2, scale_flat, shift_flat, uh, N, H, W, Cout):
    """BN affine + bilinear x2 upsample + ReLU; even/odd column planes out."""
    WC = W * Cout

    def kernel(y_ref, sc_ref, sh_ref, uh_ref, oe_ref, oo_ref, t_ref):
        y_aff = y_ref[0] * sc_ref[...] + sh_ref[...]              # BN affine (f32)
        # rows x2: (2H, H) @ (H, WC), bf16 operands, f32 accumulate, VMEM-staged.
        t_ref[...] = jnp.dot(uh_ref[...], y_aff.astype(jnp.bfloat16),
                             preferred_element_type=jnp.float32)
        t = t_ref[...]
        lane = jax.lax.broadcasted_iota(jnp.int32, t.shape, 1)
        # cols x2 (align_corners=False) as a VPU blend of lane-rolled neighbours.
        left = jnp.where(lane < Cout, t,
                         pltpu.roll(t, shift=Cout, axis=1))        # col j-1 (clamped)
        right = jnp.where(lane >= (W - 1) * Cout, t,
                          pltpu.roll(t, shift=WC - Cout, axis=1))  # col j+1 (clamped)
        oe_ref[0] = jnp.maximum(0.75 * t + 0.25 * left, 0.0)       # even cols + ReLU
        oo_ref[0] = jnp.maximum(0.75 * t + 0.25 * right, 0.0)      # odd cols + ReLU

    grid_spec = pltpu.PrefetchScalarGridSpec(
        num_scalar_prefetch=0,
        grid=(N,),
        in_specs=[
            pl.BlockSpec((1, H, WC), lambda n: (n, 0, 0)),
            pl.BlockSpec((1, WC), lambda n: (0, 0)),
            pl.BlockSpec((1, WC), lambda n: (0, 0)),
            pl.BlockSpec((2 * H, H), lambda n: (0, 0)),
        ],
        out_specs=[
            pl.BlockSpec((1, 2 * H, WC), lambda n: (n, 0, 0)),
            pl.BlockSpec((1, 2 * H, WC), lambda n: (n, 0, 0)),
        ],
        scratch_shapes=[pltpu.VMEM((2 * H, WC), jnp.float32)],
    )
    return pl.pallas_call(
        kernel,
        out_shape=(
            jax.ShapeDtypeStruct((N, 2 * H, WC), jnp.float32),
            jax.ShapeDtypeStruct((N, 2 * H, WC), jnp.float32),
        ),
        grid_spec=grid_spec,
        compiler_params=pltpu.CompilerParams(
            dimension_semantics=("parallel",),
            vmem_limit_bytes=32 * 1024 * 1024),
    )(y2, scale_flat, shift_flat, uh)


def upblock_forward(x_nchw, w_hwio, b, gamma, beta):
    """Upblock.forward.  x_nchw: (N, Cin, H, W)  ->  (N, Cout, 2H, 2W)."""
    N, Cin, H, W = x_nchw.shape
    Cout = w_hwio.shape[-1]
    HW, WC = H * W, W * Cout
    P_ext = ((HW + 2 * W + 2 + 7) // 8) * 8        # halo-padded flat spatial rows

    # --- boundary layout plumbing: NCHW -> flat NHWC + halo pad, bf16 operands ---
    x_flat = jnp.transpose(x_nchw, (0, 2, 3, 1)).reshape(N, HW, Cin)
    x_ext = jnp.pad(x_flat.astype(jnp.bfloat16),
                    ((0, 0), (W + 1, P_ext - HW - W - 1), (0, 0)))

    r = np.arange(P_ext)
    mask_l = jnp.asarray((r % W != 0)[:, None], jnp.bfloat16)   # zeros image col W-1
    mask_r = jnp.asarray((r % W != 1)[:, None], jnp.bfloat16)   # zeros image col 0
    w_taps = w_hwio.reshape(9, Cin, Cout).astype(jnp.bfloat16)  # per-tap (Cin, Cout)
    b2 = b.astype(jnp.float32)[None, :]

    # --- kernel 1: conv3x3 + bias + per-image BN partial sums ---
    y, s, ss = _conv3x3_call(x_ext, mask_l, mask_r, w_taps, b2,
                             N, H, W, Cin, Cout, P_ext)

    # --- tiny BN-statistics reduction (training-mode batch stats), var clamped ---
    cnt = float(N * HW)
    mean = jnp.sum(s[:, 0, :], axis=0) / cnt
    ex2 = jnp.sum(ss[:, 0, :], axis=0) / cnt
    var = jnp.maximum(ex2 - mean * mean, 0.0)
    scale = gamma * jax.lax.rsqrt(var + BN_EPS)
    shift = beta - mean * scale
    scale_flat = jnp.tile(scale, W)[None, :]
    shift_flat = jnp.tile(shift, W)[None, :]

    uh = jnp.asarray(_upsample_matrix(H), jnp.bfloat16)          # (2H, H)
    y2 = y.reshape(N, H, WC)                                     # (HW, C) -> (H, W*C)

    # --- kernel 2: BN affine + bilinear x2 + ReLU ---
    oe, oo = _bn_up_relu_call(y2, scale_flat, shift_flat, uh, N, H, W, Cout)

    # interleave even/odd column planes, back to NCHW for the caller
    out = jnp.stack([oe.reshape(N, 2 * H, W, Cout),
                     oo.reshape(N, 2 * H, W, Cout)], axis=3)
    out = out.reshape(N, 2 * H, 2 * W, Cout).transpose(0, 3, 1, 2)
    return out


def upblock_reference(x_nchw, w_hwio, b, gamma, beta):
    """Pure-JAX reference matching PyTorch semantics (training-mode BN)."""
    _, _, H, W = x_nchw.shape
    w_oihw = jnp.transpose(w_hwio, (3, 2, 0, 1))
    y = jax.lax.conv_general_dilated(
        x_nchw, w_oihw, window_strides=(1, 1), padding=((1, 1), (1, 1)),
        dimension_numbers=("NCHW", "OIHW", "NCHW"),
        precision=jax.lax.Precision.HIGHEST)
    y = y + b[None, :, None, None]
    mean = jnp.mean(y, axis=(0, 2, 3), keepdims=True)
    var = jnp.mean((y - mean) ** 2, axis=(0, 2, 3), keepdims=True)
    y = (gamma[None, :, None, None] * (y - mean) * jax.lax.rsqrt(var + BN_EPS)
         + beta[None, :, None, None])
    uh = jnp.asarray(_upsample_matrix(H))
    uw = jnp.asarray(_upsample_matrix(W))
    up = jnp.einsum("ph,nchw->ncpw", uh, y, precision=jax.lax.Precision.HIGHEST)
    up = jnp.einsum("qw,ncpw->ncpq", uw, up, precision=jax.lax.Precision.HIGHEST)
    return jnp.maximum(up, 0.0)


if __name__ == "__main__":
    N, Cin, Cout, H, W = 2, 4, 8, 16, 16
    key = jax.random.PRNGKey(0)
    k1, k2, k3 = jax.random.split(key, 3)

    x = jax.random.normal(k1, (N, Cin, H, W), jnp.float32)
    # deterministic synthetic parameters (Conv2d(Cin, Cout, 3), BatchNorm2d(Cout) defaults)
    w = jax.random.normal(k2, (3, 3, Cin, Cout), jnp.float32) / np.sqrt(9.0 * Cin)
    b = jax.random.normal(k3, (Cout,), jnp.float32) * 0.05
    gamma = jnp.ones((Cout,), jnp.float32)
    beta = jnp.zeros((Cout,), jnp.float32)

    out = jax.block_until_ready(upblock_forward(x, w, b, gamma, beta))
    assert out.shape == (N, Cout, 2 * H, 2 * W)

    ref = upblock_reference(x, w, b, gamma, beta)
    # bf16 MXU operands (f32 accumulation) vs the all-f32 reference -> ~1e-2 abs error budget.
    np.testing.assert_allclose(np.asarray(out), np.asarray(ref), rtol=3e-2, atol=3e-2)
    print("KERNEL_OK")
</pallas_src>

<mosaic_0001>
module attributes {stable_mosaic.version = 11 : i64} {
  func.func @kernel(%arg0: i32, %arg1: memref<1x296x4xbf16, #tpu.memory_space<vmem>>, %arg2: memref<296x1xbf16, #tpu.memory_space<vmem>>, %arg3: memref<296x1xbf16, #tpu.memory_space<vmem>>, %arg4: memref<9x4x8xbf16, #tpu.memory_space<vmem>>, %arg5: memref<1x8xf32, #tpu.memory_space<vmem>>, %arg6: memref<1x256x8xf32, #tpu.memory_space<vmem>>, %arg7: memref<1x1x8xf32, #tpu.memory_space<vmem>>, %arg8: memref<1x1x8xf32, #tpu.memory_space<vmem>>) attributes {dimension_semantics = [#tpu.dimension_semantics<parallel>], iteration_bounds = array<i64: 2>, scalar_prefetch = 0 : i64, scratch_operands = 0 : i64, tpu.core_type = #tpu.core_type<tc>, window_params = [{transform_indices = @transform_0, window_bounds = array<i64: 1, 296, 4>}, {pipeline_mode = #tpu.pipeline_mode<synchronous>, transform_indices = @transform_1, window_bounds = array<i64: 296, 1>}, {pipeline_mode = #tpu.pipeline_mode<synchronous>, transform_indices = @transform_2, window_bounds = array<i64: 296, 1>}, {pipeline_mode = #tpu.pipeline_mode<synchronous>, transform_indices = @transform_3, window_bounds = array<i64: 9, 4, 8>}, {pipeline_mode = #tpu.pipeline_mode<synchronous>, transform_indices = @transform_4, window_bounds = array<i64: 1, 8>}, {transform_indices = @transform_5, window_bounds = array<i64: 1, 256, 8>}, {transform_indices = @transform_6, window_bounds = array<i64: 1, 1, 8>}, {transform_indices = @transform_7, window_bounds = array<i64: 1, 1, 8>}]} {
    %c0 = arith.constant 0 : index
    %c0_0 = arith.constant 0 : index
    %c0_1 = arith.constant 0 : index
    %0 = vector.load %arg1[%c0, %c0_0, %c0_1] : memref<1x296x4xbf16, #tpu.memory_space<vmem>>, vector<1x296x4xbf16>
    %1 = vector.shape_cast %0 : vector<1x296x4xbf16> to vector<296x4xbf16>
    %c0_2 = arith.constant 0 : index
    %c0_3 = arith.constant 0 : index
    %2 = vector.load %arg2[%c0_2, %c0_3] : memref<296x1xbf16, #tpu.memory_space<vmem>>, vector<296x1xbf16>
    %3 = vector.broadcast %2 : vector<296x1xbf16> to vector<296x4xbf16>
    %4 = arith.mulf %1, %3 : vector<296x4xbf16>
    %c0_4 = arith.constant 0 : index
    %c0_5 = arith.constant 0 : index
    %5 = vector.load %arg3[%c0_4, %c0_5] : memref<296x1xbf16, #tpu.memory_space<vmem>>, vector<296x1xbf16>
    %6 = vector.broadcast %5 : vector<296x1xbf16> to vector<296x4xbf16>
    %7 = arith.mulf %1, %6 : vector<296x4xbf16>
    %8 = vector.extract_strided_slice %4 {offsets = [0, 0], sizes = [256, 4], strides = [1, 1]} : vector<296x4xbf16> to vector<256x4xbf16>
    %c0_6 = arith.constant 0 : index
    %c0_7 = arith.constant 0 : index
    %c0_8 = arith.constant 0 : index
    %9 = vector.load %arg4[%c0_6, %c0_7, %c0_8] : memref<9x4x8xbf16, #tpu.memory_space<vmem>>, vector<1x4x8xbf16>
    %10 = vector.shape_cast %9 : vector<1x4x8xbf16> to vector<4x8xbf16>
    %cst = arith.constant dense<0.000000e+00> : vector<256x8xf32>
    %11 = tpu.matmul %8, %10, %cst {dimension_numbers = #tpu.dot_dimension_numbers<[1], [0], [0], [1], [0, 0, 1, 1], [], []>} : vector<256x4xbf16>, vector<4x8xbf16>, vector<256x8xf32> -> vector<256x8xf32>
    %c0_9 = arith.constant 0 : index
    %c0_10 = arith.constant 0 : index
    %12 = vector.load %arg5[%c0_9, %c0_10] : memref<1x8xf32, #tpu.memory_space<vmem>>, vector<1x8xf32>
    %13 = vector.broadcast %12 : vector<1x8xf32> to vector<256x8xf32>
    %14 = arith.addf %11, %13 : vector<256x8xf32>
    %c0_11 = arith.constant 0 : index
    %c0_12 = arith.constant 0 : index
    %c0_13 = arith.constant 0 : index
    %15 = vector.load %arg6[%c0_11, %c0_12, %c0_13] : memref<1x256x8xf32, #tpu.memory_space<vmem>>, vector<1x256x8xf32>
    %16 = vector.shape_cast %15 : vector<1x256x8xf32> to vector<256x8xf32>
    %17 = vector.shape_cast %14 : vector<256x8xf32> to vector<1x256x8xf32>
    tpu.vector_store %arg6[%c0_11, %c0_12, %c0_13], %17 {strides = array<i32>} : memref<1x256x8xf32, #tpu.memory_space<vmem>>, vector<1x256x8xf32>,
    %18 = vector.extract_strided_slice %1 {offsets = [1, 0], sizes = [256, 4], strides = [1, 1]} : vector<296x4xbf16> to vector<256x4xbf16>
    %c1 = arith.constant 1 : index
    %c0_14 = arith.constant 0 : index
    %c0_15 = arith.constant 0 : index
    %19 = vector.load %arg4[%c1, %c0_14, %c0_15] : memref<9x4x8xbf16, #tpu.memory_space<vmem>>, vector<1x4x8xbf16>
    %20 = vector.shape_cast %19 : vector<1x4x8xbf16> to vector<4x8xbf16>
    %cst_16 = arith.constant dense<0.000000e+00> : vector<256x8xf32>
    %21 = tpu.matmul %18, %20, %cst_16 {dimension_numbers = #tpu.dot_dimension_numbers<[1], [0], [0], [1], [0, 0, 1, 1], [], []>} : vector<256x4xbf16>, vector<4x8xbf16>, vector<256x8xf32> -> vector<256x8xf32>
    %c0_17 = arith.constant 0 : index
    %c0_18 = arith.constant 0 : index
    %c0_19 = arith.constant 0 : index
    %22 = vector.load %arg6[%c0_17, %c0_18, %c0_19] : memref<1x256x8xf32, #tpu.memory_space<vmem>>, vector<1x256x8xf32>
    %23 = vector.shape_cast %22 : vector<1x256x8xf32> to vector<256x8xf32>
    %24 = arith.addf %23, %21 : vector<256x8xf32>
    %c0_20 = arith.constant 0 : index
    %c0_21 = arith.constant 0 : index
    %c0_22 = arith.constant 0 : index
    %25 = vector.load %arg6[%c0_20, %c0_21, %c0_22] : memref<1x256x8xf32, #tpu.memory_space<vmem>>, vector<1x256x8xf32>
    %26 = vector.shape_cast %25 : vector<1x256x8xf32> to vector<256x8xf32>
    %27 = vector.shape_cast %24 : vector<256x8xf32> to vector<1x256x8xf32>
    tpu.vector_store %arg6[%c0_20, %c0_21, %c0_22], %27 {strides = array<i32>} : memref<1x256x8xf32, #tpu.memory_space<vmem>>, vector<1x256x8xf32>,
    %28 = vector.extract_strided_slice %7 {offsets = [2, 0], sizes = [256, 4], strides = [1, 1]} : vector<296x4xbf16> to vector<256x4xbf16>
    %c2 = arith.constant 2 : index
    %c0_23 = arith.constant 0 : index
    %c0_24 = arith.constant 0 : index
    %29 = vector.load %arg4[%c2, %c0_23, %c0_24] : memref<9x4x8xbf16, #tpu.memory_space<vmem>>, vector<1x4x8xbf16>
    %30 = vector.shape_cast %29 : vector<1x4x8xbf16> to vector<4x8xbf16>
    %cst_25 = arith.constant dense<0.000000e+00> : vector<256x8xf32>
    %31 = tpu.matmul %28, %30, %cst_25 {dimension_numbers = #tpu.dot_dimension_numbers<[1], [0], [0], [1], [0, 0, 1, 1], [], []>} : vector<256x4xbf16>, vector<4x8xbf16>, vector<256x8xf32> -> vector<256x8xf32>
    %c0_26 = arith.constant 0 : index
    %c0_27 = arith.constant 0 : index
    %c0_28 = arith.constant 0 : index
    %32 = vector.load %arg6[%c0_26, %c0_27, %c0_28] : memref<1x256x8xf32, #tpu.memory_space<vmem>>, vector<1x256x8xf32>
    %33 = vector.shape_cast %32 : vector<1x256x8xf32> to vector<256x8xf32>
    %34 = arith.addf %33, %31 : vector<256x8xf32>
    %c0_29 = arith.constant 0 : index
    %c0_30 = arith.constant 0 : index
    %c0_31 = arith.constant 0 : index
    %35 = vector.load %arg6[%c0_29, %c0_30, %c0_31] : memref<1x256x8xf32, #tpu.memory_space<vmem>>, vector<1x256x8xf32>
    %36 = vector.shape_cast %35 : vector<1x256x8xf32> to vector<256x8xf32>
    %37 = vector.shape_cast %34 : vector<256x8xf32> to vector<1x256x8xf32>
    tpu.vector_store %arg6[%c0_29, %c0_30, %c0_31], %37 {strides = array<i32>} : memref<1x256x8xf32, #tpu.memory_space<vmem>>, vector<1x256x8xf32>,
    %38 = vector.extract_strided_slice %4 {offsets = [16, 0], sizes = [256, 4], strides = [1, 1]} : vector<296x4xbf16> to vector<256x4xbf16>
    %c3 = arith.constant 3 : index
    %c0_32 = arith.constant 0 : index
    %c0_33 = arith.constant 0 : index
    %39 = vector.load %arg4[%c3, %c0_32, %c0_33] : memref<9x4x8xbf16, #tpu.memory_space<vmem>>, vector<1x4x8xbf16>
    %40 = vector.shape_cast %39 : vector<1x4x8xbf16> to vector<4x8xbf16>
    %cst_34 = arith.constant dense<0.000000e+00> : vector<256x8xf32>
    %41 = tpu.matmul %38, %40, %cst_34 {dimension_numbers = #tpu.dot_dimension_numbers<[1], [0], [0], [1], [0, 0, 1, 1], [], []>} : vector<256x4xbf16>, vector<4x8xbf16>, vector<256x8xf32> -> vector<256x8xf32>
    %c0_35 = arith.constant 0 : index
    %c0_36 = arith.constant 0 : index
    %c0_37 = arith.constant 0 : index
    %42 = vector.load %arg6[%c0_35, %c0_36, %c0_37] : memref<1x256x8xf32, #tpu.memory_space<vmem>>, vector<1x256x8xf32>
    %43 = vector.shape_cast %42 : vector<1x256x8xf32> to vector<256x8xf32>
    %44 = arith.addf %43, %41 : vector<256x8xf32>
    %c0_38 = arith.constant 0 : index
    %c0_39 = arith.constant 0 : index
    %c0_40 = arith.constant 0 : index
    %45 = vector.load %arg6[%c0_38, %c0_39, %c0_40] : memref<1x256x8xf32, #tpu.memory_space<vmem>>, vector<1x256x8xf32>
    %46 = vector.shape_cast %45 : vector<1x256x8xf32> to vector<256x8xf32>
    %47 = vector.shape_cast %44 : vector<256x8xf32> to vector<1x256x8xf32>
    tpu.vector_store %arg6[%c0_38, %c0_39, %c0_40], %47 {strides = array<i32>} : memref<1x256x8xf32, #tpu.memory_space<vmem>>, vector<1x256x8xf32>,
    %48 = vector.extract_strided_slice %1 {offsets = [17, 0], sizes = [256, 4], strides = [1, 1]} : vector<296x4xbf16> to vector<256x4xbf16>
    %c4 = arith.constant 4 : index
    %c0_41 = arith.constant 0 : index
    %c0_42 = arith.constant 0 : index
    %49 = vector.load %arg4[%c4, %c0_41, %c0_42] : memref<9x4x8xbf16, #tpu.memory_space<vmem>>, vector<1x4x8xbf16>
    %50 = vector.shape_cast %49 : vector<1x4x8xbf16> to vector<4x8xbf16>
    %cst_43 = arith.constant dense<0.000000e+00> : vector<256x8xf32>
    %51 = tpu.matmul %48, %50, %cst_43 {dimension_numbers = #tpu.dot_dimension_numbers<[1], [0], [0], [1], [0, 0, 1, 1], [], []>} : vector<256x4xbf16>, vector<4x8xbf16>, vector<256x8xf32> -> vector<256x8xf32>
    %c0_44 = arith.constant 0 : index
    %c0_45 = arith.constant 0 : index
    %c0_46 = arith.constant 0 : index
    %52 = vector.load %arg6[%c0_44, %c0_45, %c0_46] : memref<1x256x8xf32, #tpu.memory_space<vmem>>, vector<1x256x8xf32>
    %53 = vector.shape_cast %52 : vector<1x256x8xf32> to vector<256x8xf32>
    %54 = arith.addf %53, %51 : vector<256x8xf32>
    %c0_47 = arith.constant 0 : index
    %c0_48 = arith.constant 0 : index
    %c0_49 = arith.constant 0 : index
    %55 = vector.load %arg6[%c0_47, %c0_48, %c0_49] : memref<1x256x8xf32, #tpu.memory_space<vmem>>, vector<1x256x8xf32>
    %56 = vector.shape_cast %55 : vector<1x256x8xf32> to vector<256x8xf32>
    %57 = vector.shape_cast %54 : vector<256x8xf32> to vector<1x256x8xf32>
    tpu.vector_store %arg6[%c0_47, %c0_48, %c0_49], %57 {strides = array<i32>} : memref<1x256x8xf32, #tpu.memory_space<vmem>>, vector<1x256x8xf32>,
    %58 = vector.extract_strided_slice %7 {offsets = [18, 0], sizes = [256, 4], strides = [1, 1]} : vector<296x4xbf16> to vector<256x4xbf16>
    %c5 = arith.constant 5 : index
    %c0_50 = arith.constant 0 : index
    %c0_51 = arith.constant 0 : index
    %59 = vector.load %arg4[%c5, %c0_50, %c0_51] : memref<9x4x8xbf16, #tpu.memory_space<vmem>>, vector<1x4x8xbf16>
    %60 = vector.shape_cast %59 : vector<1x4x8xbf16> to vector<4x8xbf16>
    %cst_52 = arith.constant dense<0.000000e+00> : vector<256x8xf32>
    %61 = tpu.matmul %58, %60, %cst_52 {dimension_numbers = #tpu.dot_dimension_numbers<[1], [0], [0], [1], [0, 0, 1, 1], [], []>} : vector<256x4xbf16>, vector<4x8xbf16>, vector<256x8xf32> -> vector<256x8xf32>
    %c0_53 = arith.constant 0 : index
    %c0_54 = arith.constant 0 : index
    %c0_55 = arith.constant 0 : index
    %62 = vector.load %arg6[%c0_53, %c0_54, %c0_55] : memref<1x256x8xf32, #tpu.memory_space<vmem>>, vector<1x256x8xf32>
    %63 = vector.shape_cast %62 : vector<1x256x8xf32> to vector<256x8xf32>
    %64 = arith.addf %63, %61 : vector<256x8xf32>
    %c0_56 = arith.constant 0 : index
    %c0_57 = arith.constant 0 : index
    %c0_58 = arith.constant 0 : index
    %65 = vector.load %arg6[%c0_56, %c0_57, %c0_58] : memref<1x256x8xf32, #tpu.memory_space<vmem>>, vector<1x256x8xf32>
    %66 = vector.shape_cast %65 : vector<1x256x8xf32> to vector<256x8xf32>
    %67 = vector.shape_cast %64 : vector<256x8xf32> to vector<1x256x8xf32>
    tpu.vector_store %arg6[%c0_56, %c0_57, %c0_58], %67 {strides = array<i32>} : memref<1x256x8xf32, #tpu.memory_space<vmem>>, vector<1x256x8xf32>,
    %68 = vector.extract_strided_slice %4 {offsets = [32, 0], sizes = [256, 4], strides = [1, 1]} : vector<296x4xbf16> to vector<256x4xbf16>
    %c6 = arith.constant 6 : index
    %c0_59 = arith.constant 0 : index
    %c0_60 = arith.constant 0 : index
    %69 = vector.load %arg4[%c6, %c0_59, %c0_60] : memref<9x4x8xbf16, #tpu.memory_space<vmem>>, vector<1x4x8xbf16>
    %70 = vector.shape_cast %69 : vector<1x4x8xbf16> to vector<4x8xbf16>
    %cst_61 = arith.constant dense<0.000000e+00> : vector<256x8xf32>
    %71 = tpu.matmul %68, %70, %cst_61 {dimension_numbers = #tpu.dot_dimension_numbers<[1], [0], [0], [1], [0, 0, 1, 1], [], []>} : vector<256x4xbf16>, vector<4x8xbf16>, vector<256x8xf32> -> vector<256x8xf32>
    %c0_62 = arith.constant 0 : index
    %c0_63 = arith.constant 0 : index
    %c0_64 = arith.constant 0 : index
    %72 = vector.load %arg6[%c0_62, %c0_63, %c0_64] : memref<1x256x8xf32, #tpu.memory_space<vmem>>, vector<1x256x8xf32>
    %73 = vector.shape_cast %72 : vector<1x256x8xf32> to vector<256x8xf32>
    %74 = arith.addf %73, %71 : vector<256x8xf32>
    %c0_65 = arith.constant 0 : index
    %c0_66 = arith.constant 0 : index
    %c0_67 = arith.constant 0 : index
    %75 = vector.load %arg6[%c0_65, %c0_66, %c0_67] : memref<1x256x8xf32, #tpu.memory_space<vmem>>, vector<1x256x8xf32>
    %76 = vector.shape_cast %75 : vector<1x256x8xf32> to vector<256x8xf32>
    %77 = vector.shape_cast %74 : vector<256x8xf32> to vector<1x256x8xf32>
    tpu.vector_store %arg6[%c0_65, %c0_66, %c0_67], %77 {strides = array<i32>} : memref<1x256x8xf32, #tpu.memory_space<vmem>>, vector<1x256x8xf32>,
    %78 = vector.extract_strided_slice %1 {offsets = [33, 0], sizes = [256, 4], strides = [1, 1]} : vector<296x4xbf16> to vector<256x4xbf16>
    %c7 = arith.constant 7 : index
    %c0_68 = arith.constant 0 : index
    %c0_69 = arith.constant 0 : index
    %79 = vector.load %arg4[%c7, %c0_68, %c0_69] : memref<9x4x8xbf16, #tpu.memory_space<vmem>>, vector<1x4x8xbf16>
    %80 = vector.shape_cast %79 : vector<1x4x8xbf16> to vector<4x8xbf16>
    %cst_70 = arith.constant dense<0.000000e+00> : vector<256x8xf32>
    %81 = tpu.matmul %78, %80, %cst_70 {dimension_numbers = #tpu.dot_dimension_numbers<[1], [0], [0], [1], [0, 0, 1, 1], [], []>} : vector<256x4xbf16>, vector<4x8xbf16>, vector<256x8xf32> -> vector<256x8xf32>
    %c0_71 = arith.constant 0 : index
    %c0_72 = arith.constant 0 : index
    %c0_73 = arith.constant 0 : index
    %82 = vector.load %arg6[%c0_71, %c0_72, %c0_73] : memref<1x256x8xf32, #tpu.memory_space<vmem>>, vector<1x256x8xf32>
    %83 = vector.shape_cast %82 : vector<1x256x8xf32> to vector<256x8xf32>
    %84 = arith.addf %83, %81 : vector<256x8xf32>
    %c0_74 = arith.constant 0 : index
    %c0_75 = arith.constant 0 : index
    %c0_76 = arith.constant 0 : index
    %85 = vector.load %arg6[%c0_74, %c0_75, %c0_76] : memref<1x256x8xf32, #tpu.memory_space<vmem>>, vector<1x256x8xf32>
    %86 = vector.shape_cast %85 : vector<1x256x8xf32> to vector<256x8xf32>
    %87 = vector.shape_cast %84 : vector<256x8xf32> to vector<1x256x8xf32>
    tpu.vector_store %arg6[%c0_74, %c0_75, %c0_76], %87 {strides = array<i32>} : memref<1x256x8xf32, #tpu.memory_space<vmem>>, vector<1x256x8xf32>,
    %88 = vector.extract_strided_slice %7 {offsets = [34, 0], sizes = [256, 4], strides = [1, 1]} : vector<296x4xbf16> to vector<256x4xbf16>
    %c8 = arith.constant 8 : index
    %c0_77 = arith.constant 0 : index
    %c0_78 = arith.constant 0 : index
    %89 = vector.load %arg4[%c8, %c0_77, %c0_78] : memref<9x4x8xbf16, #tpu.memory_space<vmem>>, vector<1x4x8xbf16>
    %90 = vector.shape_cast %89 : vector<1x4x8xbf16> to vector<4x8xbf16>
    %cst_79 = arith.constant dense<0.000000e+00> : vector<256x8xf32>
    %91 = tpu.matmul %88, %90, %cst_79 {dimension_numbers = #tpu.dot_dimension_numbers<[1], [0], [0], [1], [0, 0, 1, 1], [], []>} : vector<256x4xbf16>, vector<4x8xbf16>, vector<256x8xf32> -> vector<256x8xf32>
    %c0_80 = arith.constant 0 : index
    %c0_81 = arith.constant 0 : index
    %c0_82 = arith.constant 0 : index
    %92 = vector.load %arg6[%c0_80, %c0_81, %c0_82] : memref<1x256x8xf32, #tpu.memory_space<vmem>>, vector<1x256x8xf32>
    %93 = vector.shape_cast %92 : vector<1x256x8xf32> to vector<256x8xf32>
    %94 = arith.addf %93, %91 : vector<256x8xf32>
    %c0_83 = arith.constant 0 : index
    %c0_84 = arith.constant 0 : index
    %c0_85 = arith.constant 0 : index
    %95 = vector.load %arg6[%c0_83, %c0_84, %c0_85] : memref<1x256x8xf32, #tpu.memory_space<vmem>>, vector<1x256x8xf32>
    %96 = vector.shape_cast %95 : vector<1x256x8xf32> to vector<256x8xf32>
    %97 = vector.shape_cast %94 : vector<256x8xf32> to vector<1x256x8xf32>
    tpu.vector_store %arg6[%c0_83, %c0_84, %c0_85], %97 {strides = array<i32>} : memref<1x256x8xf32, #tpu.memory_space<vmem>>, vector<1x256x8xf32>,
    %c0_86 = arith.constant 0 : index
    %c0_87 = arith.constant 0 : index
    %c0_88 = arith.constant 0 : index
    %98 = vector.load %arg6[%c0_86, %c0_87, %c0_88] : memref<1x256x8xf32, #tpu.memory_space<vmem>>, vector<1x256x8xf32>
    %99 = vector.shape_cast %98 : vector<1x256x8xf32> to vector<256x8xf32>
    %cst_89 = arith.constant dense<0.000000e+00> : vector<8xf32>
    %100 = vector.multi_reduction <add>, %99, %cst_89 [0] : vector<256x8xf32> to vector<8xf32>
    %101 = vector.shape_cast %100 : vector<8xf32> to vector<1x8xf32>
    %c0_90 = arith.constant 0 : index
    %c0_91 = arith.constant 0 : index
    %c0_92 = arith.constant 0 : index
    %102 = vector.load %arg7[%c0_90, %c0_91, %c0_92] : memref<1x1x8xf32, #tpu.memory_space<vmem>>, vector<1x1x8xf32>
    %103 = vector.shape_cast %102 : vector<1x1x8xf32> to vector<1x8xf32>
    %104 = vector.shape_cast %101 : vector<1x8xf32> to vector<1x1x8xf32>
    tpu.vector_store %arg7[%c0_90, %c0_91, %c0_92], %104 {strides = array<i32>} : memref<1x1x8xf32, #tpu.memory_space<vmem>>, vector<1x1x8xf32>,
    %105 = arith.mulf %99, %99 : vector<256x8xf32>
    %cst_93 = arith.constant dense<0.000000e+00> : vector<8xf32>
    %106 = vector.multi_reduction <add>, %105, %cst_93 [0] : vector<256x8xf32> to vector<8xf32>
    %107 = vector.shape_cast %106 : vector<8xf32> to vector<1x8xf32>
    %c0_94 = arith.constant 0 : index
    %c0_95 = arith.constant 0 : index
    %c0_96 = arith.constant 0 : index
    %108 = vector.load %arg8[%c0_94, %c0_95, %c0_96] : memref<1x1x8xf32, #tpu.memory_space<vmem>>, vector<1x1x8xf32>
    %109 = vector.shape_cast %108 : vector<1x1x8xf32> to vector<1x8xf32>
    %110 = vector.shape_cast %107 : vector<1x8xf32> to vector<1x1x8xf32>
    tpu.vector_store %arg8[%c0_94, %c0_95, %c0_96], %110 {strides = array<i32>} : memref<1x1x8xf32, #tpu.memory_space<vmem>>, vector<1x1x8xf32>,
    return
  }
  func.func @transform_0(%arg0: i32) -> (i32, i32, i32) {
    %c0_i32 = arith.constant 0 : i32
    %c0_i32_0 = arith.constant 0 : i32
    %c0_i32_1 = arith.constant 0 : i32
    return %arg0, %c0_i32, %c0_i32_0 : i32, i32, i32
  }
  func.func @transform_1(%arg0: i32) -> (i32, i32) {
    %c0_i32 = arith.constant 0 : i32
    %c0_i32_0 = arith.constant 0 : i32
    %c0_i32_1 = arith.constant 0 : i32
    return %c0_i32, %c0_i32_0 : i32, i32
  }
  func.func @transform_2(%arg0: i32) -> (i32, i32) {
    %c0_i32 = arith.constant 0 : i32
    %c0_i32_0 = arith.constant 0 : i32
    %c0_i32_1 = arith.constant 0 : i32
    return %c0_i32, %c0_i32_0 : i32, i32
  }
  func.func @transform_3(%arg0: i32) -> (i32, i32, i32) {
    %c0_i32 = arith.constant 0 : i32
    %c0_i32_0 = arith.constant 0 : i32
    %c0_i32_1 = arith.constant 0 : i32
    %c0_i32_2 = arith.constant 0 : i32
    return %c0_i32, %c0_i32_0, %c0_i32_1 : i32, i32, i32
  }
  func.func @transform_4(%arg0: i32) -> (i32, i32) {
    %c0_i32 = arith.constant 0 : i32
    %c0_i32_0 = arith.constant 0 : i32
    %c0_i32_1 = arith.constant 0 : i32
    return %c0_i32, %c0_i32_0 : i32, i32
  }
  func.func @transform_5(%arg0: i32) -> (i32, i32, i32) {
    %c0_i32 = arith.constant 0 : i32
    %c0_i32_0 = arith.constant 0 : i32
    %c0_i32_1 = arith.constant 0 : i32
    return %arg0, %c0_i32, %c0_i32_0 : i32, i32, i32
  }
  func.func @transform_6(%arg0: i32) -> (i32, i32, i32) {
    %c0_i32 = arith.constant 0 : i32
    %c0_i32_0 = arith.constant 0 : i32
    %c0_i32_1 = arith.constant 0 : i32
    return %arg0, %c0_i32, %c0_i32_0 : i32, i32, i32
  }
  func.func @transform_7(%arg0: i32) -> (i32, i32, i32) {
    %c0_i32 = arith.constant 0 : i32
    %c0_i32_0 = arith.constant 0 : i32
    %c0_i32_1 = arith.constant 0 : i32
    return %arg0, %c0_i32, %c0_i32_0 : i32, i32, i32
  }
}

</mosaic_0001>

<llo_original>
// kernel: tpu_custom_call.1
$region0: #{tpu_custom_call.1}
  #allocation0 [shape = 'u32[]', space=smem, size = 0x4, offset = 0x4, fixed_abs, tag = 'smem constant byte address 0x4 - core index']
  #allocation1 [shape = 'u32[144,128]{1,0:T(1,128)}', space=vmem, size = 0x12000, scoped, tag = 'internal scratch']
  %s0 = inlined_call_operand.vmem [shape: bf16[2,296,4], index: 0, kind: input, shape index: {}]
  %s1 = inlined_call_operand.vmem [shape: bf16[296,1], index: 1, kind: input, shape index: {}]
  %s2 = inlined_call_operand.vmem [shape: bf16[296,1], index: 2, kind: input, shape index: {}]
  %s3 = inlined_call_operand.vmem [shape: bf16[9,4,8], index: 3, kind: input, shape index: {}]
  %s4 = inlined_call_operand.vmem [shape: f32[1,8], index: 4, kind: input, shape index: {}]
  %s5 = inlined_call_operand.vmem [shape: f32[2,256,8], index: 5, kind: output, shape index: {0}]
  %s6 = inlined_call_operand.hbm [shape: f32[2,1,8], index: 6, kind: output, shape index: {1}]
  %s7 = inlined_call_operand.hbm [shape: f32[2,1,8], index: 7, kind: output, shape index: {2}]
  %8 = xla_tuple %s5, %s6, %s7
  %s9 = sld [smem:[#allocation0]]
  $region69: #{tpu_custom_call.1} parent=0
    _
  %s11 = ssub.s32 1, %s9
  %s12 = scalar_select 0, %s11, %s9
  $region1: #{tpu_custom_call.1} parent=0
    #allocation2 [shape = 'u8[1024]{0}', space=vmem, size = 0x400, scoped, tag = 'output window, operand 1']
    #allocation3 [shape = 's32[2]{0}', space=sflag, size = 0x8, scoped, tag = 'scoped memory for tpu_custom_call.1']
    #allocation4 [shape = 'u8[1024]{0}', space=vmem, size = 0x400, scoped, tag = 'output window, operand 2']
    #allocation5 [shape = 's32[2]{0}', space=sflag, size = 0x8, scoped, tag = 'scoped memory for tpu_custom_call.1']
    %13 = vsyncpa [#allocation3], 0
    %s14 = scalar_lea.sflag [#allocation3], 1
    %15 = vsyncpa %s14, 0
    %16 = vsyncpa [#allocation5], 0
    %s17 = scalar_lea.sflag [#allocation5], 1
    %18 = vsyncpa %s17, 0
    loop: start=0, step=1, limit=4
    $region2: #{tpu_custom_call.1} parent=1 // loop_pre_header
      _
    $region3: #{tpu_custom_call.1} parent=1 // loop_header
      %s20 = sphi 0, %s24
      %p21 = scmp.ge.s32.totalorder %s20, 4
      %s30 = sphi 0, %s32
      %s33 = sphi 0, %s30
      %s34 = sphi 0, %s33
      %s50 = sphi 0, %s34
      %s54 = sphi 0, %s54
      %s56 = sphi 0, %s54
      %s57 = sphi 0, %s56
      %s71 = sphi 0, %s57
      %s75 = sphi 0, %s75
      %s77 = sphi 0, %s75
      %s78 = sphi 0, %s77
      %s92 = sphi 0, %s78
      %s96 = sphi 0, %s96
      %s98 = sphi 0, %s96
      %s99 = sphi 0, %s98
      %s113 = sphi 0, %s99
      %s117 = sphi 0, %s117
      %s119 = sphi 0, %s117
      %s120 = sphi 0, %s119
      %s134 = sphi 0, %s120
      %s140 = sphi 0, %s142
      %s143 = sphi 0, %s140
      %s144 = sphi 0, %s143
      %s160 = sphi 0, %s144
      %s166 = sphi 0, %s168
      %s169 = sphi 0, %s166
      %s170 = sphi 0, %s169
      %s186 = sphi 0, %s170
      %s192 = sphi 0, %s194
      %s195 = sphi 0, %s192
      %s196 = sphi 0, %s195
      %s212 = sphi 0, %s196
    $region4: #{tpu_custom_call.1} parent=1 // loop_header_branch
      %23 = sbr.rel (%p21) target = $region8
    $region5: #{tpu_custom_call.1} parent=1 // loop_body
      %s25 = ssub.s32 %s20, 1
      %s26 = ssub.s32 %s20, 2
      %s27 = sadd.s32 %s20, 1
      %s28 = ssub.s32 %s20, %s27
      %p29 = scmp.eq.s32.totalorder %s28, 0
      %s31 = sadd.s32 %s30, 1
      %s32 = scalar_select %p29, %s30, %s31
      %p35 = pneg %p29
      %p36 = scmp.eq.s32.totalorder %s20, 1
      %p37 = por %p35, %p36
      %p38 = scmp.ne.s32.totalorder %s30, %s33
      %p39 = scmp.eq.s32.totalorder %s20, 0
      %p40 = por %p38, %p39
      %p41 = scmp.ne.s32.totalorder %s30, %s33
      %p42 = scmp.eq.s32.totalorder %s25, 1
      %p43 = por %p41, %p42
      %p44 = scmp.ne.s32.totalorder %s33, %s34
      %p45 = scmp.eq.s32.totalorder %s25, 0
      %p46 = por %p44, %p45
      %p47 = scmp.ne.s32.totalorder %s33, %s34
      %p48 = scmp.eq.s32.totalorder %s26, 1
      %p49 = por %p47, %p48
      %p51 = scmp.ne.s32.totalorder %s34, %s50
      %p52 = scmp.eq.s32.totalorder %s26, 0
      %p53 = por %p51, %p52
      %s55 = sadd.s32 %s54, 1
      %p58 = scmp.eq.s32.totalorder %s20, 1
      %p59 = scmp.ne.s32.totalorder %s54, %s56
      %p60 = scmp.eq.s32.totalorder %s20, 0
      %p61 = por %p59, %p60
      %p62 = scmp.ne.s32.totalorder %s54, %s56
      %p63 = scmp.eq.s32.totalorder %s25, 1
      %p64 = por %p62, %p63
      %p65 = scmp.ne.s32.totalorder %s56, %s57
      %p66 = scmp.eq.s32.totalorder %s25, 0
      %p67 = por %p65, %p66
      %p68 = scmp.ne.s32.totalorder %s56, %s57
      %p69 = scmp.eq.s32.totalorder %s26, 1
      %p70 = por %p68, %p69
      %p72 = scmp.ne.s32.totalorder %s57, %s71
      %p73 = scmp.eq.s32.totalorder %s26, 0
      %p74 = por %p72, %p73
      %s76 = sadd.s32 %s75, 1
      %p79 = scmp.eq.s32.totalorder %s20, 1
      %p80 = scmp.ne.s32.totalorder %s75, %s77
      %p81 = scmp.eq.s32.totalorder %s20, 0
      %p82 = por %p80, %p81
      %p83 = scmp.ne.s32.totalorder %s75, %s77
      %p84 = scmp.eq.s32.totalorder %s25, 1
      %p85 = por %p83, %p84
      %p86 = scmp.ne.s32.totalorder %s77, %s78
      %p87 = scmp.eq.s32.totalorder %s25, 0
      %p88 = por %p86, %p87
      %p89 = scmp.ne.s32.totalorder %s77, %s78
      %p90 = scmp.eq.s32.totalorder %s26, 1
      %p91 = por %p89, %p90
      %p93 = scmp.ne.s32.totalorder %s78, %s92
      %p94 = scmp.eq.s32.totalorder %s26, 0
      %p95 = por %p93, %p94
      %s97 = sadd.s32 %s96, 1
      %p100 = scmp.eq.s32.totalorder %s20, 1
      %p101 = scmp.ne.s32.totalorder %s96, %s98
      %p102 = scmp.eq.s32.totalorder %s20, 0
      %p103 = por %p101, %p102
      %p104 = scmp.ne.s32.totalorder %s96, %s98
      %p105 = scmp.eq.s32.totalorder %s25, 1
      %p106 = por %p104, %p105
      %p107 = scmp.ne.s32.totalorder %s98, %s99
      %p108 = scmp.eq.s32.totalorder %s25, 0
      %p109 = por %p107, %p108
      %p110 = scmp.ne.s32.totalorder %s98, %s99
      %p111 = scmp.eq.s32.totalorder %s26, 1
      %p112 = por %p110, %p111
      %p114 = scmp.ne.s32.totalorder %s99, %s113
      %p115 = scmp.eq.s32.totalorder %s26, 0
      %p116 = por %p114, %p115
      %s118 = sadd.s32 %s117, 1
      %p121 = scmp.eq.s32.totalorder %s20, 1
      %p122 = scmp.ne.s32.totalorder %s117, %s119
      %p123 = scmp.eq.s32.totalorder %s20, 0
      %p124 = por %p122, %p123
      %p125 = scmp.ne.s32.totalorder %s117, %s119
      %p126 = scmp.eq.s32.totalorder %s25, 1
      %p127 = por %p125, %p126
      %p128 = scmp.ne.s32.totalorder %s119, %s120
      %p129 = scmp.eq.s32.totalorder %s25, 0
      %p130 = por %p128, %p129
      %p131 = scmp.ne.s32.totalorder %s119, %s120
      %p132 = scmp.eq.s32.totalorder %s26, 1
      %p133 = por %p131, %p132
      %p135 = scmp.ne.s32.totalorder %s120, %s134
      %p136 = scmp.eq.s32.totalorder %s26, 0
      %p137 = por %p135, %p136
      %s138 = ssub.s32 %s20, %s27
      %p139 = scmp.eq.s32.totalorder %s138, 0
      %s141 = sadd.s32 %s140, 1
      %s142 = scalar_select %p139, %s140, %s141
      %p145 = pneg %p139
      %p146 = scmp.eq.s32.totalorder %s20, 1
      %p147 = por %p145, %p146
      %p148 = scmp.ne.s32.totalorder %s140, %s143
      %p149 = scmp.eq.s32.totalorder %s20, 0
      %p150 = por %p148, %p149
      %p151 = scmp.ne.s32.totalorder %s140, %s143
      %p152 = scmp.eq.s32.totalorder %s25, 1
      %p153 = por %p151, %p152
      %p154 = scmp.ne.s32.totalorder %s143, %s144
      %p155 = scmp.eq.s32.totalorder %s25, 0
      %p156 = por %p154, %p155
      %p157 = scmp.ne.s32.totalorder %s143, %s144
      %p158 = scmp.eq.s32.totalorder %s26, 1
      %p159 = por %p157, %p158
      %p161 = scmp.ne.s32.totalorder %s144, %s160
      %p162 = scmp.eq.s32.totalorder %s26, 0
      %p163 = por %p161, %p162
      %s164 = ssub.s32 %s20, %s27
      %p165 = scmp.eq.s32.totalorder %s164, 0
      %s167 = sadd.s32 %s166, 1
      %s168 = scalar_select %p165, %s166, %s167
      %p171 = pneg %p165
      %p172 = scmp.eq.s32.totalorder %s20, 1
      %p173 = por %p171, %p172
      %p174 = scmp.ne.s32.totalorder %s166, %s169
      %p175 = scmp.eq.s32.totalorder %s20, 0
      %p176 = por %p174, %p175
      %p177 = scmp.ne.s32.totalorder %s166, %s169
      %p178 = scmp.eq.s32.totalorder %s25, 1
      %p179 = por %p177, %p178
      %p180 = scmp.ne.s32.totalorder %s169, %s170
      %p181 = scmp.eq.s32.totalorder %s25, 0
      %p182 = por %p180, %p181
      %p183 = scmp.ne.s32.totalorder %s169, %s170
      %p184 = scmp.eq.s32.totalorder %s26, 1
      %p185 = por %p183, %p184
      %p187 = scmp.ne.s32.totalorder %s170, %s186
      %p188 = scmp.eq.s32.totalorder %s26, 0
      %p189 = por %p187, %p188
      %s190 = ssub.s32 %s20, %s27
      %p191 = scmp.eq.s32.totalorder %s190, 0
      %s193 = sadd.s32 %s192, 1
      %s194 = scalar_select %p191, %s192, %s193
      %p197 = pneg %p191
      %p198 = scmp.eq.s32.totalorder %s20, 1
      %p199 = por %p197, %p198
      %p200 = scmp.ne.s32.totalorder %s192, %s195
      %p201 = scmp.eq.s32.totalorder %s20, 0
      %p202 = por %p200, %p201
      %p203 = scmp.ne.s32.totalorder %s192, %s195
      %p204 = scmp.eq.s32.totalorder %s25, 1
      %p205 = por %p203, %p204
      %p206 = scmp.ne.s32.totalorder %s195, %s196
      %p207 = scmp.eq.s32.totalorder %s25, 0
      %p208 = por %p206, %p207
      %p209 = scmp.ne.s32.totalorder %s195, %s196
      %p210 = scmp.eq.s32.totalorder %s26, 1
      %p211 = por %p209, %p210
      %p213 = scmp.ne.s32.totalorder %s196, %s212
      %p214 = scmp.eq.s32.totalorder %s26, 0
      %p215 = por %p213, %p214
      %p216 = scmp.le.s32.totalorder 1, %s20
      %p217 = scmp.lt.s32.totalorder %s20, 3
      %p218 = pnand %p216, %p217
      %p219 = pneg %p218
      // Predicated region
      $region9: #{tpu_custom_call.1} parent=5 // pred_check
        _
      $region10: #{tpu_custom_call.1} parent=5 // pred_check_branch
        %221 = sbr.rel (%p218) target = $region12
      $region11: #{tpu_custom_call.1} parent=5 // pred_region
        %s222 = ssub.s32 %s20, 1
        // Predicated region
        $region13: #{tpu_custom_call.1} parent=11 // pred_check
          %p223 = pneg %p67
        $region14: #{tpu_custom_call.1} parent=11 // pred_check_branch
          %225 = sbr.rel (%p223) target = $region16
        $region15: #{tpu_custom_call.1} parent=11 // pred_region
          _
        $region16: #{tpu_custom_call.1} parent=11 // pred_fallthru
          _
        // Predicated region
        $region17: #{tpu_custom_call.1} parent=11 // pred_check
          %p226 = pneg %p88
        $region18: #{tpu_custom_call.1} parent=11 // pred_check_branch
          %228 = sbr.rel (%p226) target = $region20
        $region19: #{tpu_custom_call.1} parent=11 // pred_region
          _
        $region20: #{tpu_custom_call.1} parent=11 // pred_fallthru
          _
        // Predicated region
        $region21: #{tpu_custom_call.1} parent=11 // pred_check
          %p229 = pneg %p109
        $region22: #{tpu_custom_call.1} parent=11 // pred_check_branch
          %231 = sbr.rel (%p229) target = $region24
        $region23: #{tpu_custom_call.1} parent=11 // pred_region
          _
        $region24: #{tpu_custom_call.1} parent=11 // pred_fallthru
          _
        // Predicated region
        $region25: #{tpu_custom_call.1} parent=11 // pred_check
          %p232 = pneg %p130
        $region26: #{tpu_custom_call.1} parent=11 // pred_check_branch
          %234 = sbr.rel (%p232) target = $region28
        $region27: #{tpu_custom_call.1} parent=11 // pred_region
          _
        $region28: #{tpu_custom_call.1} parent=11 // pred_fallthru
          _
      $region12: #{tpu_custom_call.1} parent=5 // pred_fallthru
        _
      %p235 = scmp.lt.s32.totalorder %s20, 2
      // Predicated region
      $region29: #{tpu_custom_call.1} parent=5 // pred_check
        %p236 = pneg %p235
      $region30: #{tpu_custom_call.1} parent=5 // pred_check_branch
        %238 = sbr.rel (%p236) target = $region32
      $region31: #{tpu_custom_call.1} parent=5 // pred_region
        // Predicated region
        $region33: #{tpu_custom_call.1} parent=31 // pred_check
          %p239 = pneg %p40
        $region34: #{tpu_custom_call.1} parent=31 // pred_check_branch
          %241 = sbr.rel (%p239) target = $region36
        $region35: #{tpu_custom_call.1} parent=31 // pred_region
          %p242 = scmp.lt.s32.totalorder %s20, 1
          %s243 = scalar_select %p242, %s20, 1
          %s244 = smul.addr %s243, 37
          %s245 = smul.addr %s244, 4
          %s246 = scalar_lea.vmem %s0, %s245
        $region36: #{tpu_custom_call.1} parent=31 // pred_fallthru
          _
      $region32: #{tpu_custom_call.1} parent=5 // pred_fallthru
        _
      %p247 = scmp.le.s32.totalorder 1, %s20
      %p248 = scmp.lt.s32.totalorder %s20, 3
      %p249 = pnand %p247, %p248
      %p250 = pneg %p249
      // Predicated region
      $region37: #{tpu_custom_call.1} parent=5 // pred_check
        _
      $region38: #{tpu_custom_call.1} parent=5 // pred_check_branch
        %252 = sbr.rel (%p249) target = $region40
      $region39: #{tpu_custom_call.1} parent=5 // pred_region
        %s253 = ssub.s32 %s20, 1
        %p254 = scmp.lt.s32.totalorder %s25, 1
        %s255 = scalar_select %p254, %s25, 1
        %s256 = smul.addr %s255, 37
        %s257 = smul.addr %s256, 4
        %s258 = scalar_lea.vmem %s0, %s257
        %p259 = pneg %p46
        %p260 = pneg %p43
        %p261 = pneg %p67
        %p262 = pneg %p64
        %p263 = pneg %p88
        %p264 = pneg %p85
        %p265 = pneg %p109
        %p266 = pneg %p106
        %p267 = pneg %p130
        %p268 = pneg %p127
        %p269 = pneg %p156
        %p270 = pneg %p153
        %p271 = scmp.lt.s32.totalorder %s25, 1
        %s272 = scalar_select %p271, %s25, 1
        %s273 = smul.addr %s272, 32
        %s274 = smul.addr %s273, 8
        %s275 = scalar_lea.vmem %s5, %s274
        %p276 = pneg %p182
        %p277 = pneg %p179
        %s278 = sand.u32 %s169, 1
        %s279 = scalar_lea.sflag [#allocation3], %s278
        %s280 = sand.u32 %s169, 1
        %s281 = scalar_lea.vmem [#allocation2], %s280
        %p282 = pneg %p208
        %p283 = pneg %p205
        %s284 = sand.u32 %s195, 1
        %s285 = scalar_lea.sflag [#allocation5], %s284
        %s286 = sand.u32 %s195, 1
        %s287 = scalar_lea.vmem [#allocation4], %s286
        %p288 = scmp.lt.s32.totalorder %s25, 1
        %s289 = scalar_select %p288, %s25, 1
        %s290 = smul.addr %s289, 37
        %s291 = smul.addr %s290, 4
        %s292 = scalar_lea.vmem %s0, %s291
        %p293 = scmp.lt.s32.totalorder %s25, 1
        %s294 = scalar_select %p293, %s25, 1
        %s295 = smul.addr %s294, 32
        %s296 = smul.addr %s295, 8
        %s297 = scalar_lea.vmem %s5, %s296
        %v299 = vld [vmem:[%s292] sm:$0xf]
        %v300 = vld [vmem:[%s292 + $0x4] sm:$0xf]
        %v301 = vld [vmem:[%s292 + $0x8] sm:$0xf]
        %v302 = vld [vmem:[%s292 + $0xc] sm:$0xf]
        %v303 = vld [vmem:[%s292 + $0x10] sm:$0xf]
        %v304 = vld [vmem:[%s292 + $0x14] sm:$0xf]
        %v305 = vld [vmem:[%s292 + $0x18] sm:$0xf]
        %v306 = vld [vmem:[%s292 + $0x1c] sm:$0xf]
        %v307 = vld [vmem:[%s292 + $0x20] sm:$0xf]
        %v308 = vld [vmem:[%s292 + $0x24] sm:$0xf]
        %v309 = vld [vmem:[%s292 + $0x28] sm:$0xf]
        %v310 = vld [vmem:[%s292 + $0x2c] sm:$0xf]
        %v311 = vld [vmem:[%s292 + $0x30] sm:$0xf]
        %v312 = vld [vmem:[%s292 + $0x34] sm:$0xf]
        %v313 = vld [vmem:[%s292 + $0x38] sm:$0xf]
        %v314 = vld [vmem:[%s292 + $0x3c] sm:$0xf]
        %v315 = vld [vmem:[%s292 + $0x40] sm:$0xf]
        %v316 = vld [vmem:[%s292 + $0x44] sm:$0xf]
        %v317 = vld [vmem:[%s292 + $0x48] sm:$0xf]
        %v318 = vld [vmem:[%s292 + $0x4c] sm:$0xf]
        %v319 = vld [vmem:[%s292 + $0x50] sm:$0xf]
        %v320 = vld [vmem:[%s292 + $0x54] sm:$0xf]
        %v321 = vld [vmem:[%s292 + $0x58] sm:$0xf]
        %v322 = vld [vmem:[%s292 + $0x5c] sm:$0xf]
        %v323 = vld [vmem:[%s292 + $0x60] sm:$0xf]
        %v324 = vld [vmem:[%s292 + $0x64] sm:$0xf]
        %v325 = vld [vmem:[%s292 + $0x68] sm:$0xf]
        %v326 = vld [vmem:[%s292 + $0x6c] sm:$0xf]
        %v327 = vld [vmem:[%s292 + $0x70] sm:$0xf]
        %v328 = vld [vmem:[%s292 + $0x74] sm:$0xf]
        %v329 = vld [vmem:[%s292 + $0x78] sm:$0xf]
        %v330 = vld [vmem:[%s292 + $0x7c] sm:$0xf]
        %v331 = vld [vmem:[%s292 + $0x80] sm:$0xf]
        %v332 = vld [vmem:[%s292 + $0x84] sm:$0xf]
        %v333 = vld [vmem:[%s292 + $0x88] sm:$0xf]
        %v334 = vld [vmem:[%s292 + $0x8c] sm:$0xf]
        %v335 = vld [vmem:[%s292 + $0x90] sm:$0xf]
        %v336 = vld [vmem:[%s1] sm:$0xf]
        %v337 = vld [vmem:[%s1 + $0x4] sm:$0xf]
        %v338 = vld [vmem:[%s1 + $0x8] sm:$0xf]
        %v339 = vld [vmem:[%s1 + $0xc] sm:$0xf]
        %v340 = vld [vmem:[%s1 + $0x10] sm:$0xf]
        %v341 = vld [vmem:[%s1 + $0x14] sm:$0xf]
        %v342 = vld [vmem:[%s1 + $0x18] sm:$0xf]
        %v343 = vld [vmem:[%s1 + $0x1c] sm:$0xf]
        %v344 = vld [vmem:[%s1 + $0x20] sm:$0xf]
        %v345 = vld [vmem:[%s1 + $0x24] sm:$0xf]
        %v346 = vld [vmem:[%s1 + $0x28] sm:$0xf]
        %v347 = vld [vmem:[%s1 + $0x2c] sm:$0xf]
        %v348 = vld [vmem:[%s1 + $0x30] sm:$0xf]
        %v349 = vld [vmem:[%s1 + $0x34] sm:$0xf]
        %v350 = vld [vmem:[%s1 + $0x38] sm:$0xf]
        %v351 = vld [vmem:[%s1 + $0x3c] sm:$0xf]
        %v352 = vld [vmem:[%s1 + $0x40] sm:$0xf]
        %v353 = vld [vmem:[%s1 + $0x44] sm:$0xf]
        %v354 = vld [vmem:[%s1 + $0x48] sm:$0xf]
        %v355 = vld [vmem:[%s1 + $0x4c] sm:$0xf]
        %v356 = vld [vmem:[%s1 + $0x50] sm:$0xf]
        %v357 = vld [vmem:[%s1 + $0x54] sm:$0xf]
        %v358 = vld [vmem:[%s1 + $0x58] sm:$0xf]
        %v359 = vld [vmem:[%s1 + $0x5c] sm:$0xf]
        %v360 = vld [vmem:[%s1 + $0x60] sm:$0xf]
        %v361 = vld [vmem:[%s1 + $0x64] sm:$0xf]
        %v362 = vld [vmem:[%s1 + $0x68] sm:$0xf]
        %v363 = vld [vmem:[%s1 + $0x6c] sm:$0xf]
        %v364 = vld [vmem:[%s1 + $0x70] sm:$0xf]
        %v365 = vld [vmem:[%s1 + $0x74] sm:$0xf]
        %v366 = vld [vmem:[%s1 + $0x78] sm:$0xf]
        %v367 = vld [vmem:[%s1 + $0x7c] sm:$0xf]
        %v368 = vld [vmem:[%s1 + $0x80] sm:$0xf]
        %v369 = vld [vmem:[%s1 + $0x84] sm:$0xf]
        %v370 = vld [vmem:[%s1 + $0x88] sm:$0xf]
        %v371 = vld [vmem:[%s1 + $0x8c] sm:$0xf]
        %373 = vset.pattern.permute.xlu0 0
        %374 = vperm.xlu0 %373, %v336
        %v375 = vpop.permute.xlu0 %374
        %v378 = vunpack.c.l.s4 839922192
        %v379 = vunpack.c.0.s8 %v378
        %v380 = vlaneseq
        %v381 = vshrl.u32 %v380, 7
        %v382 = vsub.s32 %v379, %v381
        %v383 = vrot.slane %v375, %v382
        %385 = vset.pattern.permute.xlu0 0
        %386 = vperm.xlu0 %385, %v337
        %v387 = vpop.permute.xlu0 %386
        %v390 = vunpack.c.l.s4 839922192
        %v391 = vunpack.c.0.s8 %v390
        %v392 = vlaneseq
        %v393 = vshrl.u32 %v392, 7
        %v394 = vsub.s32 %v391, %v393
        %v395 = vrot.slane %v387, %v394
        %397 = vset.pattern.permute.xlu0 0
        %398 = vperm.xlu0 %397, %v338
        %v399 = vpop.permute.xlu0 %398
        %v402 = vunpack.c.l.s4 839922192
        %v403 = vunpack.c.0.s8 %v402
        %v404 = vlaneseq
        %v405 = vshrl.u32 %v404, 7
        %v406 = vsub.s32 %v403, %v405
        %v407 = vrot.slane %v399, %v406
        %409 = vset.pattern.permute.xlu0 0
        %410 = vperm.xlu0 %409, %v339
        %v411 = vpop.permute.xlu0 %410
        %v414 = vunpack.c.l.s4 839922192
        %v415 = vunpack.c.0.s8 %v414
        %v416 = vlaneseq
        %v417 = vshrl.u32 %v416, 7
        %v418 = vsub.s32 %v415, %v417
        %v419 = vrot.slane %v411, %v418
        %421 = vset.pattern.permute.xlu0 0
        %422 = vperm.xlu0 %421, %v340
        %v423 = vpop.permute.xlu0 %422
        %v426 = vunpack.c.l.s4 839922192
        %v427 = vunpack.c.0.s8 %v426
        %v428 = vlaneseq
        %v429 = vshrl.u32 %v428, 7
        %v430 = vsub.s32 %v427, %v429
        %v431 = vrot.slane %v423, %v430
        %433 = vset.pattern.permute.xlu0 0
        %434 = vperm.xlu0 %433, %v341
        %v435 = vpop.permute.xlu0 %434
        %v438 = vunpack.c.l.s4 839922192
        %v439 = vunpack.c.0.s8 %v438
        %v440 = vlaneseq
        %v441 = vshrl.u32 %v440, 7
        %v442 = vsub.s32 %v439, %v441
        %v443 = vrot.slane %v435, %v442
        %445 = vset.pattern.permute.xlu0 0
        %446 = vperm.xlu0 %445, %v342
        %v447 = vpop.permute.xlu0 %446
        %v450 = vunpack.c.l.s4 839922192
        %v451 = vunpack.c.0.s8 %v450
        %v452 = vlaneseq
        %v453 = vshrl.u32 %v452, 7
        %v454 = vsub.s32 %v451, %v453
        %v455 = vrot.slane %v447, %v454
        %457 = vset.pattern.permute.xlu0 0
        %458 = vperm.xlu0 %457, %v343
        %v459 = vpop.permute.xlu0 %458
        %v462 = vunpack.c.l.s4 839922192
        %v463 = vunpack.c.0.s8 %v462
        %v464 = vlaneseq
        %v465 = vshrl.u32 %v464, 7
        %v466 = vsub.s32 %v463, %v465
        %v467 = vrot.slane %v459, %v466
        %469 = vset.pattern.permute.xlu0 0
        %470 = vperm.xlu0 %469, %v344
        %v471 = vpop.permute.xlu0 %470
        %v474 = vunpack.c.l.s4 839922192
        %v475 = vunpack.c.0.s8 %v474
        %v476 = vlaneseq
        %v477 = vshrl.u32 %v476, 7
        %v478 = vsub.s32 %v475, %v477
        %v479 = vrot.slane %v471, %v478
        %481 = vset.pattern.permute.xlu0 0
        %482 = vperm.xlu0 %481, %v345
        %v483 = vpop.permute.xlu0 %482
        %v486 = vunpack.c.l.s4 839922192
        %v487 = vunpack.c.0.s8 %v486
        %v488 = vlaneseq
        %v489 = vshrl.u32 %v488, 7
        %v490 = vsub.s32 %v487, %v489
        %v491 = vrot.slane %v483, %v490
        %493 = vset.pattern.permute.xlu0 0
        %494 = vperm.xlu0 %493, %v346
        %v495 = vpop.permute.xlu0 %494
        %v498 = vunpack.c.l.s4 839922192
        %v499 = vunpack.c.0.s8 %v498
        %v500 = vlaneseq
        %v501 = vshrl.u32 %v500, 7
        %v502 = vsub.s32 %v499, %v501
        %v503 = vrot.slane %v495, %v502
        %505 = vset.pattern.permute.xlu0 0
        %506 = vperm.xlu0 %505, %v347
        %v507 = vpop.permute.xlu0 %506
        %v510 = vunpack.c.l.s4 839922192
        %v511 = vunpack.c.0.s8 %v510
        %v512 = vlaneseq
        %v513 = vshrl.u32 %v512, 7
        %v514 = vsub.s32 %v511, %v513
        %v515 = vrot.slane %v507, %v514
        %517 = vset.pattern.permute.xlu0 0
        %518 = vperm.xlu0 %517, %v348
        %v519 = vpop.permute.xlu0 %518
        %v522 = vunpack.c.l.s4 839922192
        %v523 = vunpack.c.0.s8 %v522
        %v524 = vlaneseq
        %v525 = vshrl.u32 %v524, 7
        %v526 = vsub.s32 %v523, %v525
        %v527 = vrot.slane %v519, %v526
        %529 = vset.pattern.permute.xlu0 0
        %530 = vperm.xlu0 %529, %v349
        %v531 = vpop.permute.xlu0 %530
        %v534 = vunpack.c.l.s4 839922192
        %v535 = vunpack.c.0.s8 %v534
        %v536 = vlaneseq
        %v537 = vshrl.u32 %v536, 7
        %v538 = vsub.s32 %v535, %v537
        %v539 = vrot.slane %v531, %v538
        %541 = vset.pattern.permute.xlu0 0
        %542 = vperm.xlu0 %541, %v350
        %v543 = vpop.permute.xlu0 %542
        %v546 = vunpack.c.l.s4 839922192
        %v547 = vunpack.c.0.s8 %v546
        %v548 = vlaneseq
        %v549 = vshrl.u32 %v548, 7
        %v550 = vsub.s32 %v547, %v549
        %v551 = vrot.slane %v543, %v550
        %553 = vset.pattern.permute.xlu0 0
        %554 = vperm.xlu0 %553, %v351
        %v555 = vpop.permute.xlu0 %554
        %v558 = vunpack.c.l.s4 839922192
        %v559 = vunpack.c.0.s8 %v558
        %v560 = vlaneseq
        %v561 = vshrl.u32 %v560, 7
        %v562 = vsub.s32 %v559, %v561
        %v563 = vrot.slane %v555, %v562
        %565 = vset.pattern.permute.xlu0 0
        %566 = vperm.xlu0 %565, %v352
        %v567 = vpop.permute.xlu0 %566
        %v570 = vunpack.c.l.s4 839922192
        %v571 = vunpack.c.0.s8 %v570
        %v572 = vlaneseq
        %v573 = vshrl.u32 %v572, 7
        %v574 = vsub.s32 %v571, %v573
        %v575 = vrot.slane %v567, %v574
        %577 = vset.pattern.permute.xlu0 0
        %578 = vperm.xlu0 %577, %v353
        %v579 = vpop.permute.xlu0 %578
        %v582 = vunpack.c.l.s4 839922192
        %v583 = vunpack.c.0.s8 %v582
        %v584 = vlaneseq
        %v585 = vshrl.u32 %v584, 7
        %v586 = vsub.s32 %v583, %v585
        %v587 = vrot.slane %v579, %v586
        %589 = vset.pattern.permute.xlu0 0
        %590 = vperm.xlu0 %589, %v354
        %v591 = vpop.permute.xlu0 %590
        %v594 = vunpack.c.l.s4 839922192
        %v595 = vunpack.c.0.s8 %v594
        %v596 = vlaneseq
        %v597 = vshrl.u32 %v596, 7
        %v598 = vsub.s32 %v595, %v597
        %v599 = vrot.slane %v591, %v598
        %601 = vset.pattern.permute.xlu0 0
        %602 = vperm.xlu0 %601, %v355
        %v603 = vpop.permute.xlu0 %602
        %v606 = vunpack.c.l.s4 839922192
        %v607 = vunpack.c.0.s8 %v606
        %v608 = vlaneseq
        %v609 = vshrl.u32 %v608, 7
        %v610 = vsub.s32 %v607, %v609
        %v611 = vrot.slane %v603, %v610
        %613 = vset.pattern.permute.xlu0 0
        %614 = vperm.xlu0 %613, %v356
        %v615 = vpop.permute.xlu0 %614
        %v618 = vunpack.c.l.s4 839922192
        %v619 = vunpack.c.0.s8 %v618
        %v620 = vlaneseq
        %v621 = vshrl.u32 %v620, 7
        %v622 = vsub.s32 %v619, %v621
        %v623 = vrot.slane %v615, %v622
        %625 = vset.pattern.permute.xlu0 0
        %626 = vperm.xlu0 %625, %v357
        %v627 = vpop.permute.xlu0 %626
        %v630 = vunpack.c.l.s4 839922192
        %v631 = vunpack.c.0.s8 %v630
        %v632 = vlaneseq
        %v633 = vshrl.u32 %v632, 7
        %v634 = vsub.s32 %v631, %v633
        %v635 = vrot.slane %v627, %v634
        %637 = vset.pattern.permute.xlu0 0
        %638 = vperm.xlu0 %637, %v358
        %v639 = vpop.permute.xlu0 %638
        %v642 = vunpack.c.l.s4 839922192
        %v643 = vunpack.c.0.s8 %v642
        %v644 = vlaneseq
        %v645 = vshrl.u32 %v644, 7
        %v646 = vsub.s32 %v643, %v645
        %v647 = vrot.slane %v639, %v646
        %649 = vset.pattern.permute.xlu0 0
        %650 = vperm.xlu0 %649, %v359
        %v651 = vpop.permute.xlu0 %650
        %v654 = vunpack.c.l.s4 839922192
        %v655 = vunpack.c.0.s8 %v654
        %v656 = vlaneseq
        %v657 = vshrl.u32 %v656, 7
        %v658 = vsub.s32 %v655, %v657
        %v659 = vrot.slane %v651, %v658
        %661 = vset.pattern.permute.xlu0 0
        %662 = vperm.xlu0 %661, %v360
        %v663 = vpop.permute.xlu0 %662
        %v666 = vunpack.c.l.s4 839922192
        %v667 = vunpack.c.0.s8 %v666
        %v668 = vlaneseq
        %v669 = vshrl.u32 %v668, 7
        %v670 = vsub.s32 %v667, %v669
        %v671 = vrot.slane %v663, %v670
        %673 = vset.pattern.permute.xlu0 0
        %674 = vperm.xlu0 %673, %v361
        %v675 = vpop.permute.xlu0 %674
        %v678 = vunpack.c.l.s4 839922192
        %v679 = vunpack.c.0.s8 %v678
        %v680 = vlaneseq
        %v681 = vshrl.u32 %v680, 7
        %v682 = vsub.s32 %v679, %v681
        %v683 = vrot.slane %v675, %v682
        %685 = vset.pattern.permute.xlu0 0
        %686 = vperm.xlu0 %685, %v362
        %v687 = vpop.permute.xlu0 %686
        %v690 = vunpack.c.l.s4 839922192
        %v691 = vunpack.c.0.s8 %v690
        %v692 = vlaneseq
        %v693 = vshrl.u32 %v692, 7
        %v694 = vsub.s32 %v691, %v693
        %v695 = vrot.slane %v687, %v694
        %697 = vset.pattern.permute.xlu0 0
        %698 = vperm.xlu0 %697, %v363
        %v699 = vpop.permute.xlu0 %698
        %v702 = vunpack.c.l.s4 839922192
        %v703 = vunpack.c.0.s8 %v702
        %v704 = vlaneseq
        %v705 = vshrl.u32 %v704, 7
        %v706 = vsub.s32 %v703, %v705
        %v707 = vrot.slane %v699, %v706
        %709 = vset.pattern.permute.xlu0 0
        %710 = vperm.xlu0 %709, %v364
        %v711 = vpop.permute.xlu0 %710
        %v714 = vunpack.c.l.s4 839922192
        %v715 = vunpack.c.0.s8 %v714
        %v716 = vlaneseq
        %v717 = vshrl.u32 %v716, 7
        %v718 = vsub.s32 %v715, %v717
        %v719 = vrot.slane %v711, %v718
        %721 = vset.pattern.permute.xlu0 0
        %722 = vperm.xlu0 %721, %v365
        %v723 = vpop.permute.xlu0 %722
        %v726 = vunpack.c.l.s4 839922192
        %v727 = vunpack.c.0.s8 %v726
        %v728 = vlaneseq
        %v729 = vshrl.u32 %v728, 7
        %v730 = vsub.s32 %v727, %v729
        %v731 = vrot.slane %v723, %v730
        %733 = vset.pattern.permute.xlu0 0
        %734 = vperm.xlu0 %733, %v366
        %v735 = vpop.permute.xlu0 %734
        %v738 = vunpack.c.l.s4 839922192
        %v739 = vunpack.c.0.s8 %v738
        %v740 = vlaneseq
        %v741 = vshrl.u32 %v740, 7
        %v742 = vsub.s32 %v739, %v741
        %v743 = vrot.slane %v735, %v742
        %745 = vset.pattern.permute.xlu0 0
        %746 = vperm.xlu0 %745, %v367
        %v747 = vpop.permute.xlu0 %746
        %v750 = vunpack.c.l.s4 839922192
        %v751 = vunpack.c.0.s8 %v750
        %v752 = vlaneseq
        %v753 = vshrl.u32 %v752, 7
        %v754 = vsub.s32 %v751, %v753
        %v755 = vrot.slane %v747, %v754
        %757 = vset.pattern.permute.xlu0 0
        %758 = vperm.xlu0 %757, %v368
        %v759 = vpop.permute.xlu0 %758
        %v762 = vunpack.c.l.s4 839922192
        %v763 = vunpack.c.0.s8 %v762
        %v764 = vlaneseq
        %v765 = vshrl.u32 %v764, 7
        %v766 = vsub.s32 %v763, %v765
        %v767 = vrot.slane %v759, %v766
        %769 = vset.pattern.permute.xlu0 0
        %770 = vperm.xlu0 %769, %v369
        %v771 = vpop.permute.xlu0 %770
        %v774 = vunpack.c.l.s4 839922192
        %v775 = vunpack.c.0.s8 %v774
        %v776 = vlaneseq
        %v777 = vshrl.u32 %v776, 7
        %v778 = vsub.s32 %v775, %v777
        %v779 = vrot.slane %v771, %v778
        %781 = vset.pattern.permute.xlu0 0
        %782 = vperm.xlu0 %781, %v370
        %v783 = vpop.permute.xlu0 %782
        %v786 = vunpack.c.l.s4 839922192
        %v787 = vunpack.c.0.s8 %v786
        %v788 = vlaneseq
        %v789 = vshrl.u32 %v788, 7
        %v790 = vsub.s32 %v787, %v789
        %v791 = vrot.slane %v783, %v790
        %793 = vset.pattern.permute.xlu0 0
        %794 = vperm.xlu0 %793, %v371
        %v795 = vpop.permute.xlu0 %794
        %v798 = vunpack.c.l.s4 839922192
        %v799 = vunpack.c.0.s8 %v798
        %v800 = vlaneseq
        %v801 = vshrl.u32 %v800, 7
        %v802 = vsub.s32 %v799, %v801
        %v803 = vrot.slane %v795, %v802
        %v804 = vmul.bf16 %v299, %v383
        %v805 = vmul.bf16 %v300, %v395
        %v806 = vmul.bf16 %v301, %v407
        %v807 = vmul.bf16 %v302, %v419
        %v808 = vmul.bf16 %v303, %v431
        %v809 = vmul.bf16 %v304, %v443
        %v810 = vmul.bf16 %v305, %v455
        %v811 = vmul.bf16 %v306, %v467
        %v812 = vmul.bf16 %v307, %v479
        %v813 = vmul.bf16 %v308, %v491
        %v814 = vmul.bf16 %v309, %v503
        %v815 = vmul.bf16 %v310, %v515
        %v816 = vmul.bf16 %v311, %v527
        %v817 = vmul.bf16 %v312, %v539
        %v818 = vmul.bf16 %v313, %v551
        %v819 = vmul.bf16 %v314, %v563
        %v820 = vmul.bf16 %v315, %v575
        %v821 = vmul.bf16 %v316, %v587
        %v822 = vmul.bf16 %v317, %v599
        %v823 = vmul.bf16 %v318, %v611
        %v824 = vmul.bf16 %v319, %v623
        %v825 = vmul.bf16 %v320, %v635
        %v826 = vmul.bf16 %v321, %v647
        %v827 = vmul.bf16 %v322, %v659
        %v828 = vmul.bf16 %v323, %v671
        %v829 = vmul.bf16 %v324, %v683
        %v830 = vmul.bf16 %v325, %v695
        %v831 = vmul.bf16 %v326, %v707
        %v832 = vmul.bf16 %v327, %v719
        %v833 = vmul.bf16 %v328, %v731
        %v834 = vmul.bf16 %v329, %v743
        %v835 = vmul.bf16 %v330, %v755
        %v836 = vmul.bf16 %v331, %v767
        %v837 = vmul.bf16 %v332, %v779
        %v838 = vmul.bf16 %v333, %v791
        %v839 = vmul.bf16 %v334, %v803
        %v840 = vld [vmem:[%s2] sm:$0xf]
        %v841 = vld [vmem:[%s2 + $0x4] sm:$0xf]
        %v842 = vld [vmem:[%s2 + $0x8] sm:$0xf]
        %v843 = vld [vmem:[%s2 + $0xc] sm:$0xf]
        %v844 = vld [vmem:[%s2 + $0x10] sm:$0xf]
        %v845 = vld [vmem:[%s2 + $0x14] sm:$0xf]
        %v846 = vld [vmem:[%s2 + $0x18] sm:$0xf]
        %v847 = vld [vmem:[%s2 + $0x1c] sm:$0xf]
        %v848 = vld [vmem:[%s2 + $0x20] sm:$0xf]
        %v849 = vld [vmem:[%s2 + $0x24] sm:$0xf]
        %v850 = vld [vmem:[%s2 + $0x28] sm:$0xf]
        %v851 = vld [vmem:[%s2 + $0x2c] sm:$0xf]
        %v852 = vld [vmem:[%s2 + $0x30] sm:$0xf]
        %v853 = vld [vmem:[%s2 + $0x34] sm:$0xf]
        %v854 = vld [vmem:[%s2 + $0x38] sm:$0xf]
        %v855 = vld [vmem:[%s2 + $0x3c] sm:$0xf]
        %v856 = vld [vmem:[%s2 + $0x40] sm:$0xf]
        %v857 = vld [vmem:[%s2 + $0x44] sm:$0xf]
        %v858 = vld [vmem:[%s2 + $0x48] sm:$0xf]
        %v859 = vld [vmem:[%s2 + $0x4c] sm:$0xf]
        %v860 = vld [vmem:[%s2 + $0x50] sm:$0xf]
        %v861 = vld [vmem:[%s2 + $0x54] sm:$0xf]
        %v862 = vld [vmem:[%s2 + $0x58] sm:$0xf]
        %v863 = vld [vmem:[%s2 + $0x5c] sm:$0xf]
        %v864 = vld [vmem:[%s2 + $0x60] sm:$0xf]
        %v865 = vld [vmem:[%s2 + $0x64] sm:$0xf]
        %v866 = vld [vmem:[%s2 + $0x68] sm:$0xf]
        %v867 = vld [vmem:[%s2 + $0x6c] sm:$0xf]
        %v868 = vld [vmem:[%s2 + $0x70] sm:$0xf]
        %v869 = vld [vmem:[%s2 + $0x74] sm:$0xf]
        %v870 = vld [vmem:[%s2 + $0x78] sm:$0xf]
        %v871 = vld [vmem:[%s2 + $0x7c] sm:$0xf]
        %v872 = vld [vmem:[%s2 + $0x80] sm:$0xf]
        %v873 = vld [vmem:[%s2 + $0x84] sm:$0xf]
        %v874 = vld [vmem:[%s2 + $0x88] sm:$0xf]
        %v875 = vld [vmem:[%s2 + $0x8c] sm:$0xf]
        %v876 = vld [vmem:[%s2 + $0x90] sm:$0xf]
        %878 = vset.pattern.permute.xlu0 0
        %879 = vperm.xlu0 %878, %v840
        %v880 = vpop.permute.xlu0 %879
        %v883 = vunpack.c.l.s4 839922192
        %v884 = vunpack.c.0.s8 %v883
        %v885 = vlaneseq
        %v886 = vshrl.u32 %v885, 7
        %v887 = vsub.s32 %v884, %v886
        %v888 = vrot.slane %v880, %v887
        %890 = vset.pattern.permute.xlu0 0
        %891 = vperm.xlu0 %890, %v841
        %v892 = vpop.permute.xlu0 %891
        %v895 = vunpack.c.l.s4 839922192
        %v896 = vunpack.c.0.s8 %v895
        %v897 = vlaneseq
        %v898 = vshrl.u32 %v897, 7
        %v899 = vsub.s32 %v896, %v898
        %v900 = vrot.slane %v892, %v899
        %902 = vset.pattern.permute.xlu0 0
        %903 = vperm.xlu0 %902, %v842
        %v904 = vpop.permute.xlu0 %903
        %v907 = vunpack.c.l.s4 839922192
        %v908 = vunpack.c.0.s8 %v907
        %v909 = vlaneseq
        %v910 = vshrl.u32 %v909, 7
        %v911 = vsub.s32 %v908, %v910
        %v912 = vrot.slane %v904, %v911
        %914 = vset.pattern.permute.xlu0 0
        %915 = vperm.xlu0 %914, %v843
        %v916 = vpop.permute.xlu0 %915
        %v919 = vunpack.c.l.s4 839922192
        %v920 = vunpack.c.0.s8 %v919
        %v921 = vlaneseq
        %v922 = vshrl.u32 %v921, 7
        %v923 = vsub.s32 %v920, %v922
        %v924 = vrot.slane %v916, %v923
        %926 = vset.pattern.permute.xlu0 0
        %927 = vperm.xlu0 %926, %v844
        %v928 = vpop.permute.xlu0 %927
        %v931 = vunpack.c.l.s4 839922192
        %v932 = vunpack.c.0.s8 %v931
        %v933 = vlaneseq
        %v934 = vshrl.u32 %v933, 7
        %v935 = vsub.s32 %v932, %v934
        %v936 = vrot.slane %v928, %v935
        %938 = vset.pattern.permute.xlu0 0
        %939 = vperm.xlu0 %938, %v845
        %v940 = vpop.permute.xlu0 %939
        %v943 = vunpack.c.l.s4 839922192
        %v944 = vunpack.c.0.s8 %v943
        %v945 = vlaneseq
        %v946 = vshrl.u32 %v945, 7
        %v947 = vsub.s32 %v944, %v946
        %v948 = vrot.slane %v940, %v947
        %950 = vset.pattern.permute.xlu0 0
        %951 = vperm.xlu0 %950, %v846
        %v952 = vpop.permute.xlu0 %951
        %v955 = vunpack.c.l.s4 839922192
        %v956 = vunpack.c.0.s8 %v955
        %v957 = vlaneseq
        %v958 = vshrl.u32 %v957, 7
        %v959 = vsub.s32 %v956, %v958
        %v960 = vrot.slane %v952, %v959
        %962 = vset.pattern.permute.xlu0 0
        %963 = vperm.xlu0 %962, %v847
        %v964 = vpop.permute.xlu0 %963
        %v967 = vunpack.c.l.s4 839922192
        %v968 = vunpack.c.0.s8 %v967
        %v969 = vlaneseq
        %v970 = vshrl.u32 %v969, 7
        %v971 = vsub.s32 %v968, %v970
        %v972 = vrot.slane %v964, %v971
        %974 = vset.pattern.permute.xlu0 0
        %975 = vperm.xlu0 %974, %v848
        %v976 = vpop.permute.xlu0 %975
        %v979 = vunpack.c.l.s4 839922192
        %v980 = vunpack.c.0.s8 %v979
        %v981 = vlaneseq
        %v982 = vshrl.u32 %v981, 7
        %v983 = vsub.s32 %v980, %v982
        %v984 = vrot.slane %v976, %v983
        %986 = vset.pattern.permute.xlu0 0
        %987 = vperm.xlu0 %986, %v849
        %v988 = vpop.permute.xlu0 %987
        %v991 = vunpack.c.l.s4 839922192
        %v992 = vunpack.c.0.s8 %v991
        %v993 = vlaneseq
        %v994 = vshrl.u32 %v993, 7
        %v995 = vsub.s32 %v992, %v994
        %v996 = vrot.slane %v988, %v995
        %998 = vset.pattern.permute.xlu0 0
        %999 = vperm.xlu0 %998, %v850
        %v1000 = vpop.permute.xlu0 %999
        %v1003 = vunpack.c.l.s4 839922192
        %v1004 = vunpack.c.0.s8 %v1003
        %v1005 = vlaneseq
        %v1006 = vshrl.u32 %v1005, 7
        %v1007 = vsub.s32 %v1004, %v1006
        %v1008 = vrot.slane %v1000, %v1007
        %1010 = vset.pattern.permute.xlu0 0
        %1011 = vperm.xlu0 %1010, %v851
        %v1012 = vpop.permute.xlu0 %1011
        %v1015 = vunpack.c.l.s4 839922192
        %v1016 = vunpack.c.0.s8 %v1015
        %v1017 = vlaneseq
        %v1018 = vshrl.u32 %v1017, 7
        %v1019 = vsub.s32 %v1016, %v1018
        %v1020 = vrot.slane %v1012, %v1019
        %1022 = vset.pattern.permute.xlu0 0
        %1023 = vperm.xlu0 %1022, %v852
        %v1024 = vpop.permute.xlu0 %1023
        %v1027 = vunpack.c.l.s4 839922192
        %v1028 = vunpack.c.0.s8 %v1027
        %v1029 = vlaneseq
        %v1030 = vshrl.u32 %v1029, 7
        %v1031 = vsub.s32 %v1028, %v1030
        %v1032 = vrot.slane %v1024, %v1031
        %1034 = vset.pattern.permute.xlu0 0
        %1035 = vperm.xlu0 %1034, %v853
        %v1036 = vpop.permute.xlu0 %1035
        %v1039 = vunpack.c.l.s4 839922192
        %v1040 = vunpack.c.0.s8 %v1039
        %v1041 = vlaneseq
        %v1042 = vshrl.u32 %v1041, 7
        %v1043 = vsub.s32 %v1040, %v1042
        %v1044 = vrot.slane %v1036, %v1043
        %1046 = vset.pattern.permute.xlu0 0
        %1047 = vperm.xlu0 %1046, %v854
        %v1048 = vpop.permute.xlu0 %1047
        %v1051 = vunpack.c.l.s4 839922192
        %v1052 = vunpack.c.0.s8 %v1051
        %v1053 = vlaneseq
        %v1054 = vshrl.u32 %v1053, 7
        %v1055 = vsub.s32 %v1052, %v1054
        %v1056 = vrot.slane %v1048, %v1055
        %1058 = vset.pattern.permute.xlu0 0
        %1059 = vperm.xlu0 %1058, %v855
        %v1060 = vpop.permute.xlu0 %1059
        %v1063 = vunpack.c.l.s4 839922192
        %v1064 = vunpack.c.0.s8 %v1063
        %v1065 = vlaneseq
        %v1066 = vshrl.u32 %v1065, 7
        %v1067 = vsub.s32 %v1064, %v1066
        %v1068 = vrot.slane %v1060, %v1067
        %1070 = vset.pattern.permute.xlu0 0
        %1071 = vperm.xlu0 %1070, %v856
        %v1072 = vpop.permute.xlu0 %1071
        %v1075 = vunpack.c.l.s4 839922192
        %v1076 = vunpack.c.0.s8 %v1075
        %v1077 = vlaneseq
        %v1078 = vshrl.u32 %v1077, 7
        %v1079 = vsub.s32 %v1076, %v1078
        %v1080 = vrot.slane %v1072, %v1079
        %1082 = vset.pattern.permute.xlu0 0
        %1083 = vperm.xlu0 %1082, %v857
        %v1084 = vpop.permute.xlu0 %1083
        %v1087 = vunpack.c.l.s4 839922192
        %v1088 = vunpack.c.0.s8 %v1087
        %v1089 = vlaneseq
        %v1090 = vshrl.u32 %v1089, 7
        %v1091 = vsub.s32 %v1088, %v1090
        %v1092 = vrot.slane %v1084, %v1091
        %1094 = vset.pattern.permute.xlu0 0
        %1095 = vperm.xlu0 %1094, %v858
        %v1096 = vpop.permute.xlu0 %1095
        %v1099 = vunpack.c.l.s4 839922192
        %v1100 = vunpack.c.0.s8 %v1099
        %v1101 = vlaneseq
        %v1102 = vshrl.u32 %v1101, 7
        %v1103 = vsub.s32 %v1100, %v1102
        %v1104 = vrot.slane %v1096, %v1103
        %1106 = vset.pattern.permute.xlu0 0
        %1107 = vperm.xlu0 %1106, %v859
        %v1108 = vpop.permute.xlu0 %1107
        %v1111 = vunpack.c.l.s4 839922192
        %v1112 = vunpack.c.0.s8 %v1111
        %v1113 = vlaneseq
        %v1114 = vshrl.u32 %v1113, 7
        %v1115 = vsub.s32 %v1112, %v1114
        %v1116 = vrot.slane %v1108, %v1115
        %1118 = vset.pattern.permute.xlu0 0
        %1119 = vperm.xlu0 %1118, %v860
        %v1120 = vpop.permute.xlu0 %1119
        %v1123 = vunpack.c.l.s4 839922192
        %v1124 = vunpack.c.0.s8 %v1123
        %v1125 = vlaneseq
        %v1126 = vshrl.u32 %v1125, 7
        %v1127 = vsub.s32 %v1124, %v1126
        %v1128 = vrot.slane %v1120, %v1127
        %1130 = vset.pattern.permute.xlu0 0
        %1131 = vperm.xlu0 %1130, %v861
        %v1132 = vpop.permute.xlu0 %1131
        %v1135 = vunpack.c.l.s4 839922192
        %v1136 = vunpack.c.0.s8 %v1135
        %v1137 = vlaneseq
        %v1138 = vshrl.u32 %v1137, 7
        %v1139 = vsub.s32 %v1136, %v1138
        %v1140 = vrot.slane %v1132, %v1139
        %1142 = vset.pattern.permute.xlu0 0
        %1143 = vperm.xlu0 %1142, %v862
        %v1144 = vpop.permute.xlu0 %1143
        %v1147 = vunpack.c.l.s4 839922192
        %v1148 = vunpack.c.0.s8 %v1147
        %v1149 = vlaneseq
        %v1150 = vshrl.u32 %v1149, 7
        %v1151 = vsub.s32 %v1148, %v1150
        %v1152 = vrot.slane %v1144, %v1151
        %1154 = vset.pattern.permute.xlu0 0
        %1155 = vperm.xlu0 %1154, %v863
        %v1156 = vpop.permute.xlu0 %1155
        %v1159 = vunpack.c.l.s4 839922192
        %v1160 = vunpack.c.0.s8 %v1159
        %v1161 = vlaneseq
        %v1162 = vshrl.u32 %v1161, 7
        %v1163 = vsub.s32 %v1160, %v1162
        %v1164 = vrot.slane %v1156, %v1163
        %1166 = vset.pattern.permute.xlu0 0
        %1167 = vperm.xlu0 %1166, %v864
        %v1168 = vpop.permute.xlu0 %1167
        %v1171 = vunpack.c.l.s4 839922192
        %v1172 = vunpack.c.0.s8 %v1171
        %v1173 = vlaneseq
        %v1174 = vshrl.u32 %v1173, 7
        %v1175 = vsub.s32 %v1172, %v1174
        %v1176 = vrot.slane %v1168, %v1175
        %1178 = vset.pattern.permute.xlu0 0
        %1179 = vperm.xlu0 %1178, %v865
        %v1180 = vpop.permute.xlu0 %1179
        %v1183 = vunpack.c.l.s4 839922192
        %v1184 = vunpack.c.0.s8 %v1183
        %v1185 = vlaneseq
        %v1186 = vshrl.u32 %v1185, 7
        %v1187 = vsub.s32 %v1184, %v1186
        %v1188 = vrot.slane %v1180, %v1187
        %1190 = vset.pattern.permute.xlu0 0
        %1191 = vperm.xlu0 %1190, %v866
        %v1192 = vpop.permute.xlu0 %1191
        %v1195 = vunpack.c.l.s4 839922192
        %v1196 = vunpack.c.0.s8 %v1195
        %v1197 = vlaneseq
        %v1198 = vshrl.u32 %v1197, 7
        %v1199 = vsub.s32 %v1196, %v1198
        %v1200 = vrot.slane %v1192, %v1199
        %1202 = vset.pattern.permute.xlu0 0
        %1203 = vperm.xlu0 %1202, %v867
        %v1204 = vpop.permute.xlu0 %1203
        %v1207 = vunpack.c.l.s4 839922192
        %v1208 = vunpack.c.0.s8 %v1207
        %v1209 = vlaneseq
        %v1210 = vshrl.u32 %v1209, 7
        %v1211 = vsub.s32 %v1208, %v1210
        %v1212 = vrot.slane %v1204, %v1211
        %1214 = vset.pattern.permute.xlu0 0
        %1215 = vperm.xlu0 %1214, %v868
        %v1216 = vpop.permute.xlu0 %1215
        %v1219 = vunpack.c.l.s4 839922192
        %v1220 = vunpack.c.0.s8 %v1219
        %v1221 = vlaneseq
        %v1222 = vshrl.u32 %v1221, 7
        %v1223 = vsub.s32 %v1220, %v1222
        %v1224 = vrot.slane %v1216, %v1223
        %1226 = vset.pattern.permute.xlu0 0
        %1227 = vperm.xlu0 %1226, %v869
        %v1228 = vpop.permute.xlu0 %1227
        %v1231 = vunpack.c.l.s4 839922192
        %v1232 = vunpack.c.0.s8 %v1231
        %v1233 = vlaneseq
        %v1234 = vshrl.u32 %v1233, 7
        %v1235 = vsub.s32 %v1232, %v1234
        %v1236 = vrot.slane %v1228, %v1235
        %1238 = vset.pattern.permute.xlu0 0
        %1239 = vperm.xlu0 %1238, %v870
        %v1240 = vpop.permute.xlu0 %1239
        %v1243 = vunpack.c.l.s4 839922192
        %v1244 = vunpack.c.0.s8 %v1243
        %v1245 = vlaneseq
        %v1246 = vshrl.u32 %v1245, 7
        %v1247 = vsub.s32 %v1244, %v1246
        %v1248 = vrot.slane %v1240, %v1247
        %1250 = vset.pattern.permute.xlu0 0
        %1251 = vperm.xlu0 %1250, %v871
        %v1252 = vpop.permute.xlu0 %1251
        %v1255 = vunpack.c.l.s4 839922192
        %v1256 = vunpack.c.0.s8 %v1255
        %v1257 = vlaneseq
        %v1258 = vshrl.u32 %v1257, 7
        %v1259 = vsub.s32 %v1256, %v1258
        %v1260 = vrot.slane %v1252, %v1259
        %1262 = vset.pattern.permute.xlu0 0
        %1263 = vperm.xlu0 %1262, %v872
        %v1264 = vpop.permute.xlu0 %1263
        %v1267 = vunpack.c.l.s4 839922192
        %v1268 = vunpack.c.0.s8 %v1267
        %v1269 = vlaneseq
        %v1270 = vshrl.u32 %v1269, 7
        %v1271 = vsub.s32 %v1268, %v1270
        %v1272 = vrot.slane %v1264, %v1271
        %1274 = vset.pattern.permute.xlu0 0
        %1275 = vperm.xlu0 %1274, %v873
        %v1276 = vpop.permute.xlu0 %1275
        %v1279 = vunpack.c.l.s4 839922192
        %v1280 = vunpack.c.0.s8 %v1279
        %v1281 = vlaneseq
        %v1282 = vshrl.u32 %v1281, 7
        %v1283 = vsub.s32 %v1280, %v1282
        %v1284 = vrot.slane %v1276, %v1283
        %1286 = vset.pattern.permute.xlu0 0
        %1287 = vperm.xlu0 %1286, %v874
        %v1288 = vpop.permute.xlu0 %1287
        %v1291 = vunpack.c.l.s4 839922192
        %v1292 = vunpack.c.0.s8 %v1291
        %v1293 = vlaneseq
        %v1294 = vshrl.u32 %v1293, 7
        %v1295 = vsub.s32 %v1292, %v1294
        %v1296 = vrot.slane %v1288, %v1295
        %1298 = vset.pattern.permute.xlu0 0
        %1299 = vperm.xlu0 %1298, %v875
        %v1300 = vpop.permute.xlu0 %1299
        %v1303 = vunpack.c.l.s4 839922192
        %v1304 = vunpack.c.0.s8 %v1303
        %v1305 = vlaneseq
        %v1306 = vshrl.u32 %v1305, 7
        %v1307 = vsub.s32 %v1304, %v1306
        %v1308 = vrot.slane %v1300, %v1307
        %1310 = vset.pattern.permute.xlu0 0
        %1311 = vperm.xlu0 %1310, %v876
        %v1312 = vpop.permute.xlu0 %1311
        %v1315 = vunpack.c.l.s4 839922192
        %v1316 = vunpack.c.0.s8 %v1315
        %v1317 = vlaneseq
        %v1318 = vshrl.u32 %v1317, 7
        %v1319 = vsub.s32 %v1316, %v1318
        %v1320 = vrot.slane %v1312, %v1319
        %v1321 = vmul.bf16 %v299, %v888
        %v1322 = vmul.bf16 %v300, %v900
        %v1323 = vmul.bf16 %v301, %v912
        %v1324 = vmul.bf16 %v302, %v924
        %v1325 = vmul.bf16 %v303, %v936
        %v1326 = vmul.bf16 %v304, %v948
        %v1327 = vmul.bf16 %v305, %v960
        %v1328 = vmul.bf16 %v306, %v972
        %v1329 = vmul.bf16 %v307, %v984
        %v1330 = vmul.bf16 %v308, %v996
        %v1331 = vmul.bf16 %v309, %v1008
        %v1332 = vmul.bf16 %v310, %v1020
        %v1333 = vmul.bf16 %v311, %v1032
        %v1334 = vmul.bf16 %v312, %v1044
        %v1335 = vmul.bf16 %v313, %v1056
        %v1336 = vmul.bf16 %v314, %v1068
        %v1337 = vmul.bf16 %v315, %v1080
        %v1338 = vmul.bf16 %v316, %v1092
        %v1339 = vmul.bf16 %v317, %v1104
        %v1340 = vmul.bf16 %v318, %v1116
        %v1341 = vmul.bf16 %v319, %v1128
        %v1342 = vmul.bf16 %v320, %v1140
        %v1343 = vmul.bf16 %v321, %v1152
        %v1344 = vmul.bf16 %v322, %v1164
        %v1345 = vmul.bf16 %v323, %v1176
        %v1346 = vmul.bf16 %v324, %v1188
        %v1347 = vmul.bf16 %v325, %v1200
        %v1348 = vmul.bf16 %v326, %v1212
        %v1349 = vmul.bf16 %v327, %v1224
        %v1350 = vmul.bf16 %v328, %v1236
        %v1351 = vmul.bf16 %v329, %v1248
        %v1352 = vmul.bf16 %v330, %v1260
        %v1353 = vmul.bf16 %v331, %v1272
        %v1354 = vmul.bf16 %v332, %v1284
        %v1355 = vmul.bf16 %v333, %v1296
        %v1356 = vmul.bf16 %v334, %v1308
        %v1357 = vmul.bf16 %v335, %v1320
        %v1358 = vld [vmem:[%s3] sm:$0x3]
        %v1359 = vld [vmem:[%s4] sm:$0x1]
        %v1361 = vlaneseq
        %v1362 = vshrl.u32 %v1361, 7
        %v1363 = vsub.s32 0, %v1362
        %v1364 = vrot.slane %v1359, %v1363
        %v1398 = vunpack.c.l.b16 %v804
        %v1399 = vunpack.c.l.b16 %v805
        %v1400 = vunpack.c.l.b16 %v806
        %v1401 = vunpack.c.l.b16 %v807
        %v1402 = vunpack.c.l.b16 %v808
        %v1403 = vunpack.c.l.b16 %v809
        %v1404 = vunpack.c.l.b16 %v810
        %v1405 = vunpack.c.l.b16 %v811
        %v1406 = vunpack.c.l.b16 %v812
        %v1407 = vunpack.c.l.b16 %v813
        %v1408 = vunpack.c.l.b16 %v814
        %v1409 = vunpack.c.l.b16 %v815
        %v1410 = vunpack.c.l.b16 %v816
        %v1411 = vunpack.c.l.b16 %v817
        %v1412 = vunpack.c.l.b16 %v818
        %v1413 = vunpack.c.l.b16 %v819
        %v1414 = vunpack.c.l.b16 %v820
        %v1415 = vunpack.c.l.b16 %v821
        %v1416 = vunpack.c.l.b16 %v822
        %v1417 = vunpack.c.l.b16 %v823
        %v1418 = vunpack.c.l.b16 %v824
        %v1419 = vunpack.c.l.b16 %v825
        %v1420 = vunpack.c.l.b16 %v826
        %v1421 = vunpack.c.l.b16 %v827
        %v1422 = vunpack.c.l.b16 %v828
        %v1423 = vunpack.c.l.b16 %v829
        %v1424 = vunpack.c.l.b16 %v830
        %v1425 = vunpack.c.l.b16 %v831
        %v1426 = vunpack.c.l.b16 %v832
        %v1427 = vunpack.c.l.b16 %v833
        %v1428 = vunpack.c.l.b16 %v834
        %v1429 = vunpack.c.l.b16 %v835
        %v1430 = vpack.c.b16 %v1399, %v1398
        %v1431 = vpack.c.b16 %v1401, %v1400
        %v1432 = vpack.c.b16 %v1403, %v1402
        %v1433 = vpack.c.b16 %v1405, %v1404
        %v1434 = vpack.c.b16 %v1407, %v1406
        %v1435 = vpack.c.b16 %v1409, %v1408
        %v1436 = vpack.c.b16 %v1411, %v1410
        %v1437 = vpack.c.b16 %v1413, %v1412
        %v1438 = vpack.c.b16 %v1415, %v1414
        %v1439 = vpack.c.b16 %v1417, %v1416
        %v1440 = vpack.c.b16 %v1419, %v1418
        %v1441 = vpack.c.b16 %v1421, %v1420
        %v1442 = vpack.c.b16 %v1423, %v1422
        %v1443 = vpack.c.b16 %v1425, %v1424
        %v1444 = vpack.c.b16 %v1427, %v1426
        %v1445 = vpack.c.b16 %v1429, %v1428
        %vm1446 = vcmask 31744
        %v1448 = vsel %vm1446, %v1430, 0
        %v1451 = vsel %vm1446, %v1431, 0
        %v1454 = vsel %vm1446, %v1432, 0
        %v1457 = vsel %vm1446, %v1433, 0
        %v1460 = vsel %vm1446, %v1434, 0
        %v1463 = vsel %vm1446, %v1435, 0
        %v1466 = vsel %vm1446, %v1436, 0
        %v1469 = vsel %vm1446, %v1437, 0
        %v1472 = vsel %vm1446, %v1438, 0
        %v1475 = vsel %vm1446, %v1439, 0
        %v1478 = vsel %vm1446, %v1440, 0
        %v1481 = vsel %vm1446, %v1441, 0
        %v1484 = vsel %vm1446, %v1442, 0
        %v1487 = vsel %vm1446, %v1443, 0
        %v1490 = vsel %vm1446, %v1444, 0
        %v1493 = vsel %vm1446, %v1445, 0
        %vm1495 = vcmask 1041408
        %v1497 = vsel %vm1495, %v1358, 0
        %1499 = vmatprep.subr.bf16.mxu0 0
        %1500 = vmatpush1.bf16.msra.mxu0 %v1497
        %1501 = vmatprep.subr.bf16.mxu0 0
        %1502 = vmatpush1.bf16.msra.mxu0 0
        %1503 = vmatprep.subr.bf16.mxu0 0
        %1504 = vmatpush1.bf16.msra.mxu0 0
        %1505 = vmatprep.subr.bf16.mxu0 0
        %1506 = vmatpush1.bf16.msra.mxu0 0
        %1507 = vmatprep.subr.bf16.mxu0 0
        %1508 = vmatpush1.bf16.msra.mxu0 0
        %1509 = vmatprep.subr.bf16.mxu0 0
        %1510 = vmatpush1.bf16.msra.mxu0 0
        %1511 = vmatprep.subr.bf16.mxu0 0
        %1512 = vmatpush1.bf16.msra.mxu0 0
        %1513 = vmatprep.subr.bf16.mxu0 0
        %1514 = vmatpush1.bf16.msra.mxu0 0
        %1515 = vmatprep.subr.bf16.mxu0 0
        %1516 = vmatpush1.bf16.msra.mxu0 0
        %1517 = vmatprep.subr.bf16.mxu0 0
        %1518 = vmatpush1.bf16.msra.mxu0 0
        %1519 = vmatprep.subr.bf16.mxu0 0
        %1520 = vmatpush1.bf16.msra.mxu0 0
        %1521 = vmatprep.subr.bf16.mxu0 0
        %1522 = vmatpush1.bf16.msra.mxu0 0
        %1523 = vmatprep.subr.bf16.mxu0 0
        %1524 = vmatpush1.bf16.msra.mxu0 0
        %1525 = vmatprep.subr.bf16.mxu0 0
        %1526 = vmatpush1.bf16.msra.mxu0 0
        %1527 = vmatprep.subr.bf16.mxu0 0
        %1528 = vmatpush1.bf16.msra.mxu0 0
        %1529 = vmatprep.subr.bf16.mxu0 0
        %1530 = vmatpush1.bf16.msra.mxu0 0
        %1531 = vmatprep.mubr.bf16.mxu0 0
        %1532 = vmatmul.mubr.bf16.gmra.mrb[0].mxu0 %v1448
        %v1533 = vpop.f32.mrb[0].mxu0
        %v1534 = vadd.f32 %v1364, %v1533
        %v1535 = vpop.f32.mrb[0].mxu0
        %v1536 = vpop.f32.mrb[0].mxu0
        %v1537 = vadd.f32 %v1364, %v1536
        %v1538 = vpop.f32.mrb[0].mxu0
        %1539 = vmatprep.mubr.bf16.mxu0 0
        %1540 = vmatmul.mubr.bf16.gmra.mrb[0].mxu0 %v1451
        %v1541 = vpop.f32.mrb[0].mxu0
        %v1542 = vadd.f32 %v1364, %v1541
        %v1543 = vpop.f32.mrb[0].mxu0
        %v1544 = vpop.f32.mrb[0].mxu0
        %v1545 = vadd.f32 %v1364, %v1544
        %v1546 = vpop.f32.mrb[0].mxu0
        %1547 = vmatprep.mubr.bf16.mxu0 0
        %1548 = vmatmul.mubr.bf16.gmra.mrb[0].mxu0 %v1454
        %v1549 = vpop.f32.mrb[0].mxu0
        %v1550 = vadd.f32 %v1364, %v1549
        %v1551 = vpop.f32.mrb[0].mxu0
        %v1552 = vpop.f32.mrb[0].mxu0
        %v1553 = vadd.f32 %v1364, %v1552
        %v1554 = vpop.f32.mrb[0].mxu0
        %1555 = vmatprep.mubr.bf16.mxu0 0
        %1556 = vmatmul.mubr.bf16.gmra.mrb[0].mxu0 %v1457
        %v1557 = vpop.f32.mrb[0].mxu0
        %v1558 = vadd.f32 %v1364, %v1557
        %v1559 = vpop.f32.mrb[0].mxu0
        %v1560 = vpop.f32.mrb[0].mxu0
        %v1561 = vadd.f32 %v1364, %v1560
        %v1562 = vpop.f32.mrb[0].mxu0
        %1563 = vmatprep.mubr.bf16.mxu0 0
        %1564 = vmatmul.mubr.bf16.gmra.mrb[0].mxu0 %v1460
        %v1565 = vpop.f32.mrb[0].mxu0
        %v1566 = vadd.f32 %v1364, %v1565
        %v1567 = vpop.f32.mrb[0].mxu0
        %v1568 = vpop.f32.mrb[0].mxu0
        %v1569 = vadd.f32 %v1364, %v1568
        %v1570 = vpop.f32.mrb[0].mxu0
        %1571 = vmatprep.mubr.bf16.mxu0 0
        %1572 = vmatmul.mubr.bf16.gmra.mrb[0].mxu0 %v1463
        %v1573 = vpop.f32.mrb[0].mxu0
        %v1574 = vadd.f32 %v1364, %v1573
        %v1575 = vpop.f32.mrb[0].mxu0
        %v1576 = vpop.f32.mrb[0].mxu0
        %v1577 = vadd.f32 %v1364, %v1576
        %v1578 = vpop.f32.mrb[0].mxu0
        %1579 = vmatprep.mubr.bf16.mxu0 0
        %1580 = vmatmul.mubr.bf16.gmra.mrb[0].mxu0 %v1466
        %v1581 = vpop.f32.mrb[0].mxu0
        %v1582 = vadd.f32 %v1364, %v1581
        %v1583 = vpop.f32.mrb[0].mxu0
        %v1584 = vpop.f32.mrb[0].mxu0
        %v1585 = vadd.f32 %v1364, %v1584
        %v1586 = vpop.f32.mrb[0].mxu0
        %1587 = vmatprep.mubr.bf16.mxu0 0
        %1588 = vmatmul.mubr.bf16.gmra.mrb[0].mxu0 %v1469
        %v1589 = vpop.f32.mrb[0].mxu0
        %v1590 = vadd.f32 %v1364, %v1589
        %v1591 = vpop.f32.mrb[0].mxu0
        %v1592 = vpop.f32.mrb[0].mxu0
        %v1593 = vadd.f32 %v1364, %v1592
        %v1594 = vpop.f32.mrb[0].mxu0
        %1595 = vmatprep.mubr.bf16.mxu0 0
        %1596 = vmatmul.mubr.bf16.gmra.mrb[0].mxu0 %v1472
        %v1597 = vpop.f32.mrb[0].mxu0
        %v1598 = vadd.f32 %v1364, %v1597
        %v1599 = vpop.f32.mrb[0].mxu0
        %v1600 = vpop.f32.mrb[0].mxu0
        %v1601 = vadd.f32 %v1364, %v1600
        %v1602 = vpop.f32.mrb[0].mxu0
        %1603 = vmatprep.mubr.bf16.mxu0 0
        %1604 = vmatmul.mubr.bf16.gmra.mrb[0].mxu0 %v1475
        %v1605 = vpop.f32.mrb[0].mxu0
        %v1606 = vadd.f32 %v1364, %v1605
        %v1607 = vpop.f32.mrb[0].mxu0
        %v1608 = vpop.f32.mrb[0].mxu0
        %v1609 = vadd.f32 %v1364, %v1608
        %v1610 = vpop.f32.mrb[0].mxu0
        %1611 = vmatprep.mubr.bf16.mxu0 0
        %1612 = vmatmul.mubr.bf16.gmra.mrb[0].mxu0 %v1478
        %v1613 = vpop.f32.mrb[0].mxu0
        %v1614 = vadd.f32 %v1364, %v1613
        %v1615 = vpop.f32.mrb[0].mxu0
        %v1616 = vpop.f32.mrb[0].mxu0
        %v1617 = vadd.f32 %v1364, %v1616
        %v1618 = vpop.f32.mrb[0].mxu0
        %1619 = vmatprep.mubr.bf16.mxu0 0
        %1620 = vmatmul.mubr.bf16.gmra.mrb[0].mxu0 %v1481
        %v1621 = vpop.f32.mrb[0].mxu0
        %v1622 = vadd.f32 %v1364, %v1621
        %v1623 = vpop.f32.mrb[0].mxu0
        %v1624 = vpop.f32.mrb[0].mxu0
        %v1625 = vadd.f32 %v1364, %v1624
        %v1626 = vpop.f32.mrb[0].mxu0
        %1627 = vmatprep.mubr.bf16.mxu0 0
        %1628 = vmatmul.mubr.bf16.gmra.mrb[0].mxu0 %v1484
        %v1629 = vpop.f32.mrb[0].mxu0
        %v1630 = vadd.f32 %v1364, %v1629
        %v1631 = vpop.f32.mrb[0].mxu0
        %v1632 = vpop.f32.mrb[0].mxu0
        %v1633 = vadd.f32 %v1364, %v1632
        %v1634 = vpop.f32.mrb[0].mxu0
        %1635 = vmatprep.mubr.bf16.mxu0 0
        %1636 = vmatmul.mubr.bf16.gmra.mrb[0].mxu0 %v1487
        %v1637 = vpop.f32.mrb[0].mxu0
        %v1638 = vadd.f32 %v1364, %v1637
        %v1639 = vpop.f32.mrb[0].mxu0
        %v1640 = vpop.f32.mrb[0].mxu0
        %v1641 = vadd.f32 %v1364, %v1640
        %v1642 = vpop.f32.mrb[0].mxu0
        %1643 = vmatprep.mubr.bf16.mxu0 0
        %1644 = vmatmul.mubr.bf16.gmra.mrb[0].mxu0 %v1490
        %v1645 = vpop.f32.mrb[0].mxu0
        %v1646 = vadd.f32 %v1364, %v1645
        %v1647 = vpop.f32.mrb[0].mxu0
        %v1648 = vpop.f32.mrb[0].mxu0
        %v1649 = vadd.f32 %v1364, %v1648
        %v1650 = vpop.f32.mrb[0].mxu0
        %1651 = vmatprep.mubr.bf16.mxu0 0
        %1652 = vmatmul.mubr.bf16.gmra.mrb[0].mxu0 %v1493
        %v1653 = vpop.f32.mrb[0].mxu0
        %v1654 = vadd.f32 %v1364, %v1653
        %v1655 = vpop.f32.mrb[0].mxu0
        %v1656 = vpop.f32.mrb[0].mxu0
        %v1657 = vadd.f32 %v1364, %v1656
        %v1658 = vpop.f32.mrb[0].mxu0
        %1659 = vdwg.mxu0
        %vm1660 = vcmask 64512
        %1661 = vst.msk [vmem:[%s297] sm:$0xff] %vm1660, %v1534
        %1662 = vst.msk [vmem:[%s297 + $0x8] sm:$0xff] %vm1660, %v1537
        %1663 = vst.msk [vmem:[%s297 + $0x10] sm:$0xff] %vm1660, %v1542
        %1664 = vst.msk [vmem:[%s297 + $0x18] sm:$0xff] %vm1660, %v1545
        %1665 = vst.msk [vmem:[%s297 + $0x20] sm:$0xff] %vm1660, %v1550
        %1666 = vst.msk [vmem:[%s297 + $0x28] sm:$0xff] %vm1660, %v1553
        %1667 = vst.msk [vmem:[%s297 + $0x30] sm:$0xff] %vm1660, %v1558
        %1668 = vst.msk [vmem:[%s297 + $0x38] sm:$0xff] %vm1660, %v1561
        %1669 = vst.msk [vmem:[%s297 + $0x40] sm:$0xff] %vm1660, %v1566
        %1670 = vst.msk [vmem:[%s297 + $0x48] sm:$0xff] %vm1660, %v1569
        %1671 = vst.msk [vmem:[%s297 + $0x50] sm:$0xff] %vm1660, %v1574
        %1672 = vst.msk [vmem:[%s297 + $0x58] sm:$0xff] %vm1660, %v1577
        %1673 = vst.msk [vmem:[%s297 + $0x60] sm:$0xff] %vm1660, %v1582
        %1674 = vst.msk [vmem:[%s297 + $0x68] sm:$0xff] %vm1660, %v1585
        %1675 = vst.msk [vmem:[%s297 + $0x70] sm:$0xff] %vm1660, %v1590
        %1676 = vst.msk [vmem:[%s297 + $0x78] sm:$0xff] %vm1660, %v1593
        %1677 = vst.msk [vmem:[%s297 + $0x80] sm:$0xff] %vm1660, %v1598
        %1678 = vst.msk [vmem:[%s297 + $0x88] sm:$0xff] %vm1660, %v1601
        %1679 = vst.msk [vmem:[%s297 + $0x90] sm:$0xff] %vm1660, %v1606
        %1680 = vst.msk [vmem:[%s297 + $0x98] sm:$0xff] %vm1660, %v1609
        %1681 = vst.msk [vmem:[%s297 + $0xa0] sm:$0xff] %vm1660, %v1614
        %1682 = vst.msk [vmem:[%s297 + $0xa8] sm:$0xff] %vm1660, %v1617
        %1683 = vst.msk [vmem:[%s297 + $0xb0] sm:$0xff] %vm1660, %v1622
        %1684 = vst.msk [vmem:[%s297 + $0xb8] sm:$0xff] %vm1660, %v1625
        %1685 = vst.msk [vmem:[%s297 + $0xc0] sm:$0xff] %vm1660, %v1630
        %1686 = vst.msk [vmem:[%s297 + $0xc8] sm:$0xff] %vm1660, %v1633
        %1687 = vst.msk [vmem:[%s297 + $0xd0] sm:$0xff] %vm1660, %v1638
        %1688 = vst.msk [vmem:[%s297 + $0xd8] sm:$0xff] %vm1660, %v1641
        %1689 = vst.msk [vmem:[%s297 + $0xe0] sm:$0xff] %vm1660, %v1646
        %1690 = vst.msk [vmem:[%s297 + $0xe8] sm:$0xff] %vm1660, %v1649
        %1691 = vst.msk [vmem:[%s297 + $0xf0] sm:$0xff] %vm1660, %v1654
        %1692 = vst.msk [vmem:[%s297 + $0xf8] sm:$0xff] %vm1660, %v1657
        %s1693 = scalar_lea.vmem %s3, 2
        %v1694 = vld [vmem:[%s1693] sm:$0x3]
        %v1728 = vunpack.c.l.b16 %v299
        %v1729 = vunpack.c.l.b16 %v300
        %v1730 = vunpack.c.l.b16 %v301
        %v1731 = vunpack.c.l.b16 %v302
        %v1732 = vunpack.c.l.b16 %v303
        %v1733 = vunpack.c.l.b16 %v304
        %v1734 = vunpack.c.l.b16 %v305
        %v1735 = vunpack.c.l.b16 %v306
        %v1736 = vunpack.c.l.b16 %v307
        %v1737 = vunpack.c.l.b16 %v308
        %v1738 = vunpack.c.l.b16 %v309
        %v1739 = vunpack.c.l.b16 %v310
        %v1740 = vunpack.c.l.b16 %v311
        %v1741 = vunpack.c.l.b16 %v312
        %v1742 = vunpack.c.l.b16 %v313
        %v1743 = vunpack.c.l.b16 %v314
        %v1744 = vunpack.c.l.b16 %v315
        %v1745 = vunpack.c.l.b16 %v316
        %v1746 = vunpack.c.l.b16 %v317
        %v1747 = vunpack.c.l.b16 %v318
        %v1748 = vunpack.c.l.b16 %v319
        %v1749 = vunpack.c.l.b16 %v320
        %v1750 = vunpack.c.l.b16 %v321
        %v1751 = vunpack.c.l.b16 %v322
        %v1752 = vunpack.c.l.b16 %v323
        %v1753 = vunpack.c.l.b16 %v324
        %v1754 = vunpack.c.l.b16 %v325
        %v1755 = vunpack.c.l.b16 %v326
        %v1756 = vunpack.c.l.b16 %v327
        %v1757 = vunpack.c.l.b16 %v328
        %v1758 = vunpack.c.l.b16 %v329
        %v1759 = vunpack.c.l.b16 %v330
        %v1760 = vunpack.c.l.b16 %v331
        %v1761 = vpack.c.b16 %v1729, %v1728
        %v1762 = vpack.c.b16 %v1731, %v1730
        %v1763 = vpack.c.b16 %v1733, %v1732
        %v1764 = vpack.c.b16 %v1735, %v1734
        %v1765 = vpack.c.b16 %v1737, %v1736
        %v1766 = vpack.c.b16 %v1739, %v1738
        %v1767 = vpack.c.b16 %v1741, %v1740
        %v1768 = vpack.c.b16 %v1743, %v1742
        %v1769 = vpack.c.b16 %v1745, %v1744
        %v1770 = vpack.c.b16 %v1747, %v1746
        %v1771 = vpack.c.b16 %v1749, %v1748
        %v1772 = vpack.c.b16 %v1751, %v1750
        %v1773 = vpack.c.b16 %v1753, %v1752
        %v1774 = vpack.c.b16 %v1755, %v1754
        %v1775 = vpack.c.b16 %v1757, %v1756
        %v1776 = vpack.c.b16 %v1759, %v1758
        %v1777 = vpack.c.b16 %v1760, %v1760
        %vm1778 = vsmask.f32 7424
        %v1780 = vshrl.u32 %v1761, 16
        %v1782 = vshll.u32 %v1761, 16
        %v1784 = vrot.slane %v1782, 1
        %v1785 = vor.u32 %v1780, %v1784
        %v1787 = vshll.u32 %v1762, 16
        %v1789 = vrot.slane %v1787, 1
        %v1790 = vsel %vm1778, %v1785, %v1789
        %v1791 = vshrl.u32 %v1762, 16
        %v1793 = vor.u32 %v1791, %v1789
        %v1795 = vshll.u32 %v1763, 16
        %v1797 = vrot.slane %v1795, 1
        %v1798 = vsel %vm1778, %v1793, %v1797
        %v1799 = vshrl.u32 %v1763, 16
        %v1801 = vor.u32 %v1799, %v1797
        %v1803 = vshll.u32 %v1764, 16
        %v1805 = vrot.slane %v1803, 1
        %v1806 = vsel %vm1778, %v1801, %v1805
        %v1807 = vshrl.u32 %v1764, 16
        %v1809 = vor.u32 %v1807, %v1805
        %v1811 = vshll.u32 %v1765, 16
        %v1813 = vrot.slane %v1811, 1
        %v1814 = vsel %vm1778, %v1809, %v1813
        %v1815 = vshrl.u32 %v1765, 16
        %v1817 = vor.u32 %v1815, %v1813
        %v1819 = vshll.u32 %v1766, 16
        %v1821 = vrot.slane %v1819, 1
        %v1822 = vsel %vm1778, %v1817, %v1821
        %v1823 = vshrl.u32 %v1766, 16
        %v1825 = vor.u32 %v1823, %v1821
        %v1827 = vshll.u32 %v1767, 16
        %v1829 = vrot.slane %v1827, 1
        %v1830 = vsel %vm1778, %v1825, %v1829
        %v1831 = vshrl.u32 %v1767, 16
        %v1833 = vor.u32 %v1831, %v1829
        %v1835 = vshll.u32 %v1768, 16
        %v1837 = vrot.slane %v1835, 1
        %v1838 = vsel %vm1778, %v1833, %v1837
        %v1839 = vshrl.u32 %v1768, 16
        %v1841 = vor.u32 %v1839, %v1837
        %v1843 = vshll.u32 %v1769, 16
        %v1845 = vrot.slane %v1843, 1
        %v1846 = vsel %vm1778, %v1841, %v1845
        %v1847 = vshrl.u32 %v1769, 16
        %v1849 = vor.u32 %v1847, %v1845
        %v1851 = vshll.u32 %v1770, 16
        %v1853 = vrot.slane %v1851, 1
        %v1854 = vsel %vm1778, %v1849, %v1853
        %v1855 = vshrl.u32 %v1770, 16
        %v1857 = vor.u32 %v1855, %v1853
        %v1859 = vshll.u32 %v1771, 16
        %v1861 = vrot.slane %v1859, 1
        %v1862 = vsel %vm1778, %v1857, %v1861
        %v1863 = vshrl.u32 %v1771, 16
        %v1865 = vor.u32 %v1863, %v1861
        %v1867 = vshll.u32 %v1772, 16
        %v1869 = vrot.slane %v1867, 1
        %v1870 = vsel %vm1778, %v1865, %v1869
        %v1871 = vshrl.u32 %v1772, 16
        %v1873 = vor.u32 %v1871, %v1869
        %v1875 = vshll.u32 %v1773, 16
        %v1877 = vrot.slane %v1875, 1
        %v1878 = vsel %vm1778, %v1873, %v1877
        %v1879 = vshrl.u32 %v1773, 16
        %v1881 = vor.u32 %v1879, %v1877
        %v1883 = vshll.u32 %v1774, 16
        %v1885 = vrot.slane %v1883, 1
        %v1886 = vsel %vm1778, %v1881, %v1885
        %v1887 = vshrl.u32 %v1774, 16
        %v1889 = vor.u32 %v1887, %v1885
        %v1891 = vshll.u32 %v1775, 16
        %v1893 = vrot.slane %v1891, 1
        %v1894 = vsel %vm1778, %v1889, %v1893
        %v1895 = vshrl.u32 %v1775, 16
        %v1897 = vor.u32 %v1895, %v1893
        %v1899 = vshll.u32 %v1776, 16
        %v1901 = vrot.slane %v1899, 1
        %v1902 = vsel %vm1778, %v1897, %v1901
        %v1903 = vshrl.u32 %v1776, 16
        %v1905 = vor.u32 %v1903, %v1901
        %v1907 = vshll.u32 %v1777, 16
        %v1909 = vrot.slane %v1907, 1
        %v1910 = vsel %vm1778, %v1905, %v1909
        %v1912 = vsel %vm1446, %v1790, 0
        %v1915 = vsel %vm1446, %v1798, 0
        %v1918 = vsel %vm1446, %v1806, 0
        %v1921 = vsel %vm1446, %v1814, 0
        %v1924 = vsel %vm1446, %v1822, 0
        %v1927 = vsel %vm1446, %v1830, 0
        %v1930 = vsel %vm1446, %v1838, 0
        %v1933 = vsel %vm1446, %v1846, 0
        %v1936 = vsel %vm1446, %v1854, 0
        %v1939 = vsel %vm1446, %v1862, 0
        %v1942 = vsel %vm1446, %v1870, 0
        %v1945 = vsel %vm1446, %v1878, 0
        %v1948 = vsel %vm1446, %v1886, 0
        %v1951 = vsel %vm1446, %v1894, 0
        %v1954 = vsel %vm1446, %v1902, 0
        %v1957 = vsel %vm1446, %v1910, 0
        %v1960 = vsel %vm1495, %v1694, 0
        %1962 = vmatprep.subr.bf16.mxu0 0
        %1963 = vmatpush1.bf16.msra.mxu0 %v1960
        %1964 = vmatprep.subr.bf16.mxu0 0
        %1965 = vmatpush1.bf16.msra.mxu0 0
        %1966 = vmatprep.subr.bf16.mxu0 0
        %1967 = vmatpush1.bf16.msra.mxu0 0
        %1968 = vmatprep.subr.bf16.mxu0 0
        %1969 = vmatpush1.bf16.msra.mxu0 0
        %1970 = vmatprep.subr.bf16.mxu0 0
        %1971 = vmatpush1.bf16.msra.mxu0 0
        %1972 = vmatprep.subr.bf16.mxu0 0
        %1973 = vmatpush1.bf16.msra.mxu0 0
        %1974 = vmatprep.subr.bf16.mxu0 0
        %1975 = vmatpush1.bf16.msra.mxu0 0
        %1976 = vmatprep.subr.bf16.mxu0 0
        %1977 = vmatpush1.bf16.msra.mxu0 0
        %1978 = vmatprep.subr.bf16.mxu0 0
        %1979 = vmatpush1.bf16.msra.mxu0 0
        %1980 = vmatprep.subr.bf16.mxu0 0
        %1981 = vmatpush1.bf16.msra.mxu0 0
        %1982 = vmatprep.subr.bf16.mxu0 0
        %1983 = vmatpush1.bf16.msra.mxu0 0
        %1984 = vmatprep.subr.bf16.mxu0 0
        %1985 = vmatpush1.bf16.msra.mxu0 0
        %1986 = vmatprep.subr.bf16.mxu0 0
        %1987 = vmatpush1.bf16.msra.mxu0 0
        %1988 = vmatprep.subr.bf16.mxu0 0
        %1989 = vmatpush1.bf16.msra.mxu0 0
        %1990 = vmatprep.subr.bf16.mxu0 0
        %1991 = vmatpush1.bf16.msra.mxu0 0
        %1992 = vmatprep.subr.bf16.mxu0 0
        %1993 = vmatpush1.bf16.msra.mxu0 0
        %1994 = vmatprep.mubr.bf16.mxu0 0
        %1995 = vmatmul.mubr.bf16.gmra.mrb[0].mxu0 %v1912
        %v1996 = vpop.f32.mrb[0].mxu0
        %v1997 = vadd.f32 0.0, %v1996
        %v1998 = vpop.f32.mrb[0].mxu0
        %v1999 = vpop.f32.mrb[0].mxu0
        %v2000 = vadd.f32 0.0, %v1999
        %v2001 = vpop.f32.mrb[0].mxu0
        %2002 = vmatprep.mubr.bf16.mxu0 0
        %2003 = vmatmul.mubr.bf16.gmra.mrb[0].mxu0 %v1915
        %v2004 = vpop.f32.mrb[0].mxu0
        %v2005 = vadd.f32 0.0, %v2004
        %v2006 = vpop.f32.mrb[0].mxu0
        %v2007 = vpop.f32.mrb[0].mxu0
        %v2008 = vadd.f32 0.0, %v2007
        %v2009 = vpop.f32.mrb[0].mxu0
        %2010 = vmatprep.mubr.bf16.mxu0 0
        %2011 = vmatmul.mubr.bf16.gmra.mrb[0].mxu0 %v1918
        %v2012 = vpop.f32.mrb[0].mxu0
        %v2013 = vadd.f32 0.0, %v2012
        %v2014 = vpop.f32.mrb[0].mxu0
        %v2015 = vpop.f32.mrb[0].mxu0
        %v2016 = vadd.f32 0.0, %v2015
        %v2017 = vpop.f32.mrb[0].mxu0
        %2018 = vmatprep.mubr.bf16.mxu0 0
        %2019 = vmatmul.mubr.bf16.gmra.mrb[0].mxu0 %v1921
        %v2020 = vpop.f32.mrb[0].mxu0
        %v2021 = vadd.f32 0.0, %v2020
        %v2022 = vpop.f32.mrb[0].mxu0
        %v2023 = vpop.f32.mrb[0].mxu0
        %v2024 = vadd.f32 0.0, %v2023
        %v2025 = vpop.f32.mrb[0].mxu0
        %2026 = vmatprep.mubr.bf16.mxu0 0
        %2027 = vmatmul.mubr.bf16.gmra.mrb[0].mxu0 %v1924
        %v2028 = vpop.f32.mrb[0].mxu0
        %v2029 = vadd.f32 0.0, %v2028
        %v2030 = vpop.f32.mrb[0].mxu0
        %v2031 = vpop.f32.mrb[0].mxu0
        %v2032 = vadd.f32 0.0, %v2031
        %v2033 = vpop.f32.mrb[0].mxu0
        %2034 = vmatprep.mubr.bf16.mxu0 0
        %2035 = vmatmul.mubr.bf16.gmra.mrb[0].mxu0 %v1927
        %v2036 = vpop.f32.mrb[0].mxu0
        %v2037 = vadd.f32 0.0, %v2036
        %v2038 = vpop.f32.mrb[0].mxu0
        %v2039 = vpop.f32.mrb[0].mxu0
        %v2040 = vadd.f32 0.0, %v2039
        %v2041 = vpop.f32.mrb[0].mxu0
        %2042 = vmatprep.mubr.bf16.mxu0 0
        %2043 = vmatmul.mubr.bf16.gmra.mrb[0].mxu0 %v1930
        %v2044 = vpop.f32.mrb[0].mxu0
        %v2045 = vadd.f32 0.0, %v2044
        %v2046 = vpop.f32.mrb[0].mxu0
        %v2047 = vpop.f32.mrb[0].mxu0
        %v2048 = vadd.f32 0.0, %v2047
        %v2049 = vpop.f32.mrb[0].mxu0
        %2050 = vmatprep.mubr.bf16.mxu0 0
        %2051 = vmatmul.mubr.bf16.gmra.mrb[0].mxu0 %v1933
        %v2052 = vpop.f32.mrb[0].mxu0
        %v2053 = vadd.f32 0.0, %v2052
        %v2054 = vpop.f32.mrb[0].mxu0
        %v2055 = vpop.f32.mrb[0].mxu0
        %v2056 = vadd.f32 0.0, %v2055
        %v2057 = vpop.f32.mrb[0].mxu0
        %2058 = vmatprep.mubr.bf16.mxu0 0
        %2059 = vmatmul.mubr.bf16.gmra.mrb[0].mxu0 %v1936
        %v2060 = vpop.f32.mrb[0].mxu0
        %v2061 = vadd.f32 0.0, %v2060
        %v2062 = vpop.f32.mrb[0].mxu0
        %v2063 = vpop.f32.mrb[0].mxu0
        %v2064 = vadd.f32 0.0, %v2063
        %v2065 = vpop.f32.mrb[0].mxu0
        %2066 = vmatprep.mubr.bf16.mxu0 0
        %2067 = vmatmul.mubr.bf16.gmra.mrb[0].mxu0 %v1939
        %v2068 = vpop.f32.mrb[0].mxu0
        %v2069 = vadd.f32 0.0, %v2068
        %v2070 = vpop.f32.mrb[0].mxu0
        %v2071 = vpop.f32.mrb[0].mxu0
        %v2072 = vadd.f32 0.0, %v2071
        %v2073 = vpop.f32.mrb[0].mxu0
        %2074 = vmatprep.mubr.bf16.mxu0 0
        %2075 = vmatmul.mubr.bf16.gmra.mrb[0].mxu0 %v1942
        %v2076 = vpop.f32.mrb[0].mxu0
        %v2077 = vadd.f32 0.0, %v2076
        %v2078 = vpop.f32.mrb[0].mxu0
        %v2079 = vpop.f32.mrb[0].mxu0
        %v2080 = vadd.f32 0.0, %v2079
        %v2081 = vpop.f32.mrb[0].mxu0
        %2082 = vmatprep.mubr.bf16.mxu0 0
        %2083 = vmatmul.mubr.bf16.gmra.mrb[0].mxu0 %v1945
        %v2084 = vpop.f32.mrb[0].mxu0
        %v2085 = vadd.f32 0.0, %v2084
        %v2086 = vpop.f32.mrb[0].mxu0
        %v2087 = vpop.f32.mrb[0].mxu0
        %v2088 = vadd.f32 0.0, %v2087
        %v2089 = vpop.f32.mrb[0].mxu0
        %2090 = vmatprep.mubr.bf16.mxu0 0
        %2091 = vmatmul.mubr.bf16.gmra.mrb[0].mxu0 %v1948
        %v2092 = vpop.f32.mrb[0].mxu0
        %v2093 = vadd.f32 0.0, %v2092
        %v2094 = vpop.f32.mrb[0].mxu0
        %v2095 = vpop.f32.mrb[0].mxu0
        %v2096 = vadd.f32 0.0, %v2095
        %v2097 = vpop.f32.mrb[0].mxu0
        %2098 = vmatprep.mubr.bf16.mxu0 0
        %2099 = vmatmul.mubr.bf16.gmra.mrb[0].mxu0 %v1951
        %v2100 = vpop.f32.mrb[0].mxu0
        %v2101 = vadd.f32 0.0, %v2100
        %v2102 = vpop.f32.mrb[0].mxu0
        %v2103 = vpop.f32.mrb[0].mxu0
        %v2104 = vadd.f32 0.0, %v2103
        %v2105 = vpop.f32.mrb[0].mxu0
        %2106 = vmatprep.mubr.bf16.mxu0 0
        %2107 = vmatmul.mubr.bf16.gmra.mrb[0].mxu0 %v1954
        %v2108 = vpop.f32.mrb[0].mxu0
        %v2109 = vadd.f32 0.0, %v2108
        %v2110 = vpop.f32.mrb[0].mxu0
        %v2111 = vpop.f32.mrb[0].mxu0
        %v2112 = vadd.f32 0.0, %v2111
        %v2113 = vpop.f32.mrb[0].mxu0
        %2114 = vmatprep.mubr.bf16.mxu0 0
        %2115 = vmatmul.mubr.bf16.gmra.mrb[0].mxu0 %v1957
        %v2116 = vpop.f32.mrb[0].mxu0
        %v2117 = vadd.f32 0.0, %v2116
        %v2118 = vpop.f32.mrb[0].mxu0
        %v2119 = vpop.f32.mrb[0].mxu0
        %v2120 = vadd.f32 0.0, %v2119
        %v2121 = vpop.f32.mrb[0].mxu0
        %2122 = vdwg.mxu0
        %v2123 = vld [vmem:[%s297] sm:$0xff]
        %v2124 = vld [vmem:[%s297 + $0x8] sm:$0xff]
        %v2125 = vld [vmem:[%s297 + $0x10] sm:$0xff]
        %v2126 = vld [vmem:[%s297 + $0x18] sm:$0xff]
        %v2127 = vld [vmem:[%s297 + $0x20] sm:$0xff]
        %v2128 = vld [vmem:[%s297 + $0x28] sm:$0xff]
        %v2129 = vld [vmem:[%s297 + $0x30] sm:$0xff]
        %v2130 = vld [vmem:[%s297 + $0x38] sm:$0xff]
        %v2131 = vld [vmem:[%s297 + $0x40] sm:$0xff]
        %v2132 = vld [vmem:[%s297 + $0x48] sm:$0xff]
        %v2133 = vld [vmem:[%s297 + $0x50] sm:$0xff]
        %v2134 = vld [vmem:[%s297 + $0x58] sm:$0xff]
        %v2135 = vld [vmem:[%s297 + $0x60] sm:$0xff]
        %v2136 = vld [vmem:[%s297 + $0x68] sm:$0xff]
        %v2137 = vld [vmem:[%s297 + $0x70] sm:$0xff]
        %v2138 = vld [vmem:[%s297 + $0x78] sm:$0xff]
        %v2139 = vld [vmem:[%s297 + $0x80] sm:$0xff]
        %v2140 = vld [vmem:[%s297 + $0x88] sm:$0xff]
        %v2141 = vld [vmem:[%s297 + $0x90] sm:$0xff]
        %v2142 = vld [vmem:[%s297 + $0x98] sm:$0xff]
        %v2143 = vld [vmem:[%s297 + $0xa0] sm:$0xff]
        %v2144 = vld [vmem:[%s297 + $0xa8] sm:$0xff]
        %v2145 = vld [vmem:[%s297 + $0xb0] sm:$0xff]
        %v2146 = vld [vmem:[%s297 + $0xb8] sm:$0xff]
        %v2147 = vld [vmem:[%s297 + $0xc0] sm:$0xff]
        %v2148 = vld [vmem:[%s297 + $0xc8] sm:$0xff]
        %v2149 = vld [vmem:[%s297 + $0xd0] sm:$0xff]
        %v2150 = vld [vmem:[%s297 + $0xd8] sm:$0xff]
        %v2151 = vld [vmem:[%s297 + $0xe0] sm:$0xff]
        %v2152 = vld [vmem:[%s297 + $0xe8] sm:$0xff]
        %v2153 = vld [vmem:[%s297 + $0xf0] sm:$0xff]
        %v2154 = vld [vmem:[%s297 + $0xf8] sm:$0xff]
        %v2155 = vadd.f32 %v2123, %v1997
        %v2156 = vadd.f32 %v2124, %v2000
        %v2157 = vadd.f32 %v2125, %v2005
        %v2158 = vadd.f32 %v2126, %v2008
        %v2159 = vadd.f32 %v2127, %v2013
        %v2160 = vadd.f32 %v2128, %v2016
        %v2161 = vadd.f32 %v2129, %v2021
        %v2162 = vadd.f32 %v2130, %v2024
        %v2163 = vadd.f32 %v2131, %v2029
        %v2164 = vadd.f32 %v2132, %v2032
        %v2165 = vadd.f32 %v2133, %v2037
        %v2166 = vadd.f32 %v2134, %v2040
        %v2167 = vadd.f32 %v2135, %v2045
        %v2168 = vadd.f32 %v2136, %v2048
        %v2169 = vadd.f32 %v2137, %v2053
        %v2170 = vadd.f32 %v2138, %v2056
        %v2171 = vadd.f32 %v2139, %v2061
        %v2172 = vadd.f32 %v2140, %v2064
        %v2173 = vadd.f32 %v2141, %v2069
        %v2174 = vadd.f32 %v2142, %v2072
        %v2175 = vadd.f32 %v2143, %v2077
        %v2176 = vadd.f32 %v2144, %v2080
        %v2177 = vadd.f32 %v2145, %v2085
        %v2178 = vadd.f32 %v2146, %v2088
        %v2179 = vadd.f32 %v2147, %v2093
        %v2180 = vadd.f32 %v2148, %v2096
        %v2181 = vadd.f32 %v2149, %v2101
        %v2182 = vadd.f32 %v2150, %v2104
        %v2183 = vadd.f32 %v2151, %v2109
        %v2184 = vadd.f32 %v2152, %v2112
        %v2185 = vadd.f32 %v2153, %v2117
        %v2186 = vadd.f32 %v2154, %v2120
        %2187 = vst.msk [vmem:[%s297] sm:$0xff] %vm1660, %v2155
        %2188 = vst.msk [vmem:[%s297 + $0x8] sm:$0xff] %vm1660, %v2156
        %2189 = vst.msk [vmem:[%s297 + $0x10] sm:$0xff] %vm1660, %v2157
        %2190 = vst.msk [vmem:[%s297 + $0x18] sm:$0xff] %vm1660, %v2158
        %2191 = vst.msk [vmem:[%s297 + $0x20] sm:$0xff] %vm1660, %v2159
        %2192 = vst.msk [vmem:[%s297 + $0x28] sm:$0xff] %vm1660, %v2160
        %2193 = vst.msk [vmem:[%s297 + $0x30] sm:$0xff] %vm1660, %v2161
        %2194 = vst.msk [vmem:[%s297 + $0x38] sm:$0xff] %vm1660, %v2162
        %2195 = vst.msk [vmem:[%s297 + $0x40] sm:$0xff] %vm1660, %v2163
        %2196 = vst.msk [vmem:[%s297 + $0x48] sm:$0xff] %vm1660, %v2164
        %2197 = vst.msk [vmem:[%s297 + $0x50] sm:$0xff] %vm1660, %v2165
        %2198 = vst.msk [vmem:[%s297 + $0x58] sm:$0xff] %vm1660, %v2166
        %2199 = vst.msk [vmem:[%s297 + $0x60] sm:$0xff] %vm1660, %v2167
        %2200 = vst.msk [vmem:[%s297 + $0x68] sm:$0xff] %vm1660, %v2168
        %2201 = vst.msk [vmem:[%s297 + $0x70] sm:$0xff] %vm1660, %v2169
        %2202 = vst.msk [vmem:[%s297 + $0x78] sm:$0xff] %vm1660, %v2170
        %2203 = vst.msk [vmem:[%s297 + $0x80] sm:$0xff] %vm1660, %v2171
        %2204 = vst.msk [vmem:[%s297 + $0x88] sm:$0xff] %vm1660, %v2172
        %2205 = vst.msk [vmem:[%s297 + $0x90] sm:$0xff] %vm1660, %v2173
        %2206 = vst.msk [vmem:[%s297 + $0x98] sm:$0xff] %vm1660, %v2174
        %2207 = vst.msk [vmem:[%s297 + $0xa0] sm:$0xff] %vm1660, %v2175
        %2208 = vst.msk [vmem:[%s297 + $0xa8] sm:$0xff] %vm1660, %v2176
        %2209 = vst.msk [vmem:[%s297 + $0xb0] sm:$0xff] %vm1660, %v2177
        %2210 = vst.msk [vmem:[%s297 + $0xb8] sm:$0xff] %vm1660, %v2178
        %2211 = vst.msk [vmem:[%s297 + $0xc0] sm:$0xff] %vm1660, %v2179
        %2212 = vst.msk [vmem:[%s297 + $0xc8] sm:$0xff] %vm1660, %v2180
        %2213 = vst.msk [vmem:[%s297 + $0xd0] sm:$0xff] %vm1660, %v2181
        %2214 = vst.msk [vmem:[%s297 + $0xd8] sm:$0xff] %vm1660, %v2182
        %2215 = vst.msk [vmem:[%s297 + $0xe0] sm:$0xff] %vm1660, %v2183
        %2216 = vst.msk [vmem:[%s297 + $0xe8] sm:$0xff] %vm1660, %v2184
        %2217 = vst.msk [vmem:[%s297 + $0xf0] sm:$0xff] %vm1660, %v2185
        %2218 = vst.msk [vmem:[%s297 + $0xf8] sm:$0xff] %vm1660, %v2186
        %s2219 = scalar_lea.vmem %s3, 4
        %v2220 = vld [vmem:[%s2219] sm:$0x3]
        %v2254 = vunpack.c.l.b16 %v1321
        %v2255 = vunpack.c.l.b16 %v1322
        %v2256 = vunpack.c.l.b16 %v1323
        %v2257 = vunpack.c.l.b16 %v1324
        %v2258 = vunpack.c.l.b16 %v1325
        %v2259 = vunpack.c.l.b16 %v1326
        %v2260 = vunpack.c.l.b16 %v1327
        %v2261 = vunpack.c.l.b16 %v1328
        %v2262 = vunpack.c.l.b16 %v1329
        %v2263 = vunpack.c.l.b16 %v1330
        %v2264 = vunpack.c.l.b16 %v1331
        %v2265 = vunpack.c.l.b16 %v1332
        %v2266 = vunpack.c.l.b16 %v1333
        %v2267 = vunpack.c.l.b16 %v1334
        %v2268 = vunpack.c.l.b16 %v1335
        %v2269 = vunpack.c.l.b16 %v1336
        %v2270 = vunpack.c.l.b16 %v1337
        %v2271 = vunpack.c.l.b16 %v1338
        %v2272 = vunpack.c.l.b16 %v1339
        %v2273 = vunpack.c.l.b16 %v1340
        %v2274 = vunpack.c.l.b16 %v1341
        %v2275 = vunpack.c.l.b16 %v1342
        %v2276 = vunpack.c.l.b16 %v1343
        %v2277 = vunpack.c.l.b16 %v1344
        %v2278 = vunpack.c.l.b16 %v1345
        %v2279 = vunpack.c.l.b16 %v1346
        %v2280 = vunpack.c.l.b16 %v1347
        %v2281 = vunpack.c.l.b16 %v1348
        %v2282 = vunpack.c.l.b16 %v1349
        %v2283 = vunpack.c.l.b16 %v1350
        %v2284 = vunpack.c.l.b16 %v1351
        %v2285 = vunpack.c.l.b16 %v1352
        %v2286 = vunpack.c.l.b16 %v1353
        %v2287 = vpack.c.b16 %v2255, %v2254
        %v2288 = vpack.c.b16 %v2257, %v2256
        %v2289 = vpack.c.b16 %v2259, %v2258
        %v2290 = vpack.c.b16 %v2261, %v2260
        %v2291 = vpack.c.b16 %v2263, %v2262
        %v2292 = vpack.c.b16 %v2265, %v2264
        %v2293 = vpack.c.b16 %v2267, %v2266
        %v2294 = vpack.c.b16 %v2269, %v2268
        %v2295 = vpack.c.b16 %v2271, %v2270
        %v2296 = vpack.c.b16 %v2273, %v2272
        %v2297 = vpack.c.b16 %v2275, %v2274
        %v2298 = vpack.c.b16 %v2277, %v2276
        %v2299 = vpack.c.b16 %v2279, %v2278
        %v2300 = vpack.c.b16 %v2281, %v2280
        %v2301 = vpack.c.b16 %v2283, %v2282
        %v2302 = vpack.c.b16 %v2285, %v2284
        %v2303 = vpack.c.b16 %v2286, %v2286
        %vm2304 = vcmask 1046528
        %v2305 = vrot.slane %v2287, 1
        %v2306 = vrot.slane %v2288, 1
        %v2307 = vsel %vm2304, %v2305, %v2306
        %v2308 = vrot.slane %v2289, 1
        %v2309 = vsel %vm2304, %v2306, %v2308
        %v2310 = vrot.slane %v2290, 1
        %v2311 = vsel %vm2304, %v2308, %v2310
        %v2312 = vrot.slane %v2291, 1
        %v2313 = vsel %vm2304, %v2310, %v2312
        %v2314 = vrot.slane %v2292, 1
        %v2315 = vsel %vm2304, %v2312, %v2314
        %v2316 = vrot.slane %v2293, 1
        %v2317 = vsel %vm2304, %v2314, %v2316
        %v2318 = vrot.slane %v2294, 1
        %v2319 = vsel %vm2304, %v2316, %v2318
        %v2320 = vrot.slane %v2295, 1
        %v2321 = vsel %vm2304, %v2318, %v2320
        %v2322 = vrot.slane %v2296, 1
        %v2323 = vsel %vm2304, %v2320, %v2322
        %v2324 = vrot.slane %v2297, 1
        %v2325 = vsel %vm2304, %v2322, %v2324
        %v2326 = vrot.slane %v2298, 1
        %v2327 = vsel %vm2304, %v2324, %v2326
        %v2328 = vrot.slane %v2299, 1
        %v2329 = vsel %vm2304, %v2326, %v2328
        %v2330 = vrot.slane %v2300, 1
        %v2331 = vsel %vm2304, %v2328, %v2330
        %v2332 = vrot.slane %v2301, 1
        %v2333 = vsel %vm2304, %v2330, %v2332
        %v2334 = vrot.slane %v2302, 1
        %v2335 = vsel %vm2304, %v2332, %v2334
        %v2336 = vrot.slane %v2303, 1
        %v2337 = vsel %vm2304, %v2334, %v2336
        %v2339 = vsel %vm1446, %v2307, 0
        %v2342 = vsel %vm1446, %v2309, 0
        %v2345 = vsel %vm1446, %v2311, 0
        %v2348 = vsel %vm1446, %v2313, 0
        %v2351 = vsel %vm1446, %v2315, 0
        %v2354 = vsel %vm1446, %v2317, 0
        %v2357 = vsel %vm1446, %v2319, 0
        %v2360 = vsel %vm1446, %v2321, 0
        %v2363 = vsel %vm1446, %v2323, 0
        %v2366 = vsel %vm1446, %v2325, 0
        %v2369 = vsel %vm1446, %v2327, 0
        %v2372 = vsel %vm1446, %v2329, 0
        %v2375 = vsel %vm1446, %v2331, 0
        %v2378 = vsel %vm1446, %v2333, 0
        %v2381 = vsel %vm1446, %v2335, 0
        %v2384 = vsel %vm1446, %v2337, 0
        %v2387 = vsel %vm1495, %v2220, 0
        %2389 = vmatprep.subr.bf16.mxu0 0
        %2390 = vmatpush1.bf16.msra.mxu0 %v2387
        %2391 = vmatprep.subr.bf16.mxu0 0
        %2392 = vmatpush1.bf16.msra.mxu0 0
        %2393 = vmatprep.subr.bf16.mxu0 0
        %2394 = vmatpush1.bf16.msra.mxu0 0
        %2395 = vmatprep.subr.bf16.mxu0 0
        %2396 = vmatpush1.bf16.msra.mxu0 0
        %2397 = vmatprep.subr.bf16.mxu0 0
        %2398 = vmatpush1.bf16.msra.mxu0 0
        %2399 = vmatprep.subr.bf16.mxu0 0
        %2400 = vmatpush1.bf16.msra.mxu0 0
        %2401 = vmatprep.subr.bf16.mxu0 0
        %2402 = vmatpush1.bf16.msra.mxu0 0
        %2403 = vmatprep.subr.bf16.mxu0 0
        %2404 = vmatpush1.bf16.msra.mxu0 0
        %2405 = vmatprep.subr.bf16.mxu0 0
        %2406 = vmatpush1.bf16.msra.mxu0 0
        %2407 = vmatprep.subr.bf16.mxu0 0
        %2408 = vmatpush1.bf16.msra.mxu0 0
        %2409 = vmatprep.subr.bf16.mxu0 0
        %2410 = vmatpush1.bf16.msra.mxu0 0
        %2411 = vmatprep.subr.bf16.mxu0 0
        %2412 = vmatpush1.bf16.msra.mxu0 0
        %2413 = vmatprep.subr.bf16.mxu0 0
        %2414 = vmatpush1.bf16.msra.mxu0 0
        %2415 = vmatprep.subr.bf16.mxu0 0
        %2416 = vmatpush1.bf16.msra.mxu0 0
        %2417 = vmatprep.subr.bf16.mxu0 0
        %2418 = vmatpush1.bf16.msra.mxu0 0
        %2419 = vmatprep.subr.bf16.mxu0 0
        %2420 = vmatpush1.bf16.msra.mxu0 0
        %2421 = vmatprep.mubr.bf16.mxu0 0
        %2422 = vmatmul.mubr.bf16.gmra.mrb[0].mxu0 %v2339
        %v2423 = vpop.f32.mrb[0].mxu0
        %v2424 = vadd.f32 0.0, %v2423
        %v2425 = vpop.f32.mrb[0].mxu0
        %v2426 = vpop.f32.mrb[0].mxu0
        %v2427 = vadd.f32 0.0, %v2426
        %v2428 = vpop.f32.mrb[0].mxu0
        %2429 = vmatprep.mubr.bf16.mxu0 0
        %2430 = vmatmul.mubr.bf16.gmra.mrb[0].mxu0 %v2342
        %v2431 = vpop.f32.mrb[0].mxu0
        %v2432 = vadd.f32 0.0, %v2431
        %v2433 = vpop.f32.mrb[0].mxu0
        %v2434 = vpop.f32.mrb[0].mxu0
        %v2435 = vadd.f32 0.0, %v2434
        %v2436 = vpop.f32.mrb[0].mxu0
        %2437 = vmatprep.mubr.bf16.mxu0 0
        %2438 = vmatmul.mubr.bf16.gmra.mrb[0].mxu0 %v2345
        %v2439 = vpop.f32.mrb[0].mxu0
        %v2440 = vadd.f32 0.0, %v2439
        %v2441 = vpop.f32.mrb[0].mxu0
        %v2442 = vpop.f32.mrb[0].mxu0
        %v2443 = vadd.f32 0.0, %v2442
        %v2444 = vpop.f32.mrb[0].mxu0
        %2445 = vmatprep.mubr.bf16.mxu0 0
        %2446 = vmatmul.mubr.bf16.gmra.mrb[0].mxu0 %v2348
        %v2447 = vpop.f32.mrb[0].mxu0
        %v2448 = vadd.f32 0.0, %v2447
        %v2449 = vpop.f32.mrb[0].mxu0
        %v2450 = vpop.f32.mrb[0].mxu0
        %v2451 = vadd.f32 0.0, %v2450
        %v2452 = vpop.f32.mrb[0].mxu0
        %2453 = vmatprep.mubr.bf16.mxu0 0
        %2454 = vmatmul.mubr.bf16.gmra.mrb[0].mxu0 %v2351
        %v2455 = vpop.f32.mrb[0].mxu0
        %v2456 = vadd.f32 0.0, %v2455
        %v2457 = vpop.f32.mrb[0].mxu0
        %v2458 = vpop.f32.mrb[0].mxu0
        %v2459 = vadd.f32 0.0, %v2458
        %v2460 = vpop.f32.mrb[0].mxu0
        %2461 = vmatprep.mubr.bf16.mxu0 0
        %2462 = vmatmul.mubr.bf16.gmra.mrb[0].mxu0 %v2354
        %v2463 = vpop.f32.mrb[0].mxu0
        %v2464 = vadd.f32 0.0, %v2463
        %v2465 = vpop.f32.mrb[0].mxu0
        %v2466 = vpop.f32.mrb[0].mxu0
        %v2467 = vadd.f32 0.0, %v2466
        %v2468 = vpop.f32.mrb[0].mxu0
        %2469 = vmatprep.mubr.bf16.mxu0 0
        %2470 = vmatmul.mubr.bf16.gmra.mrb[0].mxu0 %v2357
        %v2471 = vpop.f32.mrb[0].mxu0
        %v2472 = vadd.f32 0.0, %v2471
        %v2473 = vpop.f32.mrb[0].mxu0
        %v2474 = vpop.f32.mrb[0].mxu0
        %v2475 = vadd.f32 0.0, %v2474
        %v2476 = vpop.f32.mrb[0].mxu0
        %2477 = vmatprep.mubr.bf16.mxu0 0
        %2478 = vmatmul.mubr.bf16.gmra.mrb[0].mxu0 %v2360
        %v2479 = vpop.f32.mrb[0].mxu0
        %v2480 = vadd.f32 0.0, %v2479
        %v2481 = vpop.f32.mrb[0].mxu0
        %v2482 = vpop.f32.mrb[0].mxu0
        %v2483 = vadd.f32 0.0, %v2482
        %v2484 = vpop.f32.mrb[0].mxu0
        %2485 = vmatprep.mubr.bf16.mxu0 0
        %2486 = vmatmul.mubr.bf16.gmra.mrb[0].mxu0 %v2363
        %v2487 = vpop.f32.mrb[0].mxu0
        %v2488 = vadd.f32 0.0, %v2487
        %v2489 = vpop.f32.mrb[0].mxu0
        %v2490 = vpop.f32.mrb[0].mxu0
        %v2491 = vadd.f32 0.0, %v2490
        %v2492 = vpop.f32.mrb[0].mxu0
        %2493 = vmatprep.mubr.bf16.mxu0 0
        %2494 = vmatmul.mubr.bf16.gmra.mrb[0].mxu0 %v2366
        %v2495 = vpop.f32.mrb[0].mxu0
        %v2496 = vadd.f32 0.0, %v2495
        %v2497 = vpop.f32.mrb[0].mxu0
        %v2498 = vpop.f32.mrb[0].mxu0
        %v2499 = vadd.f32 0.0, %v2498
        %v2500 = vpop.f32.mrb[0].mxu0
        %2501 = vmatprep.mubr.bf16.mxu0 0
        %2502 = vmatmul.mubr.bf16.gmra.mrb[0].mxu0 %v2369
        %v2503 = vpop.f32.mrb[0].mxu0
        %v2504 = vadd.f32 0.0, %v2503
        %v2505 = vpop.f32.mrb[0].mxu0
        %v2506 = vpop.f32.mrb[0].mxu0
        %v2507 = vadd.f32 0.0, %v2506
        %v2508 = vpop.f32.mrb[0].mxu0
        %2509 = vmatprep.mubr.bf16.mxu0 0
        %2510 = vmatmul.mubr.bf16.gmra.mrb[0].mxu0 %v2372
        %v2511 = vpop.f32.mrb[0].mxu0
        %v2512 = vadd.f32 0.0, %v2511
        %v2513 = vpop.f32.mrb[0].mxu0
        %v2514 = vpop.f32.mrb[0].mxu0
        %v2515 = vadd.f32 0.0, %v2514
        %v2516 = vpop.f32.mrb[0].mxu0
        %2517 = vmatprep.mubr.bf16.mxu0 0
        %2518 = vmatmul.mubr.bf16.gmra.mrb[0].mxu0 %v2375
        %v2519 = vpop.f32.mrb[0].mxu0
        %v2520 = vadd.f32 0.0, %v2519
        %v2521 = vpop.f32.mrb[0].mxu0
        %v2522 = vpop.f32.mrb[0].mxu0
        %v2523 = vadd.f32 0.0, %v2522
        %v2524 = vpop.f32.mrb[0].mxu0
        %2525 = vmatprep.mubr.bf16.mxu0 0
        %2526 = vmatmul.mubr.bf16.gmra.mrb[0].mxu0 %v2378
        %v2527 = vpop.f32.mrb[0].mxu0
        %v2528 = vadd.f32 0.0, %v2527
        %v2529 = vpop.f32.mrb[0].mxu0
        %v2530 = vpop.f32.mrb[0].mxu0
        %v2531 = vadd.f32 0.0, %v2530
        %v2532 = vpop.f32.mrb[0].mxu0
        %2533 = vmatprep.mubr.bf16.mxu0 0
        %2534 = vmatmul.mubr.bf16.gmra.mrb[0].mxu0 %v2381
        %v2535 = vpop.f32.mrb[0].mxu0
        %v2536 = vadd.f32 0.0, %v2535
        %v2537 = vpop.f32.mrb[0].mxu0
        %v2538 = vpop.f32.mrb[0].mxu0
        %v2539 = vadd.f32 0.0, %v2538
        %v2540 = vpop.f32.mrb[0].mxu0
        %2541 = vmatprep.mubr.bf16.mxu0 0
        %2542 = vmatmul.mubr.bf16.gmra.mrb[0].mxu0 %v2384
        %v2543 = vpop.f32.mrb[0].mxu0
        %v2544 = vadd.f32 0.0, %v2543
        %v2545 = vpop.f32.mrb[0].mxu0
        %v2546 = vpop.f32.mrb[0].mxu0
        %v2547 = vadd.f32 0.0, %v2546
        %v2548 = vpop.f32.mrb[0].mxu0
        %2549 = vdwg.mxu0
        %v2550 = vld [vmem:[%s297] sm:$0xff]
        %v2551 = vld [vmem:[%s297 + $0x8] sm:$0xff]
        %v2552 = vld [vmem:[%s297 + $0x10] sm:$0xff]
        %v2553 = vld [vmem:[%s297 + $0x18] sm:$0xff]
        %v2554 = vld [vmem:[%s297 + $0x20] sm:$0xff]
        %v2555 = vld [vmem:[%s297 + $0x28] sm:$0xff]
        %v2556 = vld [vmem:[%s297 + $0x30] sm:$0xff]
        %v2557 = vld [vmem:[%s297 + $0x38] sm:$0xff]
        %v2558 = vld [vmem:[%s297 + $0x40] sm:$0xff]
        %v2559 = vld [vmem:[%s297 + $0x48] sm:$0xff]
        %v2560 = vld [vmem:[%s297 + $0x50] sm:$0xff]
        %v2561 = vld [vmem:[%s297 + $0x58] sm:$0xff]
        %v2562 = vld [vmem:[%s297 + $0x60] sm:$0xff]
        %v2563 = vld [vmem:[%s297 + $0x68] sm:$0xff]
        %v2564 = vld [vmem:[%s297 + $0x70] sm:$0xff]
        %v2565 = vld [vmem:[%s297 + $0x78] sm:$0xff]
        %v2566 = vld [vmem:[%s297 + $0x80] sm:$0xff]
        %v2567 = vld [vmem:[%s297 + $0x88] sm:$0xff]
        %v2568 = vld [vmem:[%s297 + $0x90] sm:$0xff]
        %v2569 = vld [vmem:[%s297 + $0x98] sm:$0xff]
        %v2570 = vld [vmem:[%s297 + $0xa0] sm:$0xff]
        %v2571 = vld [vmem:[%s297 + $0xa8] sm:$0xff]
        %v2572 = vld [vmem:[%s297 + $0xb0] sm:$0xff]
        %v2573 = vld [vmem:[%s297 + $0xb8] sm:$0xff]
        %v2574 = vld [vmem:[%s297 + $0xc0] sm:$0xff]
        %v2575 = vld [vmem:[%s297 + $0xc8] sm:$0xff]
        %v2576 = vld [vmem:[%s297 + $0xd0] sm:$0xff]
        %v2577 = vld [vmem:[%s297 + $0xd8] sm:$0xff]
        %v2578 = vld [vmem:[%s297 + $0xe0] sm:$0xff]
        %v2579 = vld [vmem:[%s297 + $0xe8] sm:$0xff]
        %v2580 = vld [vmem:[%s297 + $0xf0] sm:$0xff]
        %v2581 = vld [vmem:[%s297 + $0xf8] sm:$0xff]
        %v2582 = vadd.f32 %v2550, %v2424
        %v2583 = vadd.f32 %v2551, %v2427
        %v2584 = vadd.f32 %v2552, %v2432
        %v2585 = vadd.f32 %v2553, %v2435
        %v2586 = vadd.f32 %v2554, %v2440
        %v2587 = vadd.f32 %v2555, %v2443
        %v2588 = vadd.f32 %v2556, %v2448
        %v2589 = vadd.f32 %v2557, %v2451
        %v2590 = vadd.f32 %v2558, %v2456
        %v2591 = vadd.f32 %v2559, %v2459
        %v2592 = vadd.f32 %v2560, %v2464
        %v2593 = vadd.f32 %v2561, %v2467
        %v2594 = vadd.f32 %v2562, %v2472
        %v2595 = vadd.f32 %v2563, %v2475
        %v2596 = vadd.f32 %v2564, %v2480
        %v2597 = vadd.f32 %v2565, %v2483
        %v2598 = vadd.f32 %v2566, %v2488
        %v2599 = vadd.f32 %v2567, %v2491
        %v2600 = vadd.f32 %v2568, %v2496
        %v2601 = vadd.f32 %v2569, %v2499
        %v2602 = vadd.f32 %v2570, %v2504
        %v2603 = vadd.f32 %v2571, %v2507
        %v2604 = vadd.f32 %v2572, %v2512
        %v2605 = vadd.f32 %v2573, %v2515
        %v2606 = vadd.f32 %v2574, %v2520
        %v2607 = vadd.f32 %v2575, %v2523
        %v2608 = vadd.f32 %v2576, %v2528
        %v2609 = vadd.f32 %v2577, %v2531
        %v2610 = vadd.f32 %v2578, %v2536
        %v2611 = vadd.f32 %v2579, %v2539
        %v2612 = vadd.f32 %v2580, %v2544
        %v2613 = vadd.f32 %v2581, %v2547
        %2614 = vst.msk [vmem:[%s297] sm:$0xff] %vm1660, %v2582
        %2615 = vst.msk [vmem:[%s297 + $0x8] sm:$0xff] %vm1660, %v2583
        %2616 = vst.msk [vmem:[%s297 + $0x10] sm:$0xff] %vm1660, %v2584
        %2617 = vst.msk [vmem:[%s297 + $0x18] sm:$0xff] %vm1660, %v2585
        %2618 = vst.msk [vmem:[%s297 + $0x20] sm:$0xff] %vm1660, %v2586
        %2619 = vst.msk [vmem:[%s297 + $0x28] sm:$0xff] %vm1660, %v2587
        %2620 = vst.msk [vmem:[%s297 + $0x30] sm:$0xff] %vm1660, %v2588
        %2621 = vst.msk [vmem:[%s297 + $0x38] sm:$0xff] %vm1660, %v2589
        %2622 = vst.msk [vmem:[%s297 + $0x40] sm:$0xff] %vm1660, %v2590
        %2623 = vst.msk [vmem:[%s297 + $0x48] sm:$0xff] %vm1660, %v2591
        %2624 = vst.msk [vmem:[%s297 + $0x50] sm:$0xff] %vm1660, %v2592
        %2625 = vst.msk [vmem:[%s297 + $0x58] sm:$0xff] %vm1660, %v2593
        %2626 = vst.msk [vmem:[%s297 + $0x60] sm:$0xff] %vm1660, %v2594
        %2627 = vst.msk [vmem:[%s297 + $0x68] sm:$0xff] %vm1660, %v2595
        %2628 = vst.msk [vmem:[%s297 + $0x70] sm:$0xff] %vm1660, %v2596
        %2629 = vst.msk [vmem:[%s297 + $0x78] sm:$0xff] %vm1660, %v2597
        %2630 = vst.msk [vmem:[%s297 + $0x80] sm:$0xff] %vm1660, %v2598
        %2631 = vst.msk [vmem:[%s297 + $0x88] sm:$0xff] %vm1660, %v2599
        %2632 = vst.msk [vmem:[%s297 + $0x90] sm:$0xff] %vm1660, %v2600
        %2633 = vst.msk [vmem:[%s297 + $0x98] sm:$0xff] %vm1660, %v2601
        %2634 = vst.msk [vmem:[%s297 + $0xa0] sm:$0xff] %vm1660, %v2602
        %2635 = vst.msk [vmem:[%s297 + $0xa8] sm:$0xff] %vm1660, %v2603
        %2636 = vst.msk [vmem:[%s297 + $0xb0] sm:$0xff] %vm1660, %v2604
        %2637 = vst.msk [vmem:[%s297 + $0xb8] sm:$0xff] %vm1660, %v2605
        %2638 = vst.msk [vmem:[%s297 + $0xc0] sm:$0xff] %vm1660, %v2606
        %2639 = vst.msk [vmem:[%s297 + $0xc8] sm:$0xff] %vm1660, %v2607
        %2640 = vst.msk [vmem:[%s297 + $0xd0] sm:$0xff] %vm1660, %v2608
        %2641 = vst.msk [vmem:[%s297 + $0xd8] sm:$0xff] %vm1660, %v2609
        %2642 = vst.msk [vmem:[%s297 + $0xe0] sm:$0xff] %vm1660, %v2610
        %2643 = vst.msk [vmem:[%s297 + $0xe8] sm:$0xff] %vm1660, %v2611
        %2644 = vst.msk [vmem:[%s297 + $0xf0] sm:$0xff] %vm1660, %v2612
        %2645 = vst.msk [vmem:[%s297 + $0xf8] sm:$0xff] %vm1660, %v2613
        %s2646 = scalar_lea.vmem %s3, 6
        %v2647 = vld [vmem:[%s2646] sm:$0x3]
        %v2650 = vunpack.c.l.b16 %v836
        %v2651 = vunpack.c.l.b16 %v837
        %v2652 = vpack.c.b16 %v2651, %v2650
        %v2654 = vsel %vm1446, %v2652, 0
        %v2657 = vsel %vm1495, %v2647, 0
        %2659 = vmatprep.subr.bf16.mxu0 0
        %2660 = vmatpush1.bf16.msra.mxu0 %v2657
        %2661 = vmatprep.subr.bf16.mxu0 0
        %2662 = vmatpush1.bf16.msra.mxu0 0
        %2663 = vmatprep.subr.bf16.mxu0 0
        %2664 = vmatpush1.bf16.msra.mxu0 0
        %2665 = vmatprep.subr.bf16.mxu0 0
        %2666 = vmatpush1.bf16.msra.mxu0 0
        %2667 = vmatprep.subr.bf16.mxu0 0
        %2668 = vmatpush1.bf16.msra.mxu0 0
        %2669 = vmatprep.subr.bf16.mxu0 0
        %2670 = vmatpush1.bf16.msra.mxu0 0
        %2671 = vmatprep.subr.bf16.mxu0 0
        %2672 = vmatpush1.bf16.msra.mxu0 0
        %2673 = vmatprep.subr.bf16.mxu0 0
        %2674 = vmatpush1.bf16.msra.mxu0 0
        %2675 = vmatprep.subr.bf16.mxu0 0
        %2676 = vmatpush1.bf16.msra.mxu0 0
        %2677 = vmatprep.subr.bf16.mxu0 0
        %2678 = vmatpush1.bf16.msra.mxu0 0
        %2679 = vmatprep.subr.bf16.mxu0 0
        %2680 = vmatpush1.bf16.msra.mxu0 0
        %2681 = vmatprep.subr.bf16.mxu0 0
        %2682 = vmatpush1.bf16.msra.mxu0 0
        %2683 = vmatprep.subr.bf16.mxu0 0
        %2684 = vmatpush1.bf16.msra.mxu0 0
        %2685 = vmatprep.subr.bf16.mxu0 0
        %2686 = vmatpush1.bf16.msra.mxu0 0
        %2687 = vmatprep.subr.bf16.mxu0 0
        %2688 = vmatpush1.bf16.msra.mxu0 0
        %2689 = vmatprep.subr.bf16.mxu0 0
        %2690 = vmatpush1.bf16.msra.mxu0 0
        %2691 = vmatprep.mubr.bf16.mxu0 0
        %2692 = vmatmul.mubr.bf16.gmra.mrb[0].mxu0 %v1451
        %v2693 = vpop.f32.mrb[0].mxu0
        %v2694 = vadd.f32 0.0, %v2693
        %v2695 = vpop.f32.mrb[0].mxu0
        %v2696 = vpop.f32.mrb[0].mxu0
        %v2697 = vadd.f32 0.0, %v2696
        %v2698 = vpop.f32.mrb[0].mxu0
        %2699 = vmatprep.mubr.bf16.mxu0 0
        %2700 = vmatmul.mubr.bf16.gmra.mrb[0].mxu0 %v1454
        %v2701 = vpop.f32.mrb[0].mxu0
        %v2702 = vadd.f32 0.0, %v2701
        %v2703 = vpop.f32.mrb[0].mxu0
        %v2704 = vpop.f32.mrb[0].mxu0
        %v2705 = vadd.f32 0.0, %v2704
        %v2706 = vpop.f32.mrb[0].mxu0
        %2707 = vmatprep.mubr.bf16.mxu0 0
        %2708 = vmatmul.mubr.bf16.gmra.mrb[0].mxu0 %v1457
        %v2709 = vpop.f32.mrb[0].mxu0
        %v2710 = vadd.f32 0.0, %v2709
        %v2711 = vpop.f32.mrb[0].mxu0
        %v2712 = vpop.f32.mrb[0].mxu0
        %v2713 = vadd.f32 0.0, %v2712
        %v2714 = vpop.f32.mrb[0].mxu0
        %2715 = vmatprep.mubr.bf16.mxu0 0
        %2716 = vmatmul.mubr.bf16.gmra.mrb[0].mxu0 %v1460
        %v2717 = vpop.f32.mrb[0].mxu0
        %v2718 = vadd.f32 0.0, %v2717
        %v2719 = vpop.f32.mrb[0].mxu0
        %v2720 = vpop.f32.mrb[0].mxu0
        %v2721 = vadd.f32 0.0, %v2720
        %v2722 = vpop.f32.mrb[0].mxu0
        %2723 = vmatprep.mubr.bf16.mxu0 0
        %2724 = vmatmul.mubr.bf16.gmra.mrb[0].mxu0 %v1463
        %v2725 = vpop.f32.mrb[0].mxu0
        %v2726 = vadd.f32 0.0, %v2725
        %v2727 = vpop.f32.mrb[0].mxu0
        %v2728 = vpop.f32.mrb[0].mxu0
        %v2729 = vadd.f32 0.0, %v2728
        %v2730 = vpop.f32.mrb[0].mxu0
        %2731 = vmatprep.mubr.bf16.mxu0 0
        %2732 = vmatmul.mubr.bf16.gmra.mrb[0].mxu0 %v1466
        %v2733 = vpop.f32.mrb[0].mxu0
        %v2734 = vadd.f32 0.0, %v2733
        %v2735 = vpop.f32.mrb[0].mxu0
        %v2736 = vpop.f32.mrb[0].mxu0
        %v2737 = vadd.f32 0.0, %v2736
        %v2738 = vpop.f32.mrb[0].mxu0
        %2739 = vmatprep.mubr.bf16.mxu0 0
        %2740 = vmatmul.mubr.bf16.gmra.mrb[0].mxu0 %v1469
        %v2741 = vpop.f32.mrb[0].mxu0
        %v2742 = vadd.f32 0.0, %v2741
        %v2743 = vpop.f32.mrb[0].mxu0
        %v2744 = vpop.f32.mrb[0].mxu0
        %v2745 = vadd.f32 0.0, %v2744
        %v2746 = vpop.f32.mrb[0].mxu0
        %2747 = vmatprep.mubr.bf16.mxu0 0
        %2748 = vmatmul.mubr.bf16.gmra.mrb[0].mxu0 %v1472
        %v2749 = vpop.f32.mrb[0].mxu0
        %v2750 = vadd.f32 0.0, %v2749
        %v2751 = vpop.f32.mrb[0].mxu0
        %v2752 = vpop.f32.mrb[0].mxu0
        %v2753 = vadd.f32 0.0, %v2752
        %v2754 = vpop.f32.mrb[0].mxu0
        %2755 = vmatprep.mubr.bf16.mxu0 0
        %2756 = vmatmul.mubr.bf16.gmra.mrb[0].mxu0 %v1475
        %v2757 = vpop.f32.mrb[0].mxu0
        %v2758 = vadd.f32 0.0, %v2757
        %v2759 = vpop.f32.mrb[0].mxu0
        %v2760 = vpop.f32.mrb[0].mxu0
        %v2761 = vadd.f32 0.0, %v2760
        %v2762 = vpop.f32.mrb[0].mxu0
        %2763 = vmatprep.mubr.bf16.mxu0 0
        %2764 = vmatmul.mubr.bf16.gmra.mrb[0].mxu0 %v1478
        %v2765 = vpop.f32.mrb[0].mxu0
        %v2766 = vadd.f32 0.0, %v2765
        %v2767 = vpop.f32.mrb[0].mxu0
        %v2768 = vpop.f32.mrb[0].mxu0
        %v2769 = vadd.f32 0.0, %v2768
        %v2770 = vpop.f32.mrb[0].mxu0
        %2771 = vmatprep.mubr.bf16.mxu0 0
        %2772 = vmatmul.mubr.bf16.gmra.mrb[0].mxu0 %v1481
        %v2773 = vpop.f32.mrb[0].mxu0
        %v2774 = vadd.f32 0.0, %v2773
        %v2775 = vpop.f32.mrb[0].mxu0
        %v2776 = vpop.f32.mrb[0].mxu0
        %v2777 = vadd.f32 0.0, %v2776
        %v2778 = vpop.f32.mrb[0].mxu0
        %2779 = vmatprep.mubr.bf16.mxu0 0
        %2780 = vmatmul.mubr.bf16.gmra.mrb[0].mxu0 %v1484
        %v2781 = vpop.f32.mrb[0].mxu0
        %v2782 = vadd.f32 0.0, %v2781
        %v2783 = vpop.f32.mrb[0].mxu0
        %v2784 = vpop.f32.mrb[0].mxu0
        %v2785 = vadd.f32 0.0, %v2784
        %v2786 = vpop.f32.mrb[0].mxu0
        %2787 = vmatprep.mubr.bf16.mxu0 0
        %2788 = vmatmul.mubr.bf16.gmra.mrb[0].mxu0 %v1487
        %v2789 = vpop.f32.mrb[0].mxu0
        %v2790 = vadd.f32 0.0, %v2789
        %v2791 = vpop.f32.mrb[0].mxu0
        %v2792 = vpop.f32.mrb[0].mxu0
        %v2793 = vadd.f32 0.0, %v2792
        %v2794 = vpop.f32.mrb[0].mxu0
        %2795 = vmatprep.mubr.bf16.mxu0 0
        %2796 = vmatmul.mubr.bf16.gmra.mrb[0].mxu0 %v1490
        %v2797 = vpop.f32.mrb[0].mxu0
        %v2798 = vadd.f32 0.0, %v2797
        %v2799 = vpop.f32.mrb[0].mxu0
        %v2800 = vpop.f32.mrb[0].mxu0
        %v2801 = vadd.f32 0.0, %v2800
        %v2802 = vpop.f32.mrb[0].mxu0
        %2803 = vmatprep.mubr.bf16.mxu0 0
        %2804 = vmatmul.mubr.bf16.gmra.mrb[0].mxu0 %v1493
        %v2805 = vpop.f32.mrb[0].mxu0
        %v2806 = vadd.f32 0.0, %v2805
        %v2807 = vpop.f32.mrb[0].mxu0
        %v2808 = vpop.f32.mrb[0].mxu0
        %v2809 = vadd.f32 0.0, %v2808
        %v2810 = vpop.f32.mrb[0].mxu0
        %2811 = vmatprep.mubr.bf16.mxu0 0
        %2812 = vmatmul.mubr.bf16.gmra.mrb[0].mxu0 %v2654
        %v2813 = vpop.f32.mrb[0].mxu0
        %v2814 = vadd.f32 0.0, %v2813
        %v2815 = vpop.f32.mrb[0].mxu0
        %v2816 = vpop.f32.mrb[0].mxu0
        %v2817 = vadd.f32 0.0, %v2816
        %v2818 = vpop.f32.mrb[0].mxu0
        %2819 = vdwg.mxu0
        %v2820 = vld [vmem:[%s297] sm:$0xff]
        %v2821 = vld [vmem:[%s297 + $0x8] sm:$0xff]
        %v2822 = vld [vmem:[%s297 + $0x10] sm:$0xff]
        %v2823 = vld [vmem:[%s297 + $0x18] sm:$0xff]
        %v2824 = vld [vmem:[%s297 + $0x20] sm:$0xff]
        %v2825 = vld [vmem:[%s297 + $0x28] sm:$0xff]
        %v2826 = vld [vmem:[%s297 + $0x30] sm:$0xff]
        %v2827 = vld [vmem:[%s297 + $0x38] sm:$0xff]
        %v2828 = vld [vmem:[%s297 + $0x40] sm:$0xff]
        %v2829 = vld [vmem:[%s297 + $0x48] sm:$0xff]
        %v2830 = vld [vmem:[%s297 + $0x50] sm:$0xff]
        %v2831 = vld [vmem:[%s297 + $0x58] sm:$0xff]
        %v2832 = vld [vmem:[%s297 + $0x60] sm:$0xff]
        %v2833 = vld [vmem:[%s297 + $0x68] sm:$0xff]
        %v2834 = vld [vmem:[%s297 + $0x70] sm:$0xff]
        %v2835 = vld [vmem:[%s297 + $0x78] sm:$0xff]
        %v2836 = vld [vmem:[%s297 + $0x80] sm:$0xff]
        %v2837 = vld [vmem:[%s297 + $0x88] sm:$0xff]
        %v2838 = vld [vmem:[%s297 + $0x90] sm:$0xff]
        %v2839 = vld [vmem:[%s297 + $0x98] sm:$0xff]
        %v2840 = vld [vmem:[%s297 + $0xa0] sm:$0xff]
        %v2841 = vld [vmem:[%s297 + $0xa8] sm:$0xff]
        %v2842 = vld [vmem:[%s297 + $0xb0] sm:$0xff]
        %v2843 = vld [vmem:[%s297 + $0xb8] sm:$0xff]
        %v2844 = vld [vmem:[%s297 + $0xc0] sm:$0xff]
        %v2845 = vld [vmem:[%s297 + $0xc8] sm:$0xff]
        %v2846 = vld [vmem:[%s297 + $0xd0] sm:$0xff]
        %v2847 = vld [vmem:[%s297 + $0xd8] sm:$0xff]
        %v2848 = vld [vmem:[%s297 + $0xe0] sm:$0xff]
        %v2849 = vld [vmem:[%s297 + $0xe8] sm:$0xff]
        %v2850 = vld [vmem:[%s297 + $0xf0] sm:$0xff]
        %v2851 = vld [vmem:[%s297 + $0xf8] sm:$0xff]
        %v2852 = vadd.f32 %v2820, %v2694
        %v2853 = vadd.f32 %v2821, %v2697
        %v2854 = vadd.f32 %v2822, %v2702
        %v2855 = vadd.f32 %v2823, %v2705
        %v2856 = vadd.f32 %v2824, %v2710
        %v2857 = vadd.f32 %v2825, %v2713
        %v2858 = vadd.f32 %v2826, %v2718
        %v2859 = vadd.f32 %v2827, %v2721
        %v2860 = vadd.f32 %v2828, %v2726
        %v2861 = vadd.f32 %v2829, %v2729
        %v2862 = vadd.f32 %v2830, %v2734
        %v2863 = vadd.f32 %v2831, %v2737
        %v2864 = vadd.f32 %v2832, %v2742
        %v2865 = vadd.f32 %v2833, %v2745
        %v2866 = vadd.f32 %v2834, %v2750
        %v2867 = vadd.f32 %v2835, %v2753
        %v2868 = vadd.f32 %v2836, %v2758
        %v2869 = vadd.f32 %v2837, %v2761
        %v2870 = vadd.f32 %v2838, %v2766
        %v2871 = vadd.f32 %v2839, %v2769
        %v2872 = vadd.f32 %v2840, %v2774
        %v2873 = vadd.f32 %v2841, %v2777
        %v2874 = vadd.f32 %v2842, %v2782
        %v2875 = vadd.f32 %v2843, %v2785
        %v2876 = vadd.f32 %v2844, %v2790
        %v2877 = vadd.f32 %v2845, %v2793
        %v2878 = vadd.f32 %v2846, %v2798
        %v2879 = vadd.f32 %v2847, %v2801
        %v2880 = vadd.f32 %v2848, %v2806
        %v2881 = vadd.f32 %v2849, %v2809
        %v2882 = vadd.f32 %v2850, %v2814
        %v2883 = vadd.f32 %v2851, %v2817
        %2884 = vst.msk [vmem:[%s297] sm:$0xff] %vm1660, %v2852
        %2885 = vst.msk [vmem:[%s297 + $0x8] sm:$0xff] %vm1660, %v2853
        %2886 = vst.msk [vmem:[%s297 + $0x10] sm:$0xff] %vm1660, %v2854
        %2887 = vst.msk [vmem:[%s297 + $0x18] sm:$0xff] %vm1660, %v2855
        %2888 = vst.msk [vmem:[%s297 + $0x20] sm:$0xff] %vm1660, %v2856
        %2889 = vst.msk [vmem:[%s297 + $0x28] sm:$0xff] %vm1660, %v2857
        %2890 = vst.msk [vmem:[%s297 + $0x30] sm:$0xff] %vm1660, %v2858
        %2891 = vst.msk [vmem:[%s297 + $0x38] sm:$0xff] %vm1660, %v2859
        %2892 = vst.msk [vmem:[%s297 + $0x40] sm:$0xff] %vm1660, %v2860
        %2893 = vst.msk [vmem:[%s297 + $0x48] sm:$0xff] %vm1660, %v2861
        %2894 = vst.msk [vmem:[%s297 + $0x50] sm:$0xff] %vm1660, %v2862
        %2895 = vst.msk [vmem:[%s297 + $0x58] sm:$0xff] %vm1660, %v2863
        %2896 = vst.msk [vmem:[%s297 + $0x60] sm:$0xff] %vm1660, %v2864
        %2897 = vst.msk [vmem:[%s297 + $0x68] sm:$0xff] %vm1660, %v2865
        %2898 = vst.msk [vmem:[%s297 + $0x70] sm:$0xff] %vm1660, %v2866
        %2899 = vst.msk [vmem:[%s297 + $0x78] sm:$0xff] %vm1660, %v2867
        %2900 = vst.msk [vmem:[%s297 + $0x80] sm:$0xff] %vm1660, %v2868
        %2901 = vst.msk [vmem:[%s297 + $0x88] sm:$0xff] %vm1660, %v2869
        %2902 = vst.msk [vmem:[%s297 + $0x90] sm:$0xff] %vm1660, %v2870
        %2903 = vst.msk [vmem:[%s297 + $0x98] sm:$0xff] %vm1660, %v2871
        %2904 = vst.msk [vmem:[%s297 + $0xa0] sm:$0xff] %vm1660, %v2872
        %2905 = vst.msk [vmem:[%s297 + $0xa8] sm:$0xff] %vm1660, %v2873
        %2906 = vst.msk [vmem:[%s297 + $0xb0] sm:$0xff] %vm1660, %v2874
        %2907 = vst.msk [vmem:[%s297 + $0xb8] sm:$0xff] %vm1660, %v2875
        %2908 = vst.msk [vmem:[%s297 + $0xc0] sm:$0xff] %vm1660, %v2876
        %2909 = vst.msk [vmem:[%s297 + $0xc8] sm:$0xff] %vm1660, %v2877
        %2910 = vst.msk [vmem:[%s297 + $0xd0] sm:$0xff] %vm1660, %v2878
        %2911 = vst.msk [vmem:[%s297 + $0xd8] sm:$0xff] %vm1660, %v2879
        %2912 = vst.msk [vmem:[%s297 + $0xe0] sm:$0xff] %vm1660, %v2880
        %2913 = vst.msk [vmem:[%s297 + $0xe8] sm:$0xff] %vm1660, %v2881
        %2914 = vst.msk [vmem:[%s297 + $0xf0] sm:$0xff] %vm1660, %v2882
        %2915 = vst.msk [vmem:[%s297 + $0xf8] sm:$0xff] %vm1660, %v2883
        %s2916 = scalar_lea.vmem %s3, 8
        %v2917 = vld [vmem:[%s2916] sm:$0x3]
        %v2920 = vunpack.c.l.b16 %v332
        %v2921 = vunpack.c.l.b16 %v333
        %v2922 = vpack.c.b16 %v2920, %v1760
        %v2923 = vpack.c.b16 %v2921, %v2921
        %v2925 = vshll.u32 %v2922, 16
        %v2927 = vrot.slane %v2925, 1
        %v2928 = vsel %vm1778, %v1905, %v2927
        %v2929 = vshrl.u32 %v2922, 16
        %v2931 = vor.u32 %v2929, %v2927
        %v2933 = vshll.u32 %v2923, 16
        %v2935 = vrot.slane %v2933, 1
        %v2936 = vsel %vm1778, %v2931, %v2935
        %v2938 = vsel %vm1446, %v2928, 0
        %v2941 = vsel %vm1446, %v2936, 0
        %v2944 = vsel %vm1495, %v2917, 0
        %2946 = vmatprep.subr.bf16.mxu0 0
        %2947 = vmatpush1.bf16.msra.mxu0 %v2944
        %2948 = vmatprep.subr.bf16.mxu0 0
        %2949 = vmatpush1.bf16.msra.mxu0 0
        %2950 = vmatprep.subr.bf16.mxu0 0
        %2951 = vmatpush1.bf16.msra.mxu0 0
        %2952 = vmatprep.subr.bf16.mxu0 0
        %2953 = vmatpush1.bf16.msra.mxu0 0
        %2954 = vmatprep.subr.bf16.mxu0 0
        %2955 = vmatpush1.bf16.msra.mxu0 0
        %2956 = vmatprep.subr.bf16.mxu0 0
        %2957 = vmatpush1.bf16.msra.mxu0 0
        %2958 = vmatprep.subr.bf16.mxu0 0
        %2959 = vmatpush1.bf16.msra.mxu0 0
        %2960 = vmatprep.subr.bf16.mxu0 0
        %2961 = vmatpush1.bf16.msra.mxu0 0
        %2962 = vmatprep.subr.bf16.mxu0 0
        %2963 = vmatpush1.bf16.msra.mxu0 0
        %2964 = vmatprep.subr.bf16.mxu0 0
        %2965 = vmatpush1.bf16.msra.mxu0 0
        %2966 = vmatprep.subr.bf16.mxu0 0
        %2967 = vmatpush1.bf16.msra.mxu0 0
        %2968 = vmatprep.subr.bf16.mxu0 0
        %2969 = vmatpush1.bf16.msra.mxu0 0
        %2970 = vmatprep.subr.bf16.mxu0 0
        %2971 = vmatpush1.bf16.msra.mxu0 0
        %2972 = vmatprep.subr.bf16.mxu0 0
        %2973 = vmatpush1.bf16.msra.mxu0 0
        %2974 = vmatprep.subr.bf16.mxu0 0
        %2975 = vmatpush1.bf16.msra.mxu0 0
        %2976 = vmatprep.subr.bf16.mxu0 0
        %2977 = vmatpush1.bf16.msra.mxu0 0
        %2978 = vmatprep.mubr.bf16.mxu0 0
        %2979 = vmatmul.mubr.bf16.gmra.mrb[0].mxu0 %v1915
        %v2980 = vpop.f32.mrb[0].mxu0
        %v2981 = vadd.f32 0.0, %v2980
        %v2982 = vpop.f32.mrb[0].mxu0
        %v2983 = vpop.f32.mrb[0].mxu0
        %v2984 = vadd.f32 0.0, %v2983
        %v2985 = vpop.f32.mrb[0].mxu0
        %2986 = vmatprep.mubr.bf16.mxu0 0
        %2987 = vmatmul.mubr.bf16.gmra.mrb[0].mxu0 %v1918
        %v2988 = vpop.f32.mrb[0].mxu0
        %v2989 = vadd.f32 0.0, %v2988
        %v2990 = vpop.f32.mrb[0].mxu0
        %v2991 = vpop.f32.mrb[0].mxu0
        %v2992 = vadd.f32 0.0, %v2991
        %v2993 = vpop.f32.mrb[0].mxu0
        %2994 = vmatprep.mubr.bf16.mxu0 0
        %2995 = vmatmul.mubr.bf16.gmra.mrb[0].mxu0 %v1921
        %v2996 = vpop.f32.mrb[0].mxu0
        %v2997 = vadd.f32 0.0, %v2996
        %v2998 = vpop.f32.mrb[0].mxu0
        %v2999 = vpop.f32.mrb[0].mxu0
        %v3000 = vadd.f32 0.0, %v2999
        %v3001 = vpop.f32.mrb[0].mxu0
        %3002 = vmatprep.mubr.bf16.mxu0 0
        %3003 = vmatmul.mubr.bf16.gmra.mrb[0].mxu0 %v1924
        %v3004 = vpop.f32.mrb[0].mxu0
        %v3005 = vadd.f32 0.0, %v3004
        %v3006 = vpop.f32.mrb[0].mxu0
        %v3007 = vpop.f32.mrb[0].mxu0
        %v3008 = vadd.f32 0.0, %v3007
        %v3009 = vpop.f32.mrb[0].mxu0
        %3010 = vmatprep.mubr.bf16.mxu0 0
        %3011 = vmatmul.mubr.bf16.gmra.mrb[0].mxu0 %v1927
        %v3012 = vpop.f32.mrb[0].mxu0
        %v3013 = vadd.f32 0.0, %v3012
        %v3014 = vpop.f32.mrb[0].mxu0
        %v3015 = vpop.f32.mrb[0].mxu0
        %v3016 = vadd.f32 0.0, %v3015
        %v3017 = vpop.f32.mrb[0].mxu0
        %3018 = vmatprep.mubr.bf16.mxu0 0
        %3019 = vmatmul.mubr.bf16.gmra.mrb[0].mxu0 %v1930
        %v3020 = vpop.f32.mrb[0].mxu0
        %v3021 = vadd.f32 0.0, %v3020
        %v3022 = vpop.f32.mrb[0].mxu0
        %v3023 = vpop.f32.mrb[0].mxu0
        %v3024 = vadd.f32 0.0, %v3023
        %v3025 = vpop.f32.mrb[0].mxu0
        %3026 = vmatprep.mubr.bf16.mxu0 0
        %3027 = vmatmul.mubr.bf16.gmra.mrb[0].mxu0 %v1933
        %v3028 = vpop.f32.mrb[0].mxu0
        %v3029 = vadd.f32 0.0, %v3028
        %v3030 = vpop.f32.mrb[0].mxu0
        %v3031 = vpop.f32.mrb[0].mxu0
        %v3032 = vadd.f32 0.0, %v3031
        %v3033 = vpop.f32.mrb[0].mxu0
        %3034 = vmatprep.mubr.bf16.mxu0 0
        %3035 = vmatmul.mubr.bf16.gmra.mrb[0].mxu0 %v1936
        %v3036 = vpop.f32.mrb[0].mxu0
        %v3037 = vadd.f32 0.0, %v3036
        %v3038 = vpop.f32.mrb[0].mxu0
        %v3039 = vpop.f32.mrb[0].mxu0
        %v3040 = vadd.f32 0.0, %v3039
        %v3041 = vpop.f32.mrb[0].mxu0
        %3042 = vmatprep.mubr.bf16.mxu0 0
        %3043 = vmatmul.mubr.bf16.gmra.mrb[0].mxu0 %v1939
        %v3044 = vpop.f32.mrb[0].mxu0
        %v3045 = vadd.f32 0.0, %v3044
        %v3046 = vpop.f32.mrb[0].mxu0
        %v3047 = vpop.f32.mrb[0].mxu0
        %v3048 = vadd.f32 0.0, %v3047
        %v3049 = vpop.f32.mrb[0].mxu0
        %3050 = vmatprep.mubr.bf16.mxu0 0
        %3051 = vmatmul.mubr.bf16.gmra.mrb[0].mxu0 %v1942
        %v3052 = vpop.f32.mrb[0].mxu0
        %v3053 = vadd.f32 0.0, %v3052
        %v3054 = vpop.f32.mrb[0].mxu0
        %v3055 = vpop.f32.mrb[0].mxu0
        %v3056 = vadd.f32 0.0, %v3055
        %v3057 = vpop.f32.mrb[0].mxu0
        %3058 = vmatprep.mubr.bf16.mxu0 0
        %3059 = vmatmul.mubr.bf16.gmra.mrb[0].mxu0 %v1945
        %v3060 = vpop.f32.mrb[0].mxu0
        %v3061 = vadd.f32 0.0, %v3060
        %v3062 = vpop.f32.mrb[0].mxu0
        %v3063 = vpop.f32.mrb[0].mxu0
        %v3064 = vadd.f32 0.0, %v3063
        %v3065 = vpop.f32.mrb[0].mxu0
        %3066 = vmatprep.mubr.bf16.mxu0 0
        %3067 = vmatmul.mubr.bf16.gmra.mrb[0].mxu0 %v1948
        %v3068 = vpop.f32.mrb[0].mxu0
        %v3069 = vadd.f32 0.0, %v3068
        %v3070 = vpop.f32.mrb[0].mxu0
        %v3071 = vpop.f32.mrb[0].mxu0
        %v3072 = vadd.f32 0.0, %v3071
        %v3073 = vpop.f32.mrb[0].mxu0
        %3074 = vmatprep.mubr.bf16.mxu0 0
        %3075 = vmatmul.mubr.bf16.gmra.mrb[0].mxu0 %v1951
        %v3076 = vpop.f32.mrb[0].mxu0
        %v3077 = vadd.f32 0.0, %v3076
        %v3078 = vpop.f32.mrb[0].mxu0
        %v3079 = vpop.f32.mrb[0].mxu0
        %v3080 = vadd.f32 0.0, %v3079
        %v3081 = vpop.f32.mrb[0].mxu0
        %3082 = vmatprep.mubr.bf16.mxu0 0
        %3083 = vmatmul.mubr.bf16.gmra.mrb[0].mxu0 %v1954
        %v3084 = vpop.f32.mrb[0].mxu0
        %v3085 = vadd.f32 0.0, %v3084
        %v3086 = vpop.f32.mrb[0].mxu0
        %v3087 = vpop.f32.mrb[0].mxu0
        %v3088 = vadd.f32 0.0, %v3087
        %v3089 = vpop.f32.mrb[0].mxu0
        %3090 = vmatprep.mubr.bf16.mxu0 0
        %3091 = vmatmul.mubr.bf16.gmra.mrb[0].mxu0 %v2938
        %v3092 = vpop.f32.mrb[0].mxu0
        %v3093 = vadd.f32 0.0, %v3092
        %v3094 = vpop.f32.mrb[0].mxu0
        %v3095 = vpop.f32.mrb[0].mxu0
        %v3096 = vadd.f32 0.0, %v3095
        %v3097 = vpop.f32.mrb[0].mxu0
        %3098 = vmatprep.mubr.bf16.mxu0 0
        %3099 = vmatmul.mubr.bf16.gmra.mrb[0].mxu0 %v2941
        %v3100 = vpop.f32.mrb[0].mxu0
        %v3101 = vadd.f32 0.0, %v3100
        %v3102 = vpop.f32.mrb[0].mxu0
        %v3103 = vpop.f32.mrb[0].mxu0
        %v3104 = vadd.f32 0.0, %v3103
        %v3105 = vpop.f32.mrb[0].mxu0
        %3106 = vdwg.mxu0
        %v3107 = vld [vmem:[%s297] sm:$0xff]
        %v3108 = vld [vmem:[%s297 + $0x8] sm:$0xff]
        %v3109 = vld [vmem:[%s297 + $0x10] sm:$0xff]
        %v3110 = vld [vmem:[%s297 + $0x18] sm:$0xff]
        %v3111 = vld [vmem:[%s297 + $0x20] sm:$0xff]
        %v3112 = vld [vmem:[%s297 + $0x28] sm:$0xff]
        %v3113 = vld [vmem:[%s297 + $0x30] sm:$0xff]
        %v3114 = vld [vmem:[%s297 + $0x38] sm:$0xff]
        %v3115 = vld [vmem:[%s297 + $0x40] sm:$0xff]
        %v3116 = vld [vmem:[%s297 + $0x48] sm:$0xff]
        %v3117 = vld [vmem:[%s297 + $0x50] sm:$0xff]
        %v3118 = vld [vmem:[%s297 + $0x58] sm:$0xff]
        %v3119 = vld [vmem:[%s297 + $0x60] sm:$0xff]
        %v3120 = vld [vmem:[%s297 + $0x68] sm:$0xff]
        %v3121 = vld [vmem:[%s297 + $0x70] sm:$0xff]
        %v3122 = vld [vmem:[%s297 + $0x78] sm:$0xff]
        %v3123 = vld [vmem:[%s297 + $0x80] sm:$0xff]
        %v3124 = vld [vmem:[%s297 + $0x88] sm:$0xff]
        %v3125 = vld [vmem:[%s297 + $0x90] sm:$0xff]
        %v3126 = vld [vmem:[%s297 + $0x98] sm:$0xff]
        %v3127 = vld [vmem:[%s297 + $0xa0] sm:$0xff]
        %v3128 = vld [vmem:[%s297 + $0xa8] sm:$0xff]
        %v3129 = vld [vmem:[%s297 + $0xb0] sm:$0xff]
        %v3130 = vld [vmem:[%s297 + $0xb8] sm:$0xff]
        %v3131 = vld [vmem:[%s297 + $0xc0] sm:$0xff]
        %v3132 = vld [vmem:[%s297 + $0xc8] sm:$0xff]
        %v3133 = vld [vmem:[%s297 + $0xd0] sm:$0xff]
        %v3134 = vld [vmem:[%s297 + $0xd8] sm:$0xff]
        %v3135 = vld [vmem:[%s297 + $0xe0] sm:$0xff]
        %v3136 = vld [vmem:[%s297 + $0xe8] sm:$0xff]
        %v3137 = vld [vmem:[%s297 + $0xf0] sm:$0xff]
        %v3138 = vld [vmem:[%s297 + $0xf8] sm:$0xff]
        %v3139 = vadd.f32 %v3107, %v2981
        %v3140 = vadd.f32 %v3108, %v2984
        %v3141 = vadd.f32 %v3109, %v2989
        %v3142 = vadd.f32 %v3110, %v2992
        %v3143 = vadd.f32 %v3111, %v2997
        %v3144 = vadd.f32 %v3112, %v3000
        %v3145 = vadd.f32 %v3113, %v3005
        %v3146 = vadd.f32 %v3114, %v3008
        %v3147 = vadd.f32 %v3115, %v3013
        %v3148 = vadd.f32 %v3116, %v3016
        %v3149 = vadd.f32 %v3117, %v3021
        %v3150 = vadd.f32 %v3118, %v3024
        %v3151 = vadd.f32 %v3119, %v3029
        %v3152 = vadd.f32 %v3120, %v3032
        %v3153 = vadd.f32 %v3121, %v3037
        %v3154 = vadd.f32 %v3122, %v3040
        %v3155 = vadd.f32 %v3123, %v3045
        %v3156 = vadd.f32 %v3124, %v3048
        %v3157 = vadd.f32 %v3125, %v3053
        %v3158 = vadd.f32 %v3126, %v3056
        %v3159 = vadd.f32 %v3127, %v3061
        %v3160 = vadd.f32 %v3128, %v3064
        %v3161 = vadd.f32 %v3129, %v3069
        %v3162 = vadd.f32 %v3130, %v3072
        %v3163 = vadd.f32 %v3131, %v3077
        %v3164 = vadd.f32 %v3132, %v3080
        %v3165 = vadd.f32 %v3133, %v3085
        %v3166 = vadd.f32 %v3134, %v3088
        %v3167 = vadd.f32 %v3135, %v3093
        %v3168 = vadd.f32 %v3136, %v3096
        %v3169 = vadd.f32 %v3137, %v3101
        %v3170 = vadd.f32 %v3138, %v3104
        %3171 = vst.msk [vmem:[%s297] sm:$0xff] %vm1660, %v3139
        %3172 = vst.msk [vmem:[%s297 + $0x8] sm:$0xff] %vm1660, %v3140
        %3173 = vst.msk [vmem:[%s297 + $0x10] sm:$0xff] %vm1660, %v3141
        %3174 = vst.msk [vmem:[%s297 + $0x18] sm:$0xff] %vm1660, %v3142
        %3175 = vst.msk [vmem:[%s297 + $0x20] sm:$0xff] %vm1660, %v3143
        %3176 = vst.msk [vmem:[%s297 + $0x28] sm:$0xff] %vm1660, %v3144
        %3177 = vst.msk [vmem:[%s297 + $0x30] sm:$0xff] %vm1660, %v3145
        %3178 = vst.msk [vmem:[%s297 + $0x38] sm:$0xff] %vm1660, %v3146
        %3179 = vst.msk [vmem:[%s297 + $0x40] sm:$0xff] %vm1660, %v3147
        %3180 = vst.msk [vmem:[%s297 + $0x48] sm:$0xff] %vm1660, %v3148
        %3181 = vst.msk [vmem:[%s297 + $0x50] sm:$0xff] %vm1660, %v3149
        %3182 = vst.msk [vmem:[%s297 + $0x58] sm:$0xff] %vm1660, %v3150
        %3183 = vst.msk [vmem:[%s297 + $0x60] sm:$0xff] %vm1660, %v3151
        %3184 = vst.msk [vmem:[%s297 + $0x68] sm:$0xff] %vm1660, %v3152
        %3185 = vst.msk [vmem:[%s297 + $0x70] sm:$0xff] %vm1660, %v3153
        %3186 = vst.msk [vmem:[%s297 + $0x78] sm:$0xff] %vm1660, %v3154
        %3187 = vst.msk [vmem:[%s297 + $0x80] sm:$0xff] %vm1660, %v3155
        %3188 = vst.msk [vmem:[%s297 + $0x88] sm:$0xff] %vm1660, %v3156
        %3189 = vst.msk [vmem:[%s297 + $0x90] sm:$0xff] %vm1660, %v3157
        %3190 = vst.msk [vmem:[%s297 + $0x98] sm:$0xff] %vm1660, %v3158
        %3191 = vst.msk [vmem:[%s297 + $0xa0] sm:$0xff] %vm1660, %v3159
        %3192 = vst.msk [vmem:[%s297 + $0xa8] sm:$0xff] %vm1660, %v3160
        %3193 = vst.msk [vmem:[%s297 + $0xb0] sm:$0xff] %vm1660, %v3161
        %3194 = vst.msk [vmem:[%s297 + $0xb8] sm:$0xff] %vm1660, %v3162
        %3195 = vst.msk [vmem:[%s297 + $0xc0] sm:$0xff] %vm1660, %v3163
        %3196 = vst.msk [vmem:[%s297 + $0xc8] sm:$0xff] %vm1660, %v3164
        %3197 = vst.msk [vmem:[%s297 + $0xd0] sm:$0xff] %vm1660, %v3165
        %3198 = vst.msk [vmem:[%s297 + $0xd8] sm:$0xff] %vm1660, %v3166
        %3199 = vst.msk [vmem:[%s297 + $0xe0] sm:$0xff] %vm1660, %v3167
        %3200 = vst.msk [vmem:[%s297 + $0xe8] sm:$0xff] %vm1660, %v3168
        %3201 = vst.msk [vmem:[%s297 + $0xf0] sm:$0xff] %vm1660, %v3169
        %3202 = vst.msk [vmem:[%s297 + $0xf8] sm:$0xff] %vm1660, %v3170
        %s3203 = scalar_lea.vmem %s3, 10
        %v3204 = vld [vmem:[%s3203] sm:$0x3]
        %v3207 = vunpack.c.l.b16 %v1354
        %v3208 = vunpack.c.l.b16 %v1355
        %v3209 = vpack.c.b16 %v3207, %v2286
        %v3210 = vpack.c.b16 %v3208, %v3208
        %v3211 = vrot.slane %v3209, 1
        %v3212 = vsel %vm2304, %v2334, %v3211
        %v3213 = vrot.slane %v3210, 1
        %v3214 = vsel %vm2304, %v3211, %v3213
        %v3216 = vsel %vm1446, %v3212, 0
        %v3219 = vsel %vm1446, %v3214, 0
        %v3222 = vsel %vm1495, %v3204, 0
        %3224 = vmatprep.subr.bf16.mxu0 0
        %3225 = vmatpush1.bf16.msra.mxu0 %v3222
        %3226 = vmatprep.subr.bf16.mxu0 0
        %3227 = vmatpush1.bf16.msra.mxu0 0
        %3228 = vmatprep.subr.bf16.mxu0 0
        %3229 = vmatpush1.bf16.msra.mxu0 0
        %3230 = vmatprep.subr.bf16.mxu0 0
        %3231 = vmatpush1.bf16.msra.mxu0 0
        %3232 = vmatprep.subr.bf16.mxu0 0
        %3233 = vmatpush1.bf16.msra.mxu0 0
        %3234 = vmatprep.subr.bf16.mxu0 0
        %3235 = vmatpush1.bf16.msra.mxu0 0
        %3236 = vmatprep.subr.bf16.mxu0 0
        %3237 = vmatpush1.bf16.msra.mxu0 0
        %3238 = vmatprep.subr.bf16.mxu0 0
        %3239 = vmatpush1.bf16.msra.mxu0 0
        %3240 = vmatprep.subr.bf16.mxu0 0
        %3241 = vmatpush1.bf16.msra.mxu0 0
        %3242 = vmatprep.subr.bf16.mxu0 0
        %3243 = vmatpush1.bf16.msra.mxu0 0
        %3244 = vmatprep.subr.bf16.mxu0 0
        %3245 = vmatpush1.bf16.msra.mxu0 0
        %3246 = vmatprep.subr.bf16.mxu0 0
        %3247 = vmatpush1.bf16.msra.mxu0 0
        %3248 = vmatprep.subr.bf16.mxu0 0
        %3249 = vmatpush1.bf16.msra.mxu0 0
        %3250 = vmatprep.subr.bf16.mxu0 0
        %3251 = vmatpush1.bf16.msra.mxu0 0
        %3252 = vmatprep.subr.bf16.mxu0 0
        %3253 = vmatpush1.bf16.msra.mxu0 0
        %3254 = vmatprep.subr.bf16.mxu0 0
        %3255 = vmatpush1.bf16.msra.mxu0 0
        %3256 = vmatprep.mubr.bf16.mxu0 0
        %3257 = vmatmul.mubr.bf16.gmra.mrb[0].mxu0 %v2342
        %v3258 = vpop.f32.mrb[0].mxu0
        %v3259 = vadd.f32 0.0, %v3258
        %v3260 = vpop.f32.mrb[0].mxu0
        %v3261 = vpop.f32.mrb[0].mxu0
        %v3262 = vadd.f32 0.0, %v3261
        %v3263 = vpop.f32.mrb[0].mxu0
        %3264 = vmatprep.mubr.bf16.mxu0 0
        %3265 = vmatmul.mubr.bf16.gmra.mrb[0].mxu0 %v2345
        %v3266 = vpop.f32.mrb[0].mxu0
        %v3267 = vadd.f32 0.0, %v3266
        %v3268 = vpop.f32.mrb[0].mxu0
        %v3269 = vpop.f32.mrb[0].mxu0
        %v3270 = vadd.f32 0.0, %v3269
        %v3271 = vpop.f32.mrb[0].mxu0
        %3272 = vmatprep.mubr.bf16.mxu0 0
        %3273 = vmatmul.mubr.bf16.gmra.mrb[0].mxu0 %v2348
        %v3274 = vpop.f32.mrb[0].mxu0
        %v3275 = vadd.f32 0.0, %v3274
        %v3276 = vpop.f32.mrb[0].mxu0
        %v3277 = vpop.f32.mrb[0].mxu0
        %v3278 = vadd.f32 0.0, %v3277
        %v3279 = vpop.f32.mrb[0].mxu0
        %3280 = vmatprep.mubr.bf16.mxu0 0
        %3281 = vmatmul.mubr.bf16.gmra.mrb[0].mxu0 %v2351
        %v3282 = vpop.f32.mrb[0].mxu0
        %v3283 = vadd.f32 0.0, %v3282
        %v3284 = vpop.f32.mrb[0].mxu0
        %v3285 = vpop.f32.mrb[0].mxu0
        %v3286 = vadd.f32 0.0, %v3285
        %v3287 = vpop.f32.mrb[0].mxu0
        %3288 = vmatprep.mubr.bf16.mxu0 0
        %3289 = vmatmul.mubr.bf16.gmra.mrb[0].mxu0 %v2354
        %v3290 = vpop.f32.mrb[0].mxu0
        %v3291 = vadd.f32 0.0, %v3290
        %v3292 = vpop.f32.mrb[0].mxu0
        %v3293 = vpop.f32.mrb[0].mxu0
        %v3294 = vadd.f32 0.0, %v3293
        %v3295 = vpop.f32.mrb[0].mxu0
        %3296 = vmatprep.mubr.bf16.mxu0 0
        %3297 = vmatmul.mubr.bf16.gmra.mrb[0].mxu0 %v2357
        %v3298 = vpop.f32.mrb[0].mxu0
        %v3299 = vadd.f32 0.0, %v3298
        %v3300 = vpop.f32.mrb[0].mxu0
        %v3301 = vpop.f32.mrb[0].mxu0
        %v3302 = vadd.f32 0.0, %v3301
        %v3303 = vpop.f32.mrb[0].mxu0
        %3304 = vmatprep.mubr.bf16.mxu0 0
        %3305 = vmatmul.mubr.bf16.gmra.mrb[0].mxu0 %v2360
        %v3306 = vpop.f32.mrb[0].mxu0
        %v3307 = vadd.f32 0.0, %v3306
        %v3308 = vpop.f32.mrb[0].mxu0
        %v3309 = vpop.f32.mrb[0].mxu0
        %v3310 = vadd.f32 0.0, %v3309
        %v3311 = vpop.f32.mrb[0].mxu0
        %3312 = vmatprep.mubr.bf16.mxu0 0
        %3313 = vmatmul.mubr.bf16.gmra.mrb[0].mxu0 %v2363
        %v3314 = vpop.f32.mrb[0].mxu0
        %v3315 = vadd.f32 0.0, %v3314
        %v3316 = vpop.f32.mrb[0].mxu0
        %v3317 = vpop.f32.mrb[0].mxu0
        %v3318 = vadd.f32 0.0, %v3317
        %v3319 = vpop.f32.mrb[0].mxu0
        %3320 = vmatprep.mubr.bf16.mxu0 0
        %3321 = vmatmul.mubr.bf16.gmra.mrb[0].mxu0 %v2366
        %v3322 = vpop.f32.mrb[0].mxu0
        %v3323 = vadd.f32 0.0, %v3322
        %v3324 = vpop.f32.mrb[0].mxu0
        %v3325 = vpop.f32.mrb[0].mxu0
        %v3326 = vadd.f32 0.0, %v3325
        %v3327 = vpop.f32.mrb[0].mxu0
        %3328 = vmatprep.mubr.bf16.mxu0 0
        %3329 = vmatmul.mubr.bf16.gmra.mrb[0].mxu0 %v2369
        %v3330 = vpop.f32.mrb[0].mxu0
        %v3331 = vadd.f32 0.0, %v3330
        %v3332 = vpop.f32.mrb[0].mxu0
        %v3333 = vpop.f32.mrb[0].mxu0
        %v3334 = vadd.f32 0.0, %v3333
        %v3335 = vpop.f32.mrb[0].mxu0
        %3336 = vmatprep.mubr.bf16.mxu0 0
        %3337 = vmatmul.mubr.bf16.gmra.mrb[0].mxu0 %v2372
        %v3338 = vpop.f32.mrb[0].mxu0
        %v3339 = vadd.f32 0.0, %v3338
        %v3340 = vpop.f32.mrb[0].mxu0
        %v3341 = vpop.f32.mrb[0].mxu0
        %v3342 = vadd.f32 0.0, %v3341
        %v3343 = vpop.f32.mrb[0].mxu0
        %3344 = vmatprep.mubr.bf16.mxu0 0
        %3345 = vmatmul.mubr.bf16.gmra.mrb[0].mxu0 %v2375
        %v3346 = vpop.f32.mrb[0].mxu0
        %v3347 = vadd.f32 0.0, %v3346
        %v3348 = vpop.f32.mrb[0].mxu0
        %v3349 = vpop.f32.mrb[0].mxu0
        %v3350 = vadd.f32 0.0, %v3349
        %v3351 = vpop.f32.mrb[0].mxu0
        %3352 = vmatprep.mubr.bf16.mxu0 0
        %3353 = vmatmul.mubr.bf16.gmra.mrb[0].mxu0 %v2378
        %v3354 = vpop.f32.mrb[0].mxu0
        %v3355 = vadd.f32 0.0, %v3354
        %v3356 = vpop.f32.mrb[0].mxu0
        %v3357 = vpop.f32.mrb[0].mxu0
        %v3358 = vadd.f32 0.0, %v3357
        %v3359 = vpop.f32.mrb[0].mxu0
        %3360 = vmatprep.mubr.bf16.mxu0 0
        %3361 = vmatmul.mubr.bf16.gmra.mrb[0].mxu0 %v2381
        %v3362 = vpop.f32.mrb[0].mxu0
        %v3363 = vadd.f32 0.0, %v3362
        %v3364 = vpop.f32.mrb[0].mxu0
        %v3365 = vpop.f32.mrb[0].mxu0
        %v3366 = vadd.f32 0.0, %v3365
        %v3367 = vpop.f32.mrb[0].mxu0
        %3368 = vmatprep.mubr.bf16.mxu0 0
        %3369 = vmatmul.mubr.bf16.gmra.mrb[0].mxu0 %v3216
        %v3370 = vpop.f32.mrb[0].mxu0
        %v3371 = vadd.f32 0.0, %v3370
        %v3372 = vpop.f32.mrb[0].mxu0
        %v3373 = vpop.f32.mrb[0].mxu0
        %v3374 = vadd.f32 0.0, %v3373
        %v3375 = vpop.f32.mrb[0].mxu0
        %3376 = vmatprep.mubr.bf16.mxu0 0
        %3377 = vmatmul.mubr.bf16.gmra.mrb[0].mxu0 %v3219
        %v3378 = vpop.f32.mrb[0].mxu0
        %v3379 = vadd.f32 0.0, %v3378
        %v3380 = vpop.f32.mrb[0].mxu0
        %v3381 = vpop.f32.mrb[0].mxu0
        %v3382 = vadd.f32 0.0, %v3381
        %v3383 = vpop.f32.mrb[0].mxu0
        %3384 = vdwg.mxu0
        %v3385 = vld [vmem:[%s297] sm:$0xff]
        %v3386 = vld [vmem:[%s297 + $0x8] sm:$0xff]
        %v3387 = vld [vmem:[%s297 + $0x10] sm:$0xff]
        %v3388 = vld [vmem:[%s297 + $0x18] sm:$0xff]
        %v3389 = vld [vmem:[%s297 + $0x20] sm:$0xff]
        %v3390 = vld [vmem:[%s297 + $0x28] sm:$0xff]
        %v3391 = vld [vmem:[%s297 + $0x30] sm:$0xff]
        %v3392 = vld [vmem:[%s297 + $0x38] sm:$0xff]
        %v3393 = vld [vmem:[%s297 + $0x40] sm:$0xff]
        %v3394 = vld [vmem:[%s297 + $0x48] sm:$0xff]
        %v3395 = vld [vmem:[%s297 + $0x50] sm:$0xff]
        %v3396 = vld [vmem:[%s297 + $0x58] sm:$0xff]
        %v3397 = vld [vmem:[%s297 + $0x60] sm:$0xff]
        %v3398 = vld [vmem:[%s297 + $0x68] sm:$0xff]
        %v3399 = vld [vmem:[%s297 + $0x70] sm:$0xff]
        %v3400 = vld [vmem:[%s297 + $0x78] sm:$0xff]
        %v3401 = vld [vmem:[%s297 + $0x80] sm:$0xff]
        %v3402 = vld [vmem:[%s297 + $0x88] sm:$0xff]
        %v3403 = vld [vmem:[%s297 + $0x90] sm:$0xff]
        %v3404 = vld [vmem:[%s297 + $0x98] sm:$0xff]
        %v3405 = vld [vmem:[%s297 + $0xa0] sm:$0xff]
        %v3406 = vld [vmem:[%s297 + $0xa8] sm:$0xff]
        %v3407 = vld [vmem:[%s297 + $0xb0] sm:$0xff]
        %v3408 = vld [vmem:[%s297 + $0xb8] sm:$0xff]
        %v3409 = vld [vmem:[%s297 + $0xc0] sm:$0xff]
        %v3410 = vld [vmem:[%s297 + $0xc8] sm:$0xff]
        %v3411 = vld [vmem:[%s297 + $0xd0] sm:$0xff]
        %v3412 = vld [vmem:[%s297 + $0xd8] sm:$0xff]
        %v3413 = vld [vmem:[%s297 + $0xe0] sm:$0xff]
        %v3414 = vld [vmem:[%s297 + $0xe8] sm:$0xff]
        %v3415 = vld [vmem:[%s297 + $0xf0] sm:$0xff]
        %v3416 = vld [vmem:[%s297 + $0xf8] sm:$0xff]
        %v3417 = vadd.f32 %v3385, %v3259
        %v3418 = vadd.f32 %v3386, %v3262
        %v3419 = vadd.f32 %v3387, %v3267
        %v3420 = vadd.f32 %v3388, %v3270
        %v3421 = vadd.f32 %v3389, %v3275
        %v3422 = vadd.f32 %v3390, %v3278
        %v3423 = vadd.f32 %v3391, %v3283
        %v3424 = vadd.f32 %v3392, %v3286
        %v3425 = vadd.f32 %v3393, %v3291
        %v3426 = vadd.f32 %v3394, %v3294
        %v3427 = vadd.f32 %v3395, %v3299
        %v3428 = vadd.f32 %v3396, %v3302
        %v3429 = vadd.f32 %v3397, %v3307
        %v3430 = vadd.f32 %v3398, %v3310
        %v3431 = vadd.f32 %v3399, %v3315
        %v3432 = vadd.f32 %v3400, %v3318
        %v3433 = vadd.f32 %v3401, %v3323
        %v3434 = vadd.f32 %v3402, %v3326
        %v3435 = vadd.f32 %v3403, %v3331
        %v3436 = vadd.f32 %v3404, %v3334
        %v3437 = vadd.f32 %v3405, %v3339
        %v3438 = vadd.f32 %v3406, %v3342
        %v3439 = vadd.f32 %v3407, %v3347
        %v3440 = vadd.f32 %v3408, %v3350
        %v3441 = vadd.f32 %v3409, %v3355
        %v3442 = vadd.f32 %v3410, %v3358
        %v3443 = vadd.f32 %v3411, %v3363
        %v3444 = vadd.f32 %v3412, %v3366
        %v3445 = vadd.f32 %v3413, %v3371
        %v3446 = vadd.f32 %v3414, %v3374
        %v3447 = vadd.f32 %v3415, %v3379
        %v3448 = vadd.f32 %v3416, %v3382
        %3449 = vst.msk [vmem:[%s297] sm:$0xff] %vm1660, %v3417
        %3450 = vst.msk [vmem:[%s297 + $0x8] sm:$0xff] %vm1660, %v3418
        %3451 = vst.msk [vmem:[%s297 + $0x10] sm:$0xff] %vm1660, %v3419
        %3452 = vst.msk [vmem:[%s297 + $0x18] sm:$0xff] %vm1660, %v3420
        %3453 = vst.msk [vmem:[%s297 + $0x20] sm:$0xff] %vm1660, %v3421
        %3454 = vst.msk [vmem:[%s297 + $0x28] sm:$0xff] %vm1660, %v3422
        %3455 = vst.msk [vmem:[%s297 + $0x30] sm:$0xff] %vm1660, %v3423
        %3456 = vst.msk [vmem:[%s297 + $0x38] sm:$0xff] %vm1660, %v3424
        %3457 = vst.msk [vmem:[%s297 + $0x40] sm:$0xff] %vm1660, %v3425
        %3458 = vst.msk [vmem:[%s297 + $0x48] sm:$0xff] %vm1660, %v3426
        %3459 = vst.msk [vmem:[%s297 + $0x50] sm:$0xff] %vm1660, %v3427
        %3460 = vst.msk [vmem:[%s297 + $0x58] sm:$0xff] %vm1660, %v3428
        %3461 = vst.msk [vmem:[%s297 + $0x60] sm:$0xff] %vm1660, %v3429
        %3462 = vst.msk [vmem:[%s297 + $0x68] sm:$0xff] %vm1660, %v3430
        %3463 = vst.msk [vmem:[%s297 + $0x70] sm:$0xff] %vm1660, %v3431
        %3464 = vst.msk [vmem:[%s297 + $0x78] sm:$0xff] %vm1660, %v3432
        %3465 = vst.msk [vmem:[%s297 + $0x80] sm:$0xff] %vm1660, %v3433
        %3466 = vst.msk [vmem:[%s297 + $0x88] sm:$0xff] %vm1660, %v3434
        %3467 = vst.msk [vmem:[%s297 + $0x90] sm:$0xff] %vm1660, %v3435
        %3468 = vst.msk [vmem:[%s297 + $0x98] sm:$0xff] %vm1660, %v3436
        %3469 = vst.msk [vmem:[%s297 + $0xa0] sm:$0xff] %vm1660, %v3437
        %3470 = vst.msk [vmem:[%s297 + $0xa8] sm:$0xff] %vm1660, %v3438
        %3471 = vst.msk [vmem:[%s297 + $0xb0] sm:$0xff] %vm1660, %v3439
        %3472 = vst.msk [vmem:[%s297 + $0xb8] sm:$0xff] %vm1660, %v3440
        %3473 = vst.msk [vmem:[%s297 + $0xc0] sm:$0xff] %vm1660, %v3441
        %3474 = vst.msk [vmem:[%s297 + $0xc8] sm:$0xff] %vm1660, %v3442
        %3475 = vst.msk [vmem:[%s297 + $0xd0] sm:$0xff] %vm1660, %v3443
        %3476 = vst.msk [vmem:[%s297 + $0xd8] sm:$0xff] %vm1660, %v3444
        %3477 = vst.msk [vmem:[%s297 + $0xe0] sm:$0xff] %vm1660, %v3445
        %3478 = vst.msk [vmem:[%s297 + $0xe8] sm:$0xff] %vm1660, %v3446
        %3479 = vst.msk [vmem:[%s297 + $0xf0] sm:$0xff] %vm1660, %v3447
        %3480 = vst.msk [vmem:[%s297 + $0xf8] sm:$0xff] %vm1660, %v3448
        %s3481 = scalar_lea.vmem %s3, 12
        %v3482 = vld [vmem:[%s3481] sm:$0x3]
        %v3485 = vunpack.c.l.b16 %v838
        %v3486 = vunpack.c.l.b16 %v839
        %v3487 = vpack.c.b16 %v3486, %v3485
        %v3489 = vsel %vm1446, %v3487, 0
        %v3492 = vsel %vm1495, %v3482, 0
        %3494 = vmatprep.subr.bf16.mxu0 0
        %3495 = vmatpush1.bf16.msra.mxu0 %v3492
        %3496 = vmatprep.subr.bf16.mxu0 0
        %3497 = vmatpush1.bf16.msra.mxu0 0
        %3498 = vmatprep.subr.bf16.mxu0 0
        %3499 = vmatpush1.bf16.msra.mxu0 0
        %3500 = vmatprep.subr.bf16.mxu0 0
        %3501 = vmatpush1.bf16.msra.mxu0 0
        %3502 = vmatprep.subr.bf16.mxu0 0
        %3503 = vmatpush1.bf16.msra.mxu0 0
        %3504 = vmatprep.subr.bf16.mxu0 0
        %3505 = vmatpush1.bf16.msra.mxu0 0
        %3506 = vmatprep.subr.bf16.mxu0 0
        %3507 = vmatpush1.bf16.msra.mxu0 0
        %3508 = vmatprep.subr.bf16.mxu0 0
        %3509 = vmatpush1.bf16.msra.mxu0 0
        %3510 = vmatprep.subr.bf16.mxu0 0
        %3511 = vmatpush1.bf16.msra.mxu0 0
        %3512 = vmatprep.subr.bf16.mxu0 0
        %3513 = vmatpush1.bf16.msra.mxu0 0
        %3514 = vmatprep.subr.bf16.mxu0 0
        %3515 = vmatpush1.bf16.msra.mxu0 0
        %3516 = vmatprep.subr.bf16.mxu0 0
        %3517 = vmatpush1.bf16.msra.mxu0 0
        %3518 = vmatprep.subr.bf16.mxu0 0
        %3519 = vmatpush1.bf16.msra.mxu0 0
        %3520 = vmatprep.subr.bf16.mxu0 0
        %3521 = vmatpush1.bf16.msra.mxu0 0
        %3522 = vmatprep.subr.bf16.mxu0 0
        %3523 = vmatpush1.bf16.msra.mxu0 0
        %3524 = vmatprep.subr.bf16.mxu0 0
        %3525 = vmatpush1.bf16.msra.mxu0 0
        %3526 = vmatprep.mubr.bf16.mxu0 0
        %3527 = vmatmul.mubr.bf16.gmra.mrb[0].mxu0 %v1454
        %v3528 = vpop.f32.mrb[0].mxu0
        %v3529 = vadd.f32 0.0, %v3528
        %v3530 = vpop.f32.mrb[0].mxu0
        %v3531 = vpop.f32.mrb[0].mxu0
        %v3532 = vadd.f32 0.0, %v3531
        %v3533 = vpop.f32.mrb[0].mxu0
        %3534 = vmatprep.mubr.bf16.mxu0 0
        %3535 = vmatmul.mubr.bf16.gmra.mrb[0].mxu0 %v1457
        %v3536 = vpop.f32.mrb[0].mxu0
        %v3537 = vadd.f32 0.0, %v3536
        %v3538 = vpop.f32.mrb[0].mxu0
        %v3539 = vpop.f32.mrb[0].mxu0
        %v3540 = vadd.f32 0.0, %v3539
        %v3541 = vpop.f32.mrb[0].mxu0
        %3542 = vmatprep.mubr.bf16.mxu0 0
        %3543 = vmatmul.mubr.bf16.gmra.mrb[0].mxu0 %v1460
        %v3544 = vpop.f32.mrb[0].mxu0
        %v3545 = vadd.f32 0.0, %v3544
        %v3546 = vpop.f32.mrb[0].mxu0
        %v3547 = vpop.f32.mrb[0].mxu0
        %v3548 = vadd.f32 0.0, %v3547
        %v3549 = vpop.f32.mrb[0].mxu0
        %3550 = vmatprep.mubr.bf16.mxu0 0
        %3551 = vmatmul.mubr.bf16.gmra.mrb[0].mxu0 %v1463
        %v3552 = vpop.f32.mrb[0].mxu0
        %v3553 = vadd.f32 0.0, %v3552
        %v3554 = vpop.f32.mrb[0].mxu0
        %v3555 = vpop.f32.mrb[0].mxu0
        %v3556 = vadd.f32 0.0, %v3555
        %v3557 = vpop.f32.mrb[0].mxu0
        %3558 = vmatprep.mubr.bf16.mxu0 0
        %3559 = vmatmul.mubr.bf16.gmra.mrb[0].mxu0 %v1466
        %v3560 = vpop.f32.mrb[0].mxu0
        %v3561 = vadd.f32 0.0, %v3560
        %v3562 = vpop.f32.mrb[0].mxu0
        %v3563 = vpop.f32.mrb[0].mxu0
        %v3564 = vadd.f32 0.0, %v3563
        %v3565 = vpop.f32.mrb[0].mxu0
        %3566 = vmatprep.mubr.bf16.mxu0 0
        %3567 = vmatmul.mubr.bf16.gmra.mrb[0].mxu0 %v1469
        %v3568 = vpop.f32.mrb[0].mxu0
        %v3569 = vadd.f32 0.0, %v3568
        %v3570 = vpop.f32.mrb[0].mxu0
        %v3571 = vpop.f32.mrb[0].mxu0
        %v3572 = vadd.f32 0.0, %v3571
        %v3573 = vpop.f32.mrb[0].mxu0
        %3574 = vmatprep.mubr.bf16.mxu0 0
        %3575 = vmatmul.mubr.bf16.gmra.mrb[0].mxu0 %v1472
        %v3576 = vpop.f32.mrb[0].mxu0
        %v3577 = vadd.f32 0.0, %v3576
        %v3578 = vpop.f32.mrb[0].mxu0
        %v3579 = vpop.f32.mrb[0].mxu0
        %v3580 = vadd.f32 0.0, %v3579
        %v3581 = vpop.f32.mrb[0].mxu0
        %3582 = vmatprep.mubr.bf16.mxu0 0
        %3583 = vmatmul.mubr.bf16.gmra.mrb[0].mxu0 %v1475
        %v3584 = vpop.f32.mrb[0].mxu0
        %v3585 = vadd.f32 0.0, %v3584
        %v3586 = vpop.f32.mrb[0].mxu0
        %v3587 = vpop.f32.mrb[0].mxu0
        %v3588 = vadd.f32 0.0, %v3587
        %v3589 = vpop.f32.mrb[0].mxu0
        %3590 = vmatprep.mubr.bf16.mxu0 0
        %3591 = vmatmul.mubr.bf16.gmra.mrb[0].mxu0 %v1478
        %v3592 = vpop.f32.mrb[0].mxu0
        %v3593 = vadd.f32 0.0, %v3592
        %v3594 = vpop.f32.mrb[0].mxu0
        %v3595 = vpop.f32.mrb[0].mxu0
        %v3596 = vadd.f32 0.0, %v3595
        %v3597 = vpop.f32.mrb[0].mxu0
        %3598 = vmatprep.mubr.bf16.mxu0 0
        %3599 = vmatmul.mubr.bf16.gmra.mrb[0].mxu0 %v1481
        %v3600 = vpop.f32.mrb[0].mxu0
        %v3601 = vadd.f32 0.0, %v3600
        %v3602 = vpop.f32.mrb[0].mxu0
        %v3603 = vpop.f32.mrb[0].mxu0
        %v3604 = vadd.f32 0.0, %v3603
        %v3605 = vpop.f32.mrb[0].mxu0
        %3606 = vmatprep.mubr.bf16.mxu0 0
        %3607 = vmatmul.mubr.bf16.gmra.mrb[0].mxu0 %v1484
        %v3608 = vpop.f32.mrb[0].mxu0
        %v3609 = vadd.f32 0.0, %v3608
        %v3610 = vpop.f32.mrb[0].mxu0
        %v3611 = vpop.f32.mrb[0].mxu0
        %v3612 = vadd.f32 0.0, %v3611
        %v3613 = vpop.f32.mrb[0].mxu0
        %3614 = vmatprep.mubr.bf16.mxu0 0
        %3615 = vmatmul.mubr.bf16.gmra.mrb[0].mxu0 %v1487
        %v3616 = vpop.f32.mrb[0].mxu0
        %v3617 = vadd.f32 0.0, %v3616
        %v3618 = vpop.f32.mrb[0].mxu0
        %v3619 = vpop.f32.mrb[0].mxu0
        %v3620 = vadd.f32 0.0, %v3619
        %v3621 = vpop.f32.mrb[0].mxu0
        %3622 = vmatprep.mubr.bf16.mxu0 0
        %3623 = vmatmul.mubr.bf16.gmra.mrb[0].mxu0 %v1490
        %v3624 = vpop.f32.mrb[0].mxu0
        %v3625 = vadd.f32 0.0, %v3624
        %v3626 = vpop.f32.mrb[0].mxu0
        %v3627 = vpop.f32.mrb[0].mxu0
        %v3628 = vadd.f32 0.0, %v3627
        %v3629 = vpop.f32.mrb[0].mxu0
        %3630 = vmatprep.mubr.bf16.mxu0 0
        %3631 = vmatmul.mubr.bf16.gmra.mrb[0].mxu0 %v1493
        %v3632 = vpop.f32.mrb[0].mxu0
        %v3633 = vadd.f32 0.0, %v3632
        %v3634 = vpop.f32.mrb[0].mxu0
        %v3635 = vpop.f32.mrb[0].mxu0
        %v3636 = vadd.f32 0.0, %v3635
        %v3637 = vpop.f32.mrb[0].mxu0
        %3638 = vmatprep.mubr.bf16.mxu0 0
        %3639 = vmatmul.mubr.bf16.gmra.mrb[0].mxu0 %v2654
        %v3640 = vpop.f32.mrb[0].mxu0
        %v3641 = vadd.f32 0.0, %v3640
        %v3642 = vpop.f32.mrb[0].mxu0
        %v3643 = vpop.f32.mrb[0].mxu0
        %v3644 = vadd.f32 0.0, %v3643
        %v3645 = vpop.f32.mrb[0].mxu0
        %3646 = vmatprep.mubr.bf16.mxu0 0
        %3647 = vmatmul.mubr.bf16.gmra.mrb[0].mxu0 %v3489
        %v3648 = vpop.f32.mrb[0].mxu0
        %v3649 = vadd.f32 0.0, %v3648
        %v3650 = vpop.f32.mrb[0].mxu0
        %v3651 = vpop.f32.mrb[0].mxu0
        %v3652 = vadd.f32 0.0, %v3651
        %v3653 = vpop.f32.mrb[0].mxu0
        %3654 = vdwg.mxu0
        %v3655 = vld [vmem:[%s297] sm:$0xff]
        %v3656 = vld [vmem:[%s297 + $0x8] sm:$0xff]
        %v3657 = vld [vmem:[%s297 + $0x10] sm:$0xff]
        %v3658 = vld [vmem:[%s297 + $0x18] sm:$0xff]
        %v3659 = vld [vmem:[%s297 + $0x20] sm:$0xff]
        %v3660 = vld [vmem:[%s297 + $0x28] sm:$0xff]
        %v3661 = vld [vmem:[%s297 + $0x30] sm:$0xff]
        %v3662 = vld [vmem:[%s297 + $0x38] sm:$0xff]
        %v3663 = vld [vmem:[%s297 + $0x40] sm:$0xff]
        %v3664 = vld [vmem:[%s297 + $0x48] sm:$0xff]
        %v3665 = vld [vmem:[%s297 + $0x50] sm:$0xff]
        %v3666 = vld [vmem:[%s297 + $0x58] sm:$0xff]
        %v3667 = vld [vmem:[%s297 + $0x60] sm:$0xff]
        %v3668 = vld [vmem:[%s297 + $0x68] sm:$0xff]
        %v3669 = vld [vmem:[%s297 + $0x70] sm:$0xff]
        %v3670 = vld [vmem:[%s297 + $0x78] sm:$0xff]
        %v3671 = vld [vmem:[%s297 + $0x80] sm:$0xff]
        %v3672 = vld [vmem:[%s297 + $0x88] sm:$0xff]
        %v3673 = vld [vmem:[%s297 + $0x90] sm:$0xff]
        %v3674 = vld [vmem:[%s297 + $0x98] sm:$0xff]
        %v3675 = vld [vmem:[%s297 + $0xa0] sm:$0xff]
        %v3676 = vld [vmem:[%s297 + $0xa8] sm:$0xff]
        %v3677 = vld [vmem:[%s297 + $0xb0] sm:$0xff]
        %v3678 = vld [vmem:[%s297 + $0xb8] sm:$0xff]
        %v3679 = vld [vmem:[%s297 + $0xc0] sm:$0xff]
        %v3680 = vld [vmem:[%s297 + $0xc8] sm:$0xff]
        %v3681 = vld [vmem:[%s297 + $0xd0] sm:$0xff]
        %v3682 = vld [vmem:[%s297 + $0xd8] sm:$0xff]
        %v3683 = vld [vmem:[%s297 + $0xe0] sm:$0xff]
        %v3684 = vld [vmem:[%s297 + $0xe8] sm:$0xff]
        %v3685 = vld [vmem:[%s297 + $0xf0] sm:$0xff]
        %v3686 = vld [vmem:[%s297 + $0xf8] sm:$0xff]
        %v3687 = vadd.f32 %v3655, %v3529
        %v3688 = vadd.f32 %v3656, %v3532
        %v3689 = vadd.f32 %v3657, %v3537
        %v3690 = vadd.f32 %v3658, %v3540
        %v3691 = vadd.f32 %v3659, %v3545
        %v3692 = vadd.f32 %v3660, %v3548
        %v3693 = vadd.f32 %v3661, %v3553
        %v3694 = vadd.f32 %v3662, %v3556
        %v3695 = vadd.f32 %v3663, %v3561
        %v3696 = vadd.f32 %v3664, %v3564
        %v3697 = vadd.f32 %v3665, %v3569
        %v3698 = vadd.f32 %v3666, %v3572
        %v3699 = vadd.f32 %v3667, %v3577
        %v3700 = vadd.f32 %v3668, %v3580
        %v3701 = vadd.f32 %v3669, %v3585
        %v3702 = vadd.f32 %v3670, %v3588
        %v3703 = vadd.f32 %v3671, %v3593
        %v3704 = vadd.f32 %v3672, %v3596
        %v3705 = vadd.f32 %v3673, %v3601
        %v3706 = vadd.f32 %v3674, %v3604
        %v3707 = vadd.f32 %v3675, %v3609
        %v3708 = vadd.f32 %v3676, %v3612
        %v3709 = vadd.f32 %v3677, %v3617
        %v3710 = vadd.f32 %v3678, %v3620
        %v3711 = vadd.f32 %v3679, %v3625
        %v3712 = vadd.f32 %v3680, %v3628
        %v3713 = vadd.f32 %v3681, %v3633
        %v3714 = vadd.f32 %v3682, %v3636
        %v3715 = vadd.f32 %v3683, %v3641
        %v3716 = vadd.f32 %v3684, %v3644
        %v3717 = vadd.f32 %v3685, %v3649
        %v3718 = vadd.f32 %v3686, %v3652
        %3719 = vst.msk [vmem:[%s297] sm:$0xff] %vm1660, %v3687
        %3720 = vst.msk [vmem:[%s297 + $0x8] sm:$0xff] %vm1660, %v3688
        %3721 = vst.msk [vmem:[%s297 + $0x10] sm:$0xff] %vm1660, %v3689
        %3722 = vst.msk [vmem:[%s297 + $0x18] sm:$0xff] %vm1660, %v3690
        %3723 = vst.msk [vmem:[%s297 + $0x20] sm:$0xff] %vm1660, %v3691
        %3724 = vst.msk [vmem:[%s297 + $0x28] sm:$0xff] %vm1660, %v3692
        %3725 = vst.msk [vmem:[%s297 + $0x30] sm:$0xff] %vm1660, %v3693
        %3726 = vst.msk [vmem:[%s297 + $0x38] sm:$0xff] %vm1660, %v3694
        %3727 = vst.msk [vmem:[%s297 + $0x40] sm:$0xff] %vm1660, %v3695
        %3728 = vst.msk [vmem:[%s297 + $0x48] sm:$0xff] %vm1660, %v3696
        %3729 = vst.msk [vmem:[%s297 + $0x50] sm:$0xff] %vm1660, %v3697
        %3730 = vst.msk [vmem:[%s297 + $0x58] sm:$0xff] %vm1660, %v3698
        %3731 = vst.msk [vmem:[%s297 + $0x60] sm:$0xff] %vm1660, %v3699
        %3732 = vst.msk [vmem:[%s297 + $0x68] sm:$0xff] %vm1660, %v3700
        %3733 = vst.msk [vmem:[%s297 + $0x70] sm:$0xff] %vm1660, %v3701
        %3734 = vst.msk [vmem:[%s297 + $0x78] sm:$0xff] %vm1660, %v3702
        %3735 = vst.msk [vmem:[%s297 + $0x80] sm:$0xff] %vm1660, %v3703
        %3736 = vst.msk [vmem:[%s297 + $0x88] sm:$0xff] %vm1660, %v3704
        %3737 = vst.msk [vmem:[%s297 + $0x90] sm:$0xff] %vm1660, %v3705
        %3738 = vst.msk [vmem:[%s297 + $0x98] sm:$0xff] %vm1660, %v3706
        %3739 = vst.msk [vmem:[%s297 + $0xa0] sm:$0xff] %vm1660, %v3707
        %3740 = vst.msk [vmem:[%s297 + $0xa8] sm:$0xff] %vm1660, %v3708
        %3741 = vst.msk [vmem:[%s297 + $0xb0] sm:$0xff] %vm1660, %v3709
        %3742 = vst.msk [vmem:[%s297 + $0xb8] sm:$0xff] %vm1660, %v3710
        %3743 = vst.msk [vmem:[%s297 + $0xc0] sm:$0xff] %vm1660, %v3711
        %3744 = vst.msk [vmem:[%s297 + $0xc8] sm:$0xff] %vm1660, %v3712
        %3745 = vst.msk [vmem:[%s297 + $0xd0] sm:$0xff] %vm1660, %v3713
        %3746 = vst.msk [vmem:[%s297 + $0xd8] sm:$0xff] %vm1660, %v3714
        %3747 = vst.msk [vmem:[%s297 + $0xe0] sm:$0xff] %vm1660, %v3715
        %3748 = vst.msk [vmem:[%s297 + $0xe8] sm:$0xff] %vm1660, %v3716
        %3749 = vst.msk [vmem:[%s297 + $0xf0] sm:$0xff] %vm1660, %v3717
        %3750 = vst.msk [vmem:[%s297 + $0xf8] sm:$0xff] %vm1660, %v3718
        %s3751 = scalar_lea.vmem %s3, 14
        %v3752 = vld [vmem:[%s3751] sm:$0x3]
        %v3755 = vunpack.c.l.b16 %v334
        %v3756 = vunpack.c.l.b16 %v335
        %v3757 = vpack.c.b16 %v3755, %v2921
        %v3758 = vpack.c.b16 %v3756, %v3756
        %v3760 = vshll.u32 %v3757, 16
        %v3762 = vrot.slane %v3760, 1
        %v3763 = vsel %vm1778, %v2931, %v3762
        %v3764 = vshrl.u32 %v3757, 16
        %v3766 = vor.u32 %v3764, %v3762
        %v3768 = vshll.u32 %v3758, 16
        %v3770 = vrot.slane %v3768, 1
        %v3771 = vsel %vm1778, %v3766, %v3770
        %v3773 = vsel %vm1446, %v3763, 0
        %v3776 = vsel %vm1446, %v3771, 0
        %v3779 = vsel %vm1495, %v3752, 0
        %3781 = vmatprep.subr.bf16.mxu0 0
        %3782 = vmatpush1.bf16.msra.mxu0 %v3779
        %3783 = vmatprep.subr.bf16.mxu0 0
        %3784 = vmatpush1.bf16.msra.mxu0 0
        %3785 = vmatprep.subr.bf16.mxu0 0
        %3786 = vmatpush1.bf16.msra.mxu0 0
        %3787 = vmatprep.subr.bf16.mxu0 0
        %3788 = vmatpush1.bf16.msra.mxu0 0
        %3789 = vmatprep.subr.bf16.mxu0 0
        %3790 = vmatpush1.bf16.msra.mxu0 0
        %3791 = vmatprep.subr.bf16.mxu0 0
        %3792 = vmatpush1.bf16.msra.mxu0 0
        %3793 = vmatprep.subr.bf16.mxu0 0
        %3794 = vmatpush1.bf16.msra.mxu0 0
        %3795 = vmatprep.subr.bf16.mxu0 0
        %3796 = vmatpush1.bf16.msra.mxu0 0
        %3797 = vmatprep.subr.bf16.mxu0 0
        %3798 = vmatpush1.bf16.msra.mxu0 0
        %3799 = vmatprep.subr.bf16.mxu0 0
        %3800 = vmatpush1.bf16.msra.mxu0 0
        %3801 = vmatprep.subr.bf16.mxu0 0
        %3802 = vmatpush1.bf16.msra.mxu0 0
        %3803 = vmatprep.subr.bf16.mxu0 0
        %3804 = vmatpush1.bf16.msra.mxu0 0
        %3805 = vmatprep.subr.bf16.mxu0 0
        %3806 = vmatpush1.bf16.msra.mxu0 0
        %3807 = vmatprep.subr.bf16.mxu0 0
        %3808 = vmatpush1.bf16.msra.mxu0 0
        %3809 = vmatprep.subr.bf16.mxu0 0
        %3810 = vmatpush1.bf16.msra.mxu0 0
        %3811 = vmatprep.subr.bf16.mxu0 0
        %3812 = vmatpush1.bf16.msra.mxu0 0
        %3813 = vmatprep.mubr.bf16.mxu0 0
        %3814 = vmatmul.mubr.bf16.gmra.mrb[0].mxu0 %v1918
        %v3815 = vpop.f32.mrb[0].mxu0
        %v3816 = vadd.f32 0.0, %v3815
        %v3817 = vpop.f32.mrb[0].mxu0
        %v3818 = vpop.f32.mrb[0].mxu0
        %v3819 = vadd.f32 0.0, %v3818
        %v3820 = vpop.f32.mrb[0].mxu0
        %3821 = vmatprep.mubr.bf16.mxu0 0
        %3822 = vmatmul.mubr.bf16.gmra.mrb[0].mxu0 %v1921
        %v3823 = vpop.f32.mrb[0].mxu0
        %v3824 = vadd.f32 0.0, %v3823
        %v3825 = vpop.f32.mrb[0].mxu0
        %v3826 = vpop.f32.mrb[0].mxu0
        %v3827 = vadd.f32 0.0, %v3826
        %v3828 = vpop.f32.mrb[0].mxu0
        %3829 = vmatprep.mubr.bf16.mxu0 0
        %3830 = vmatmul.mubr.bf16.gmra.mrb[0].mxu0 %v1924
        %v3831 = vpop.f32.mrb[0].mxu0
        %v3832 = vadd.f32 0.0, %v3831
        %v3833 = vpop.f32.mrb[0].mxu0
        %v3834 = vpop.f32.mrb[0].mxu0
        %v3835 = vadd.f32 0.0, %v3834
        %v3836 = vpop.f32.mrb[0].mxu0
        %3837 = vmatprep.mubr.bf16.mxu0 0
        %3838 = vmatmul.mubr.bf16.gmra.mrb[0].mxu0 %v1927
        %v3839 = vpop.f32.mrb[0].mxu0
        %v3840 = vadd.f32 0.0, %v3839
        %v3841 = vpop.f32.mrb[0].mxu0
        %v3842 = vpop.f32.mrb[0].mxu0
        %v3843 = vadd.f32 0.0, %v3842
        %v3844 = vpop.f32.mrb[0].mxu0
        %3845 = vmatprep.mubr.bf16.mxu0 0
        %3846 = vmatmul.mubr.bf16.gmra.mrb[0].mxu0 %v1930
        %v3847 = vpop.f32.mrb[0].mxu0
        %v3848 = vadd.f32 0.0, %v3847
        %v3849 = vpop.f32.mrb[0].mxu0
        %v3850 = vpop.f32.mrb[0].mxu0
        %v3851 = vadd.f32 0.0, %v3850
        %v3852 = vpop.f32.mrb[0].mxu0
        %3853 = vmatprep.mubr.bf16.mxu0 0
        %3854 = vmatmul.mubr.bf16.gmra.mrb[0].mxu0 %v1933
        %v3855 = vpop.f32.mrb[0].mxu0
        %v3856 = vadd.f32 0.0, %v3855
        %v3857 = vpop.f32.mrb[0].mxu0
        %v3858 = vpop.f32.mrb[0].mxu0
        %v3859 = vadd.f32 0.0, %v3858
        %v3860 = vpop.f32.mrb[0].mxu0
        %3861 = vmatprep.mubr.bf16.mxu0 0
        %3862 = vmatmul.mubr.bf16.gmra.mrb[0].mxu0 %v1936
        %v3863 = vpop.f32.mrb[0].mxu0
        %v3864 = vadd.f32 0.0, %v3863
        %v3865 = vpop.f32.mrb[0].mxu0
        %v3866 = vpop.f32.mrb[0].mxu0
        %v3867 = vadd.f32 0.0, %v3866
        %v3868 = vpop.f32.mrb[0].mxu0
        %3869 = vmatprep.mubr.bf16.mxu0 0
        %3870 = vmatmul.mubr.bf16.gmra.mrb[0].mxu0 %v1939
        %v3871 = vpop.f32.mrb[0].mxu0
        %v3872 = vadd.f32 0.0, %v3871
        %v3873 = vpop.f32.mrb[0].mxu0
        %v3874 = vpop.f32.mrb[0].mxu0
        %v3875 = vadd.f32 0.0, %v3874
        %v3876 = vpop.f32.mrb[0].mxu0
        %3877 = vmatprep.mubr.bf16.mxu0 0
        %3878 = vmatmul.mubr.bf16.gmra.mrb[0].mxu0 %v1942
        %v3879 = vpop.f32.mrb[0].mxu0
        %v3880 = vadd.f32 0.0, %v3879
        %v3881 = vpop.f32.mrb[0].mxu0
        %v3882 = vpop.f32.mrb[0].mxu0
        %v3883 = vadd.f32 0.0, %v3882
        %v3884 = vpop.f32.mrb[0].mxu0
        %3885 = vmatprep.mubr.bf16.mxu0 0
        %3886 = vmatmul.mubr.bf16.gmra.mrb[0].mxu0 %v1945
        %v3887 = vpop.f32.mrb[0].mxu0
        %v3888 = vadd.f32 0.0, %v3887
        %v3889 = vpop.f32.mrb[0].mxu0
        %v3890 = vpop.f32.mrb[0].mxu0
        %v3891 = vadd.f32 0.0, %v3890
        %v3892 = vpop.f32.mrb[0].mxu0
        %3893 = vmatprep.mubr.bf16.mxu0 0
        %3894 = vmatmul.mubr.bf16.gmra.mrb[0].mxu0 %v1948
        %v3895 = vpop.f32.mrb[0].mxu0
        %v3896 = vadd.f32 0.0, %v3895
        %v3897 = vpop.f32.mrb[0].mxu0
        %v3898 = vpop.f32.mrb[0].mxu0
        %v3899 = vadd.f32 0.0, %v3898
        %v3900 = vpop.f32.mrb[0].mxu0
        %3901 = vmatprep.mubr.bf16.mxu0 0
        %3902 = vmatmul.mubr.bf16.gmra.mrb[0].mxu0 %v1951
        %v3903 = vpop.f32.mrb[0].mxu0
        %v3904 = vadd.f32 0.0, %v3903
        %v3905 = vpop.f32.mrb[0].mxu0
        %v3906 = vpop.f32.mrb[0].mxu0
        %v3907 = vadd.f32 0.0, %v3906
        %v3908 = vpop.f32.mrb[0].mxu0
        %3909 = vmatprep.mubr.bf16.mxu0 0
        %3910 = vmatmul.mubr.bf16.gmra.mrb[0].mxu0 %v1954
        %v3911 = vpop.f32.mrb[0].mxu0
        %v3912 = vadd.f32 0.0, %v3911
        %v3913 = vpop.f32.mrb[0].mxu0
        %v3914 = vpop.f32.mrb[0].mxu0
        %v3915 = vadd.f32 0.0, %v3914
        %v3916 = vpop.f32.mrb[0].mxu0
        %3917 = vmatprep.mubr.bf16.mxu0 0
        %3918 = vmatmul.mubr.bf16.gmra.mrb[0].mxu0 %v2938
        %v3919 = vpop.f32.mrb[0].mxu0
        %v3920 = vadd.f32 0.0, %v3919
        %v3921 = vpop.f32.mrb[0].mxu0
        %v3922 = vpop.f32.mrb[0].mxu0
        %v3923 = vadd.f32 0.0, %v3922
        %v3924 = vpop.f32.mrb[0].mxu0
        %3925 = vmatprep.mubr.bf16.mxu0 0
        %3926 = vmatmul.mubr.bf16.gmra.mrb[0].mxu0 %v3773
        %v3927 = vpop.f32.mrb[0].mxu0
        %v3928 = vadd.f32 0.0, %v3927
        %v3929 = vpop.f32.mrb[0].mxu0
        %v3930 = vpop.f32.mrb[0].mxu0
        %v3931 = vadd.f32 0.0, %v3930
        %v3932 = vpop.f32.mrb[0].mxu0
        %3933 = vmatprep.mubr.bf16.mxu0 0
        %3934 = vmatmul.mubr.bf16.gmra.mrb[0].mxu0 %v3776
        %v3935 = vpop.f32.mrb[0].mxu0
        %v3936 = vadd.f32 0.0, %v3935
        %v3937 = vpop.f32.mrb[0].mxu0
        %v3938 = vpop.f32.mrb[0].mxu0
        %v3939 = vadd.f32 0.0, %v3938
        %v3940 = vpop.f32.mrb[0].mxu0
        %3941 = vdwg.mxu0
        %v3942 = vld [vmem:[%s297] sm:$0xff]
        %v3943 = vld [vmem:[%s297 + $0x8] sm:$0xff]
        %v3944 = vld [vmem:[%s297 + $0x10] sm:$0xff]
        %v3945 = vld [vmem:[%s297 + $0x18] sm:$0xff]
        %v3946 = vld [vmem:[%s297 + $0x20] sm:$0xff]
        %v3947 = vld [vmem:[%s297 + $0x28] sm:$0xff]
        %v3948 = vld [vmem:[%s297 + $0x30] sm:$0xff]
        %v3949 = vld [vmem:[%s297 + $0x38] sm:$0xff]
        %v3950 = vld [vmem:[%s297 + $0x40] sm:$0xff]
        %v3951 = vld [vmem:[%s297 + $0x48] sm:$0xff]
        %v3952 = vld [vmem:[%s297 + $0x50] sm:$0xff]
        %v3953 = vld [vmem:[%s297 + $0x58] sm:$0xff]
        %v3954 = vld [vmem:[%s297 + $0x60] sm:$0xff]
        %v3955 = vld [vmem:[%s297 + $0x68] sm:$0xff]
        %v3956 = vld [vmem:[%s297 + $0x70] sm:$0xff]
        %v3957 = vld [vmem:[%s297 + $0x78] sm:$0xff]
        %v3958 = vld [vmem:[%s297 + $0x80] sm:$0xff]
        %v3959 = vld [vmem:[%s297 + $0x88] sm:$0xff]
        %v3960 = vld [vmem:[%s297 + $0x90] sm:$0xff]
        %v3961 = vld [vmem:[%s297 + $0x98] sm:$0xff]
        %v3962 = vld [vmem:[%s297 + $0xa0] sm:$0xff]
        %v3963 = vld [vmem:[%s297 + $0xa8] sm:$0xff]
        %v3964 = vld [vmem:[%s297 + $0xb0] sm:$0xff]
        %v3965 = vld [vmem:[%s297 + $0xb8] sm:$0xff]
        %v3966 = vld [vmem:[%s297 + $0xc0] sm:$0xff]
        %v3967 = vld [vmem:[%s297 + $0xc8] sm:$0xff]
        %v3968 = vld [vmem:[%s297 + $0xd0] sm:$0xff]
        %v3969 = vld [vmem:[%s297 + $0xd8] sm:$0xff]
        %v3970 = vld [vmem:[%s297 + $0xe0] sm:$0xff]
        %v3971 = vld [vmem:[%s297 + $0xe8] sm:$0xff]
        %v3972 = vld [vmem:[%s297 + $0xf0] sm:$0xff]
        %v3973 = vld [vmem:[%s297 + $0xf8] sm:$0xff]
        %v3974 = vadd.f32 %v3942, %v3816
        %v3975 = vadd.f32 %v3943, %v3819
        %v3976 = vadd.f32 %v3944, %v3824
        %v3977 = vadd.f32 %v3945, %v3827
        %v3978 = vadd.f32 %v3946, %v3832
        %v3979 = vadd.f32 %v3947, %v3835
        %v3980 = vadd.f32 %v3948, %v3840
        %v3981 = vadd.f32 %v3949, %v3843
        %v3982 = vadd.f32 %v3950, %v3848
        %v3983 = vadd.f32 %v3951, %v3851
        %v3984 = vadd.f32 %v3952, %v3856
        %v3985 = vadd.f32 %v3953, %v3859
        %v3986 = vadd.f32 %v3954, %v3864
        %v3987 = vadd.f32 %v3955, %v3867
        %v3988 = vadd.f32 %v3956, %v3872
        %v3989 = vadd.f32 %v3957, %v3875
        %v3990 = vadd.f32 %v3958, %v3880
        %v3991 = vadd.f32 %v3959, %v3883
        %v3992 = vadd.f32 %v3960, %v3888
        %v3993 = vadd.f32 %v3961, %v3891
        %v3994 = vadd.f32 %v3962, %v3896
        %v3995 = vadd.f32 %v3963, %v3899
        %v3996 = vadd.f32 %v3964, %v3904
        %v3997 = vadd.f32 %v3965, %v3907
        %v3998 = vadd.f32 %v3966, %v3912
        %v3999 = vadd.f32 %v3967, %v3915
        %v4000 = vadd.f32 %v3968, %v3920
        %v4001 = vadd.f32 %v3969, %v3923
        %v4002 = vadd.f32 %v3970, %v3928
        %v4003 = vadd.f32 %v3971, %v3931
        %v4004 = vadd.f32 %v3972, %v3936
        %v4005 = vadd.f32 %v3973, %v3939
        %4006 = vst.msk [vmem:[%s297] sm:$0xff] %vm1660, %v3974
        %4007 = vst.msk [vmem:[%s297 + $0x8] sm:$0xff] %vm1660, %v3975
        %4008 = vst.msk [vmem:[%s297 + $0x10] sm:$0xff] %vm1660, %v3976
        %4009 = vst.msk [vmem:[%s297 + $0x18] sm:$0xff] %vm1660, %v3977
        %4010 = vst.msk [vmem:[%s297 + $0x20] sm:$0xff] %vm1660, %v3978
        %4011 = vst.msk [vmem:[%s297 + $0x28] sm:$0xff] %vm1660, %v3979
        %4012 = vst.msk [vmem:[%s297 + $0x30] sm:$0xff] %vm1660, %v3980
        %4013 = vst.msk [vmem:[%s297 + $0x38] sm:$0xff] %vm1660, %v3981
        %4014 = vst.msk [vmem:[%s297 + $0x40] sm:$0xff] %vm1660, %v3982
        %4015 = vst.msk [vmem:[%s297 + $0x48] sm:$0xff] %vm1660, %v3983
        %4016 = vst.msk [vmem:[%s297 + $0x50] sm:$0xff] %vm1660, %v3984
        %4017 = vst.msk [vmem:[%s297 + $0x58] sm:$0xff] %vm1660, %v3985
        %4018 = vst.msk [vmem:[%s297 + $0x60] sm:$0xff] %vm1660, %v3986
        %4019 = vst.msk [vmem:[%s297 + $0x68] sm:$0xff] %vm1660, %v3987
        %4020 = vst.msk [vmem:[%s297 + $0x70] sm:$0xff] %vm1660, %v3988
        %4021 = vst.msk [vmem:[%s297 + $0x78] sm:$0xff] %vm1660, %v3989
        %4022 = vst.msk [vmem:[%s297 + $0x80] sm:$0xff] %vm1660, %v3990
        %4023 = vst.msk [vmem:[%s297 + $0x88] sm:$0xff] %vm1660, %v3991
        %4024 = vst.msk [vmem:[%s297 + $0x90] sm:$0xff] %vm1660, %v3992
        %4025 = vst.msk [vmem:[%s297 + $0x98] sm:$0xff] %vm1660, %v3993
        %4026 = vst.msk [vmem:[%s297 + $0xa0] sm:$0xff] %vm1660, %v3994
        %4027 = vst.msk [vmem:[%s297 + $0xa8] sm:$0xff] %vm1660, %v3995
        %4028 = vst.msk [vmem:[%s297 + $0xb0] sm:$0xff] %vm1660, %v3996
        %4029 = vst.msk [vmem:[%s297 + $0xb8] sm:$0xff] %vm1660, %v3997
        %4030 = vst.msk [vmem:[%s297 + $0xc0] sm:$0xff] %vm1660, %v3998
        %4031 = vst.msk [vmem:[%s297 + $0xc8] sm:$0xff] %vm1660, %v3999
        %4032 = vst.msk [vmem:[%s297 + $0xd0] sm:$0xff] %vm1660, %v4000
        %4033 = vst.msk [vmem:[%s297 + $0xd8] sm:$0xff] %vm1660, %v4001
        %4034 = vst.msk [vmem:[%s297 + $0xe0] sm:$0xff] %vm1660, %v4002
        %4035 = vst.msk [vmem:[%s297 + $0xe8] sm:$0xff] %vm1660, %v4003
        %4036 = vst.msk [vmem:[%s297 + $0xf0] sm:$0xff] %vm1660, %v4004
        %4037 = vst.msk [vmem:[%s297 + $0xf8] sm:$0xff] %vm1660, %v4005
        %s4038 = scalar_lea.vmem %s3, 16
        %v4039 = vld [vmem:[%s4038] sm:$0x3]
        %v4042 = vunpack.c.l.b16 %v1356
        %v4043 = vunpack.c.l.b16 %v1357
        %v4044 = vpack.c.b16 %v4042, %v3208
        %v4045 = vpack.c.b16 %v4043, %v4043
        %v4046 = vrot.slane %v4044, 1
        %v4047 = vsel %vm2304, %v3211, %v4046
        %v4048 = vrot.slane %v4045, 1
        %v4049 = vsel %vm2304, %v4046, %v4048
        %v4051 = vsel %vm1446, %v4047, 0
        %v4054 = vsel %vm1446, %v4049, 0
        %v4057 = vsel %vm1495, %v4039, 0
        %4059 = vmatprep.subr.bf16.mxu0 0
        %4060 = vmatpush1.bf16.msra.mxu0 %v4057
        %4061 = vmatprep.subr.bf16.mxu0 0
        %4062 = vmatpush1.bf16.msra.mxu0 0
        %4063 = vmatprep.subr.bf16.mxu0 0
        %4064 = vmatpush1.bf16.msra.mxu0 0
        %4065 = vmatprep.subr.bf16.mxu0 0
        %4066 = vmatpush1.bf16.msra.mxu0 0
        %4067 = vmatprep.subr.bf16.mxu0 0
        %4068 = vmatpush1.bf16.msra.mxu0 0
        %4069 = vmatprep.subr.bf16.mxu0 0
        %4070 = vmatpush1.bf16.msra.mxu0 0
        %4071 = vmatprep.subr.bf16.mxu0 0
        %4072 = vmatpush1.bf16.msra.mxu0 0
        %4073 = vmatprep.subr.bf16.mxu0 0
        %4074 = vmatpush1.bf16.msra.mxu0 0
        %4075 = vmatprep.subr.bf16.mxu0 0
        %4076 = vmatpush1.bf16.msra.mxu0 0
        %4077 = vmatprep.subr.bf16.mxu0 0
        %4078 = vmatpush1.bf16.msra.mxu0 0
        %4079 = vmatprep.subr.bf16.mxu0 0
        %4080 = vmatpush1.bf16.msra.mxu0 0
        %4081 = vmatprep.subr.bf16.mxu0 0
        %4082 = vmatpush1.bf16.msra.mxu0 0
        %4083 = vmatprep.subr.bf16.mxu0 0
        %4084 = vmatpush1.bf16.msra.mxu0 0
        %4085 = vmatprep.subr.bf16.mxu0 0
        %4086 = vmatpush1.bf16.msra.mxu0 0
        %4087 = vmatprep.subr.bf16.mxu0 0
        %4088 = vmatpush1.bf16.msra.mxu0 0
        %4089 = vmatprep.subr.bf16.mxu0 0
        %4090 = vmatpush1.bf16.msra.mxu0 0
        %4091 = vmatprep.mubr.bf16.mxu0 0
        %4092 = vmatmul.mubr.bf16.gmra.mrb[0].mxu0 %v2345
        %v4093 = vpop.f32.mrb[0].mxu0
        %v4094 = vadd.f32 0.0, %v4093
        %v4095 = vpop.f32.mrb[0].mxu0
        %v4096 = vpop.f32.mrb[0].mxu0
        %v4097 = vadd.f32 0.0, %v4096
        %v4098 = vpop.f32.mrb[0].mxu0
        %4099 = vmatprep.mubr.bf16.mxu0 0
        %4100 = vmatmul.mubr.bf16.gmra.mrb[0].mxu0 %v2348
        %v4101 = vpop.f32.mrb[0].mxu0
        %v4102 = vadd.f32 0.0, %v4101
        %v4103 = vpop.f32.mrb[0].mxu0
        %v4104 = vpop.f32.mrb[0].mxu0
        %v4105 = vadd.f32 0.0, %v4104
        %v4106 = vpop.f32.mrb[0].mxu0
        %4107 = vmatprep.mubr.bf16.mxu0 0
        %4108 = vmatmul.mubr.bf16.gmra.mrb[0].mxu0 %v2351
        %v4109 = vpop.f32.mrb[0].mxu0
        %v4110 = vadd.f32 0.0, %v4109
        %v4111 = vpop.f32.mrb[0].mxu0
        %v4112 = vpop.f32.mrb[0].mxu0
        %v4113 = vadd.f32 0.0, %v4112
        %v4114 = vpop.f32.mrb[0].mxu0
        %4115 = vmatprep.mubr.bf16.mxu0 0
        %4116 = vmatmul.mubr.bf16.gmra.mrb[0].mxu0 %v2354
        %v4117 = vpop.f32.mrb[0].mxu0
        %v4118 = vadd.f32 0.0, %v4117
        %v4119 = vpop.f32.mrb[0].mxu0
        %v4120 = vpop.f32.mrb[0].mxu0
        %v4121 = vadd.f32 0.0, %v4120
        %v4122 = vpop.f32.mrb[0].mxu0
        %4123 = vmatprep.mubr.bf16.mxu0 0
        %4124 = vmatmul.mubr.bf16.gmra.mrb[0].mxu0 %v2357
        %v4125 = vpop.f32.mrb[0].mxu0
        %v4126 = vadd.f32 0.0, %v4125
        %v4127 = vpop.f32.mrb[0].mxu0
        %v4128 = vpop.f32.mrb[0].mxu0
        %v4129 = vadd.f32 0.0, %v4128
        %v4130 = vpop.f32.mrb[0].mxu0
        %4131 = vmatprep.mubr.bf16.mxu0 0
        %4132 = vmatmul.mubr.bf16.gmra.mrb[0].mxu0 %v2360
        %v4133 = vpop.f32.mrb[0].mxu0
        %v4134 = vadd.f32 0.0, %v4133
        %v4135 = vpop.f32.mrb[0].mxu0
        %v4136 = vpop.f32.mrb[0].mxu0
        %v4137 = vadd.f32 0.0, %v4136
        %v4138 = vpop.f32.mrb[0].mxu0
        %4139 = vmatprep.mubr.bf16.mxu0 0
        %4140 = vmatmul.mubr.bf16.gmra.mrb[0].mxu0 %v2363
        %v4141 = vpop.f32.mrb[0].mxu0
        %v4142 = vadd.f32 0.0, %v4141
        %v4143 = vpop.f32.mrb[0].mxu0
        %v4144 = vpop.f32.mrb[0].mxu0
        %v4145 = vadd.f32 0.0, %v4144
        %v4146 = vpop.f32.mrb[0].mxu0
        %4147 = vmatprep.mubr.bf16.mxu0 0
        %4148 = vmatmul.mubr.bf16.gmra.mrb[0].mxu0 %v2366
        %v4149 = vpop.f32.mrb[0].mxu0
        %v4150 = vadd.f32 0.0, %v4149
        %v4151 = vpop.f32.mrb[0].mxu0
        %v4152 = vpop.f32.mrb[0].mxu0
        %v4153 = vadd.f32 0.0, %v4152
        %v4154 = vpop.f32.mrb[0].mxu0
        %4155 = vmatprep.mubr.bf16.mxu0 0
        %4156 = vmatmul.mubr.bf16.gmra.mrb[0].mxu0 %v2369
        %v4157 = vpop.f32.mrb[0].mxu0
        %v4158 = vadd.f32 0.0, %v4157
        %v4159 = vpop.f32.mrb[0].mxu0
        %v4160 = vpop.f32.mrb[0].mxu0
        %v4161 = vadd.f32 0.0, %v4160
        %v4162 = vpop.f32.mrb[0].mxu0
        %4163 = vmatprep.mubr.bf16.mxu0 0
        %4164 = vmatmul.mubr.bf16.gmra.mrb[0].mxu0 %v2372
        %v4165 = vpop.f32.mrb[0].mxu0
        %v4166 = vadd.f32 0.0, %v4165
        %v4167 = vpop.f32.mrb[0].mxu0
        %v4168 = vpop.f32.mrb[0].mxu0
        %v4169 = vadd.f32 0.0, %v4168
        %v4170 = vpop.f32.mrb[0].mxu0
        %4171 = vmatprep.mubr.bf16.mxu0 0
        %4172 = vmatmul.mubr.bf16.gmra.mrb[0].mxu0 %v2375
        %v4173 = vpop.f32.mrb[0].mxu0
        %v4174 = vadd.f32 0.0, %v4173
        %v4175 = vpop.f32.mrb[0].mxu0
        %v4176 = vpop.f32.mrb[0].mxu0
        %v4177 = vadd.f32 0.0, %v4176
        %v4178 = vpop.f32.mrb[0].mxu0
        %4179 = vmatprep.mubr.bf16.mxu0 0
        %4180 = vmatmul.mubr.bf16.gmra.mrb[0].mxu0 %v2378
        %v4181 = vpop.f32.mrb[0].mxu0
        %v4182 = vadd.f32 0.0, %v4181
        %v4183 = vpop.f32.mrb[0].mxu0
        %v4184 = vpop.f32.mrb[0].mxu0
        %v4185 = vadd.f32 0.0, %v4184
        %v4186 = vpop.f32.mrb[0].mxu0
        %4187 = vmatprep.mubr.bf16.mxu0 0
        %4188 = vmatmul.mubr.bf16.gmra.mrb[0].mxu0 %v2381
        %v4189 = vpop.f32.mrb[0].mxu0
        %v4190 = vadd.f32 0.0, %v4189
        %v4191 = vpop.f32.mrb[0].mxu0
        %v4192 = vpop.f32.mrb[0].mxu0
        %v4193 = vadd.f32 0.0, %v4192
        %v4194 = vpop.f32.mrb[0].mxu0
        %4195 = vmatprep.mubr.bf16.mxu0 0
        %4196 = vmatmul.mubr.bf16.gmra.mrb[0].mxu0 %v3216
        %v4197 = vpop.f32.mrb[0].mxu0
        %v4198 = vadd.f32 0.0, %v4197
        %v4199 = vpop.f32.mrb[0].mxu0
        %v4200 = vpop.f32.mrb[0].mxu0
        %v4201 = vadd.f32 0.0, %v4200
        %v4202 = vpop.f32.mrb[0].mxu0
        %4203 = vmatprep.mubr.bf16.mxu0 0
        %4204 = vmatmul.mubr.bf16.gmra.mrb[0].mxu0 %v4051
        %v4205 = vpop.f32.mrb[0].mxu0
        %v4206 = vadd.f32 0.0, %v4205
        %v4207 = vpop.f32.mrb[0].mxu0
        %v4208 = vpop.f32.mrb[0].mxu0
        %v4209 = vadd.f32 0.0, %v4208
        %v4210 = vpop.f32.mrb[0].mxu0
        %4211 = vmatprep.mubr.bf16.mxu0 0
        %4212 = vmatmul.mubr.bf16.gmra.mrb[0].mxu0 %v4054
        %v4213 = vpop.f32.mrb[0].mxu0
        %v4214 = vadd.f32 0.0, %v4213
        %v4215 = vpop.f32.mrb[0].mxu0
        %v4216 = vpop.f32.mrb[0].mxu0
        %v4217 = vadd.f32 0.0, %v4216
        %v4218 = vpop.f32.mrb[0].mxu0
        %4219 = vdwg.mxu0
        %v4220 = vld [vmem:[%s297] sm:$0xff]
        %v4221 = vld [vmem:[%s297 + $0x8] sm:$0xff]
        %v4222 = vld [vmem:[%s297 + $0x10] sm:$0xff]
        %v4223 = vld [vmem:[%s297 + $0x18] sm:$0xff]
        %v4224 = vld [vmem:[%s297 + $0x20] sm:$0xff]
        %v4225 = vld [vmem:[%s297 + $0x28] sm:$0xff]
        %v4226 = vld [vmem:[%s297 + $0x30] sm:$0xff]
        %v4227 = vld [vmem:[%s297 + $0x38] sm:$0xff]
        %v4228 = vld [vmem:[%s297 + $0x40] sm:$0xff]
        %v4229 = vld [vmem:[%s297 + $0x48] sm:$0xff]
        %v4230 = vld [vmem:[%s297 + $0x50] sm:$0xff]
        %v4231 = vld [vmem:[%s297 + $0x58] sm:$0xff]
        %v4232 = vld [vmem:[%s297 + $0x60] sm:$0xff]
        %v4233 = vld [vmem:[%s297 + $0x68] sm:$0xff]
        %v4234 = vld [vmem:[%s297 + $0x70] sm:$0xff]
        %v4235 = vld [vmem:[%s297 + $0x78] sm:$0xff]
        %v4236 = vld [vmem:[%s297 + $0x80] sm:$0xff]
        %v4237 = vld [vmem:[%s297 + $0x88] sm:$0xff]
        %v4238 = vld [vmem:[%s297 + $0x90] sm:$0xff]
        %v4239 = vld [vmem:[%s297 + $0x98] sm:$0xff]
        %v4240 = vld [vmem:[%s297 + $0xa0] sm:$0xff]
        %v4241 = vld [vmem:[%s297 + $0xa8] sm:$0xff]
        %v4242 = vld [vmem:[%s297 + $0xb0] sm:$0xff]
        %v4243 = vld [vmem:[%s297 + $0xb8] sm:$0xff]
        %v4244 = vld [vmem:[%s297 + $0xc0] sm:$0xff]
        %v4245 = vld [vmem:[%s297 + $0xc8] sm:$0xff]
        %v4246 = vld [vmem:[%s297 + $0xd0] sm:$0xff]
        %v4247 = vld [vmem:[%s297 + $0xd8] sm:$0xff]
        %v4248 = vld [vmem:[%s297 + $0xe0] sm:$0xff]
        %v4249 = vld [vmem:[%s297 + $0xe8] sm:$0xff]
        %v4250 = vld [vmem:[%s297 + $0xf0] sm:$0xff]
        %v4251 = vld [vmem:[%s297 + $0xf8] sm:$0xff]
        %v4252 = vadd.f32 %v4220, %v4094
        %v4253 = vadd.f32 %v4221, %v4097
        %v4254 = vadd.f32 %v4222, %v4102
        %v4255 = vadd.f32 %v4223, %v4105
        %v4256 = vadd.f32 %v4224, %v4110
        %v4257 = vadd.f32 %v4225, %v4113
        %v4258 = vadd.f32 %v4226, %v4118
        %v4259 = vadd.f32 %v4227, %v4121
        %v4260 = vadd.f32 %v4228, %v4126
        %v4261 = vadd.f32 %v4229, %v4129
        %v4262 = vadd.f32 %v4230, %v4134
        %v4263 = vadd.f32 %v4231, %v4137
        %v4264 = vadd.f32 %v4232, %v4142
        %v4265 = vadd.f32 %v4233, %v4145
        %v4266 = vadd.f32 %v4234, %v4150
        %v4267 = vadd.f32 %v4235, %v4153
        %v4268 = vadd.f32 %v4236, %v4158
        %v4269 = vadd.f32 %v4237, %v4161
        %v4270 = vadd.f32 %v4238, %v4166
        %v4271 = vadd.f32 %v4239, %v4169
        %v4272 = vadd.f32 %v4240, %v4174
        %v4273 = vadd.f32 %v4241, %v4177
        %v4274 = vadd.f32 %v4242, %v4182
        %v4275 = vadd.f32 %v4243, %v4185
        %v4276 = vadd.f32 %v4244, %v4190
        %v4277 = vadd.f32 %v4245, %v4193
        %v4278 = vadd.f32 %v4246, %v4198
        %v4279 = vadd.f32 %v4247, %v4201
        %v4280 = vadd.f32 %v4248, %v4206
        %v4281 = vadd.f32 %v4249, %v4209
        %v4282 = vadd.f32 %v4250, %v4214
        %v4283 = vadd.f32 %v4251, %v4217
        %4284 = vst.msk [vmem:[%s297] sm:$0xff] %vm1660, %v4252
        %4285 = vst.msk [vmem:[%s297 + $0x8] sm:$0xff] %vm1660, %v4253
        %4286 = vst.msk [vmem:[%s297 + $0x10] sm:$0xff] %vm1660, %v4254
        %4287 = vst.msk [vmem:[%s297 + $0x18] sm:$0xff] %vm1660, %v4255
        %4288 = vst.msk [vmem:[%s297 + $0x20] sm:$0xff] %vm1660, %v4256
        %4289 = vst.msk [vmem:[%s297 + $0x28] sm:$0xff] %vm1660, %v4257
        %4290 = vst.msk [vmem:[%s297 + $0x30] sm:$0xff] %vm1660, %v4258
        %4291 = vst.msk [vmem:[%s297 + $0x38] sm:$0xff] %vm1660, %v4259
        %4292 = vst.msk [vmem:[%s297 + $0x40] sm:$0xff] %vm1660, %v4260
        %4293 = vst.msk [vmem:[%s297 + $0x48] sm:$0xff] %vm1660, %v4261
        %4294 = vst.msk [vmem:[%s297 + $0x50] sm:$0xff] %vm1660, %v4262
        %4295 = vst.msk [vmem:[%s297 + $0x58] sm:$0xff] %vm1660, %v4263
        %4296 = vst.msk [vmem:[%s297 + $0x60] sm:$0xff] %vm1660, %v4264
        %4297 = vst.msk [vmem:[%s297 + $0x68] sm:$0xff] %vm1660, %v4265
        %4298 = vst.msk [vmem:[%s297 + $0x70] sm:$0xff] %vm1660, %v4266
        %4299 = vst.msk [vmem:[%s297 + $0x78] sm:$0xff] %vm1660, %v4267
        %4300 = vst.msk [vmem:[%s297 + $0x80] sm:$0xff] %vm1660, %v4268
        %4301 = vst.msk [vmem:[%s297 + $0x88] sm:$0xff] %vm1660, %v4269
        %4302 = vst.msk [vmem:[%s297 + $0x90] sm:$0xff] %vm1660, %v4270
        %4303 = vst.msk [vmem:[%s297 + $0x98] sm:$0xff] %vm1660, %v4271
        %4304 = vst.msk [vmem:[%s297 + $0xa0] sm:$0xff] %vm1660, %v4272
        %4305 = vst.msk [vmem:[%s297 + $0xa8] sm:$0xff] %vm1660, %v4273
        %4306 = vst.msk [vmem:[%s297 + $0xb0] sm:$0xff] %vm1660, %v4274
        %4307 = vst.msk [vmem:[%s297 + $0xb8] sm:$0xff] %vm1660, %v4275
        %4308 = vst.msk [vmem:[%s297 + $0xc0] sm:$0xff] %vm1660, %v4276
        %4309 = vst.msk [vmem:[%s297 + $0xc8] sm:$0xff] %vm1660, %v4277
        %4310 = vst.msk [vmem:[%s297 + $0xd0] sm:$0xff] %vm1660, %v4278
        %4311 = vst.msk [vmem:[%s297 + $0xd8] sm:$0xff] %vm1660, %v4279
        %4312 = vst.msk [vmem:[%s297 + $0xe0] sm:$0xff] %vm1660, %v4280
        %4313 = vst.msk [vmem:[%s297 + $0xe8] sm:$0xff] %vm1660, %v4281
        %4314 = vst.msk [vmem:[%s297 + $0xf0] sm:$0xff] %vm1660, %v4282
        %4315 = vst.msk [vmem:[%s297 + $0xf8] sm:$0xff] %vm1660, %v4283
        %v4316 = vld [vmem:[%s297] sm:$0xff]
        %v4317 = vld [vmem:[%s297 + $0x8] sm:$0xff]
        %v4318 = vld [vmem:[%s297 + $0x10] sm:$0xff]
        %v4319 = vld [vmem:[%s297 + $0x18] sm:$0xff]
        %v4320 = vld [vmem:[%s297 + $0x20] sm:$0xff]
        %v4321 = vld [vmem:[%s297 + $0x28] sm:$0xff]
        %v4322 = vld [vmem:[%s297 + $0x30] sm:$0xff]
        %v4323 = vld [vmem:[%s297 + $0x38] sm:$0xff]
        %v4324 = vld [vmem:[%s297 + $0x40] sm:$0xff]
        %v4325 = vld [vmem:[%s297 + $0x48] sm:$0xff]
        %v4326 = vld [vmem:[%s297 + $0x50] sm:$0xff]
        %v4327 = vld [vmem:[%s297 + $0x58] sm:$0xff]
        %v4328 = vld [vmem:[%s297 + $0x60] sm:$0xff]
        %v4329 = vld [vmem:[%s297 + $0x68] sm:$0xff]
        %v4330 = vld [vmem:[%s297 + $0x70] sm:$0xff]
        %v4331 = vld [vmem:[%s297 + $0x78] sm:$0xff]
        %v4332 = vld [vmem:[%s297 + $0x80] sm:$0xff]
        %v4333 = vld [vmem:[%s297 + $0x88] sm:$0xff]
        %v4334 = vld [vmem:[%s297 + $0x90] sm:$0xff]
        %v4335 = vld [vmem:[%s297 + $0x98] sm:$0xff]
        %v4336 = vld [vmem:[%s297 + $0xa0] sm:$0xff]
        %v4337 = vld [vmem:[%s297 + $0xa8] sm:$0xff]
        %v4338 = vld [vmem:[%s297 + $0xb0] sm:$0xff]
        %v4339 = vld [vmem:[%s297 + $0xb8] sm:$0xff]
        %v4340 = vld [vmem:[%s297 + $0xc0] sm:$0xff]
        %v4341 = vld [vmem:[%s297 + $0xc8] sm:$0xff]
        %v4342 = vld [vmem:[%s297 + $0xd0] sm:$0xff]
        %v4343 = vld [vmem:[%s297 + $0xd8] sm:$0xff]
        %v4344 = vld [vmem:[%s297 + $0xe0] sm:$0xff]
        %v4345 = vld [vmem:[%s297 + $0xe8] sm:$0xff]
        %v4346 = vld [vmem:[%s297 + $0xf0] sm:$0xff]
        %v4347 = vld [vmem:[%s297 + $0xf8] sm:$0xff]
        %v4348 = vsel %vm1660, %v4316, 0.0
        %v4349 = vsel %vm1660, %v4317, 0.0
        %v4350 = vadd.f32 %v4348, %v4349
        %v4351 = vsel %vm1660, %v4318, 0.0
        %v4352 = vadd.f32 %v4350, %v4351
        %v4353 = vsel %vm1660, %v4319, 0.0
        %v4354 = vadd.f32 %v4352, %v4353
        %v4355 = vsel %vm1660, %v4320, 0.0
        %v4356 = vadd.f32 %v4354, %v4355
        %v4357 = vsel %vm1660, %v4321, 0.0
        %v4358 = vadd.f32 %v4356, %v4357
        %v4359 = vsel %vm1660, %v4322, 0.0
        %v4360 = vadd.f32 %v4358, %v4359
        %v4361 = vsel %vm1660, %v4323, 0.0
        %v4362 = vadd.f32 %v4360, %v4361
        %v4363 = vsel %vm1660, %v4324, 0.0
        %v4364 = vadd.f32 %v4362, %v4363
        %v4365 = vsel %vm1660, %v4325, 0.0
        %v4366 = vadd.f32 %v4364, %v4365
        %v4367 = vsel %vm1660, %v4326, 0.0
        %v4368 = vadd.f32 %v4366, %v4367
        %v4369 = vsel %vm1660, %v4327, 0.0
        %v4370 = vadd.f32 %v4368, %v4369
        %v4371 = vsel %vm1660, %v4328, 0.0
        %v4372 = vadd.f32 %v4370, %v4371
        %v4373 = vsel %vm1660, %v4329, 0.0
        %v4374 = vadd.f32 %v4372, %v4373
        %v4375 = vsel %vm1660, %v4330, 0.0
        %v4376 = vadd.f32 %v4374, %v4375
        %v4377 = vsel %vm1660, %v4331, 0.0
        %v4378 = vadd.f32 %v4376, %v4377
        %v4379 = vsel %vm1660, %v4332, 0.0
        %v4380 = vadd.f32 %v4378, %v4379
        %v4381 = vsel %vm1660, %v4333, 0.0
        %v4382 = vadd.f32 %v4380, %v4381
        %v4383 = vsel %vm1660, %v4334, 0.0
        %v4384 = vadd.f32 %v4382, %v4383
        %v4385 = vsel %vm1660, %v4335, 0.0
        %v4386 = vadd.f32 %v4384, %v4385
        %v4387 = vsel %vm1660, %v4336, 0.0
        %v4388 = vadd.f32 %v4386, %v4387
        %v4389 = vsel %vm1660, %v4337, 0.0
        %v4390 = vadd.f32 %v4388, %v4389
        %v4391 = vsel %vm1660, %v4338, 0.0
        %v4392 = vadd.f32 %v4390, %v4391
        %v4393 = vsel %vm1660, %v4339, 0.0
        %v4394 = vadd.f32 %v4392, %v4393
        %v4395 = vsel %vm1660, %v4340, 0.0
        %v4396 = vadd.f32 %v4394, %v4395
        %v4397 = vsel %vm1660, %v4341, 0.0
        %v4398 = vadd.f32 %v4396, %v4397
        %v4399 = vsel %vm1660, %v4342, 0.0
        %v4400 = vadd.f32 %v4398, %v4399
        %v4401 = vsel %vm1660, %v4343, 0.0
        %v4402 = vadd.f32 %v4400, %v4401
        %v4403 = vsel %vm1660, %v4344, 0.0
        %v4404 = vadd.f32 %v4402, %v4403
        %v4405 = vsel %vm1660, %v4345, 0.0
        %v4406 = vadd.f32 %v4404, %v4405
        %v4407 = vsel %vm1660, %v4346, 0.0
        %v4408 = vadd.f32 %v4406, %v4407
        %v4409 = vsel %vm1660, %v4347, 0.0
        %v4410 = vadd.f32 %v4408, %v4409
        %v4411 = vrot.slane %v4410, 4
        %v4412 = vadd.f32 %v4410, %v4411
        %v4413 = vrot.slane %v4412, 2
        %v4414 = vadd.f32 %v4412, %v4413
        %v4415 = vrot.slane %v4414, 1
        %v4416 = vadd.f32 %v4414, %v4415
        %vm4417 = vcmask 57344
        %4418 = vst.msk [vmem:[%s281] sm:$0x1] %vm4417, %v4416
        %v4419 = vmul.f32 %v4316, %v4316
        %v4420 = vmul.f32 %v4317, %v4317
        %v4421 = vmul.f32 %v4318, %v4318
        %v4422 = vmul.f32 %v4319, %v4319
        %v4423 = vmul.f32 %v4320, %v4320
        %v4424 = vmul.f32 %v4321, %v4321
        %v4425 = vmul.f32 %v4322, %v4322
        %v4426 = vmul.f32 %v4323, %v4323
        %v4427 = vmul.f32 %v4324, %v4324
        %v4428 = vmul.f32 %v4325, %v4325
        %v4429 = vmul.f32 %v4326, %v4326
        %v4430 = vmul.f32 %v4327, %v4327
        %v4431 = vmul.f32 %v4328, %v4328
        %v4432 = vmul.f32 %v4329, %v4329
        %v4433 = vmul.f32 %v4330, %v4330
        %v4434 = vmul.f32 %v4331, %v4331
        %v4435 = vmul.f32 %v4332, %v4332
        %v4436 = vmul.f32 %v4333, %v4333
        %v4437 = vmul.f32 %v4334, %v4334
        %v4438 = vmul.f32 %v4335, %v4335
        %v4439 = vmul.f32 %v4336, %v4336
        %v4440 = vmul.f32 %v4337, %v4337
        %v4441 = vmul.f32 %v4338, %v4338
        %v4442 = vmul.f32 %v4339, %v4339
        %v4443 = vmul.f32 %v4340, %v4340
        %v4444 = vmul.f32 %v4341, %v4341
        %v4445 = vmul.f32 %v4342, %v4342
        %v4446 = vmul.f32 %v4343, %v4343
        %v4447 = vmul.f32 %v4344, %v4344
        %v4448 = vmul.f32 %v4345, %v4345
        %v4449 = vmul.f32 %v4346, %v4346
        %v4450 = vmul.f32 %v4347, %v4347
        %v4451 = vsel %vm1660, %v4419, 0.0
        %v4452 = vsel %vm1660, %v4420, 0.0
        %v4453 = vadd.f32 %v4451, %v4452
        %v4454 = vsel %vm1660, %v4421, 0.0
        %v4455 = vadd.f32 %v4453, %v4454
        %v4456 = vsel %vm1660, %v4422, 0.0
        %v4457 = vadd.f32 %v4455, %v4456
        %v4458 = vsel %vm1660, %v4423, 0.0
        %v4459 = vadd.f32 %v4457, %v4458
        %v4460 = vsel %vm1660, %v4424, 0.0
        %v4461 = vadd.f32 %v4459, %v4460
        %v4462 = vsel %vm1660, %v4425, 0.0
        %v4463 = vadd.f32 %v4461, %v4462
        %v4464 = vsel %vm1660, %v4426, 0.0
        %v4465 = vadd.f32 %v4463, %v4464
        %v4466 = vsel %vm1660, %v4427, 0.0
        %v4467 = vadd.f32 %v4465, %v4466
        %v4468 = vsel %vm1660, %v4428, 0.0
        %v4469 = vadd.f32 %v4467, %v4468
        %v4470 = vsel %vm1660, %v4429, 0.0
        %v4471 = vadd.f32 %v4469, %v4470
        %v4472 = vsel %vm1660, %v4430, 0.0
        %v4473 = vadd.f32 %v4471, %v4472
        %v4474 = vsel %vm1660, %v4431, 0.0
        %v4475 = vadd.f32 %v4473, %v4474
        %v4476 = vsel %vm1660, %v4432, 0.0
        %v4477 = vadd.f32 %v4475, %v4476
        %v4478 = vsel %vm1660, %v4433, 0.0
        %v4479 = vadd.f32 %v4477, %v4478
        %v4480 = vsel %vm1660, %v4434, 0.0
        %v4481 = vadd.f32 %v4479, %v4480
        %v4482 = vsel %vm1660, %v4435, 0.0
        %v4483 = vadd.f32 %v4481, %v4482
        %v4484 = vsel %vm1660, %v4436, 0.0
        %v4485 = vadd.f32 %v4483, %v4484
        %v4486 = vsel %vm1660, %v4437, 0.0
        %v4487 = vadd.f32 %v4485, %v4486
        %v4488 = vsel %vm1660, %v4438, 0.0
        %v4489 = vadd.f32 %v4487, %v4488
        %v4490 = vsel %vm1660, %v4439, 0.0
        %v4491 = vadd.f32 %v4489, %v4490
        %v4492 = vsel %vm1660, %v4440, 0.0
        %v4493 = vadd.f32 %v4491, %v4492
        %v4494 = vsel %vm1660, %v4441, 0.0
        %v4495 = vadd.f32 %v4493, %v4494
        %v4496 = vsel %vm1660, %v4442, 0.0
        %v4497 = vadd.f32 %v4495, %v4496
        %v4498 = vsel %vm1660, %v4443, 0.0
        %v4499 = vadd.f32 %v4497, %v4498
        %v4500 = vsel %vm1660, %v4444, 0.0
        %v4501 = vadd.f32 %v4499, %v4500
        %v4502 = vsel %vm1660, %v4445, 0.0
        %v4503 = vadd.f32 %v4501, %v4502
        %v4504 = vsel %vm1660, %v4446, 0.0
        %v4505 = vadd.f32 %v4503, %v4504
        %v4506 = vsel %vm1660, %v4447, 0.0
        %v4507 = vadd.f32 %v4505, %v4506
        %v4508 = vsel %vm1660, %v4448, 0.0
        %v4509 = vadd.f32 %v4507, %v4508
        %v4510 = vsel %vm1660, %v4449, 0.0
        %v4511 = vadd.f32 %v4509, %v4510
        %v4512 = vsel %vm1660, %v4450, 0.0
        %v4513 = vadd.f32 %v4511, %v4512
        %v4514 = vrot.slane %v4513, 4
        %v4515 = vadd.f32 %v4513, %v4514
        %v4516 = vrot.slane %v4515, 2
        %v4517 = vadd.f32 %v4515, %v4516
        %v4518 = vrot.slane %v4517, 1
        %v4519 = vadd.f32 %v4517, %v4518
        %4520 = vst.msk [vmem:[%s287] sm:$0x1] %vm4417, %v4519
        %p4521 = scmp.lt.s32.totalorder %s25, 1
        %s4522 = scalar_select %p4521, %s25, 1
        %s4523 = smul.addr %s4522, 32
        %s4524 = smul.addr %s4523, 8
        %s4525 = scalar_lea.vmem %s5, %s4524
        %s4526 = sand.u32 %s169, 1
        %s4527 = scalar_lea.sflag [#allocation3], %s4526
        %s4528 = sand.u32 %s169, 1
        %s4529 = scalar_lea.vmem [#allocation2], %s4528
        %s4530 = sand.u32 %s195, 1
        %s4531 = scalar_lea.sflag [#allocation5], %s4530
        %s4532 = sand.u32 %s195, 1
        %s4533 = scalar_lea.vmem [#allocation4], %s4532
        // Predicated region
        $region41: #{tpu_custom_call.1} parent=39 // pred_check
          %p4534 = pneg %p153
        $region42: #{tpu_custom_call.1} parent=39 // pred_check_branch
          %4536 = sbr.rel (%p4534) target = $region44
        $region43: #{tpu_custom_call.1} parent=39 // pred_region
          _
        $region44: #{tpu_custom_call.1} parent=39 // pred_fallthru
          _
        // Predicated region
        $region45: #{tpu_custom_call.1} parent=39 // pred_check
          %p4537 = pneg %p179
        $region46: #{tpu_custom_call.1} parent=39 // pred_check_branch
          %4539 = sbr.rel (%p4537) target = $region48
        $region47: #{tpu_custom_call.1} parent=39 // pred_region
          %s4541 = ssub.s32 16, 16
          %4542 = vsyncadd %s4527, %s4541
          %s4543 = smul.addr %s25, 16
          %s4544 = scalar_lea.hbm %s6, %s4543
          %s4546 = sshll.u32 %s4529, 4
          %s4547 = int_to_ptr.vmem [resolvable:$true] %s4546
          %4549 = dma.vmem_to_hbm [thread:$0]  %s4547, 16, %s4544, %s4527
        $region48: #{tpu_custom_call.1} parent=39 // pred_fallthru
          _
        // Predicated region
        $region49: #{tpu_custom_call.1} parent=39 // pred_check
          %p4550 = pneg %p205
        $region50: #{tpu_custom_call.1} parent=39 // pred_check_branch
          %4552 = sbr.rel (%p4550) target = $region52
        $region51: #{tpu_custom_call.1} parent=39 // pred_region
          %s4554 = ssub.s32 16, 16
          %4555 = vsyncadd %s4531, %s4554
          %s4556 = smul.addr %s25, 16
          %s4557 = scalar_lea.hbm %s7, %s4556
          %s4559 = sshll.u32 %s4533, 4
          %s4560 = int_to_ptr.vmem [resolvable:$true] %s4559
          %4562 = dma.vmem_to_hbm [thread:$0]  %s4560, 16, %s4557, %s4531
        $region52: #{tpu_custom_call.1} parent=39 // pred_fallthru
          _
      $region40: #{tpu_custom_call.1} parent=5 // pred_fallthru
        _
      %p4563 = scmp.le.s32.totalorder 2, %s20
      // Predicated region
      $region53: #{tpu_custom_call.1} parent=5 // pred_check
        %p4564 = pneg %p4563
      $region54: #{tpu_custom_call.1} parent=5 // pred_check_branch
        %4566 = sbr.rel (%p4564) target = $region56
      $region55: #{tpu_custom_call.1} parent=5 // pred_region
        %s4567 = ssub.s32 %s20, 2
        // Predicated region
        $region57: #{tpu_custom_call.1} parent=55 // pred_check
          %p4568 = pneg %p159
        $region58: #{tpu_custom_call.1} parent=55 // pred_check_branch
          %4570 = sbr.rel (%p4568) target = $region60
        $region59: #{tpu_custom_call.1} parent=55 // pred_region
          %p4571 = scmp.lt.s32.totalorder %s26, 1
          %s4572 = scalar_select %p4571, %s26, 1
          %s4573 = smul.addr %s4572, 32
          %s4574 = smul.addr %s4573, 8
          %s4575 = scalar_lea.vmem %s5, %s4574
        $region60: #{tpu_custom_call.1} parent=55 // pred_fallthru
          _
        // Predicated region
        $region61: #{tpu_custom_call.1} parent=55 // pred_check
          %p4576 = pneg %p185
        $region62: #{tpu_custom_call.1} parent=55 // pred_check_branch
          %4578 = sbr.rel (%p4576) target = $region64
        $region63: #{tpu_custom_call.1} parent=55 // pred_region
          %s4579 = sand.u32 %s170, 1
          %s4580 = scalar_lea.sflag [#allocation3], %s4579
          %s4581 = sand.u32 %s170, 1
          %s4582 = scalar_lea.vmem [#allocation2], %s4581
          %4583 = dma.done %s4580, 16
        $region64: #{tpu_custom_call.1} parent=55 // pred_fallthru
          _
        // Predicated region
        $region65: #{tpu_custom_call.1} parent=55 // pred_check
          %p4584 = pneg %p211
        $region66: #{tpu_custom_call.1} parent=55 // pred_check_branch
          %4586 = sbr.rel (%p4584) target = $region68
        $region67: #{tpu_custom_call.1} parent=55 // pred_region
          %s4587 = sand.u32 %s196, 1
          %s4588 = scalar_lea.sflag [#allocation5], %s4587
          %s4589 = sand.u32 %s196, 1
          %s4590 = scalar_lea.vmem [#allocation4], %s4589
          %4591 = dma.done %s4588, 16
        $region68: #{tpu_custom_call.1} parent=55 // pred_fallthru
          _
      $region56: #{tpu_custom_call.1} parent=5 // pred_fallthru
        _
    $region6: #{tpu_custom_call.1} parent=1 // loop_footer
      %s24 = sadd.s32 1, %s20
    $region7: #{tpu_custom_call.1} parent=1 // loop_footer_branch
      %19 = sbr.rel target = $region3
    $region8: #{tpu_custom_call.1} parent=1 // loop_exit
      _
    %4592 = vsyncpa [#allocation3], 1
    %s4593 = scalar_lea.sflag [#allocation3], 1
    %4594 = vsyncpa %s4593, 1
    %4595 = vsyncpa [#allocation5], 1
    %s4596 = scalar_lea.sflag [#allocation5], 1
    %4597 = vsyncpa %s4596, 1

</llo_original>
